<compile_context>
chip_gen: v7x
topology: tpu7x:2x2x1
jax: 0.10.0
libtpu: 0.0.40
codegen_flags: <defaults>
</compile_context>

<pallas_src>
import math

import numpy as np
import jax
import jax.numpy as jnp
from jax.experimental import pallas as pl
from jax.experimental.pallas import tpu as pltpu

DMODEL = 32          # h_model
HEADS = 8            # TransformerCell(head=8)
DK = DMODEL // HEADS
NUM_CLASSES = 4
NUM_VOCABS = 50
T_STEP = 5
B = 2                # trees in the batch
M = 7                # nodes per complete binary tree (root=0, internal=1,2, leaves=3..6)
N_NODES = B * M
EPS = 1e-6           # Annotated-Transformer LayerNorm eps
LANE = 128

LP = 8               # padded rows per topological level (sublane multiple)
NLEV = 3
HROWS = NLEV * LP    # 24-row level-major node table
D2 = 2 * DMODEL      # fused K|V lane width (64)

LEVELS_LOCAL = [[3, 4, 5, 6], [1, 2], [0]]      # leaves -> root
CHILDREN = {1: (3, 4), 2: (5, 6), 0: (1, 2)}


# ---------------------------------------------------------------------------
# Fused Pallas kernel: full GraphTransformer forward
# ---------------------------------------------------------------------------
def _graph_transformer_kernel(e_ref, gc_ref, g2_ref, sels_ref, avg_ref, pmat_ref,
                              w1_ref, b1_ref, w2_ref, b2_ref, lw_ref, lb_ref,
                              out_ref, h_ref, s_ref):
    f32 = jnp.float32
    d = DMODEL
    scale = 1.0 / math.sqrt(DK)

    e_lm = e_ref[...]                  # (24, 32) level-major masked embeddings ('e')
    gc = gc_ref[...]                   # (32, 24) children gathers: rows 0:16 lvl1, 16:32 lvl2
    g2 = g2_ref[...]                   # (56, 24) updateGlobalVec H-slot gather (slot-major, 8 rows/slot)
    sel_s = sels_ref[...]              # (24, 8)  node-row -> tree one-hot (pad rows/cols zero)
    pmat64 = pmat_ref[...]             # (64, 64) per-head score sum, replicated onto k- and v-lanes

    w1 = w1_ref[...]                   # (128, 64) [Wq|0 ; Wk|Wv ; 0 ; Wo|0] attn1
    w2 = w2_ref[...]
    wq1, wkv1, wo1 = w1[0:d], w1[d:2 * d], w1[2 * d:4 * d]
    wq2, wkv2, wo2 = w2[0:d], w2[d:2 * d], w2[2 * d:4 * d]
    b1s = b1_ref[...]                  # (8, 64) [bq|0 ; bk|bv ; bo|0 ; a2|0 ; b2|0 ; 0 ]
    b2s = b2_ref[...]

    # ---- hoisted bias broadcasts (done exactly once; JAX does not CSE these) ----
    def bcast_biases(bslab):
        bq = jnp.broadcast_to(bslab[0:1, :], (LP, D2))
        bkv = jnp.broadcast_to(bslab[1:2, :], (LP, D2))
        bo = jnp.broadcast_to(bslab[2:3, :d], (LP, d))
        a2 = jnp.broadcast_to(bslab[3:4, :d], (LP, d))
        b2 = jnp.broadcast_to(bslab[4:5, :d], (LP, d))
        return bq, bkv, bo, a2, b2

    bq1_b, bkv1_b, bo1_b, a21_b, b21_b = bcast_biases(b1s)
    bq2_b, bkv2_b, bo2_b, a22_b, b22_b = bcast_biases(b2s)
    bkv1_all = jnp.broadcast_to(b1s[1:2, :], (HROWS, D2))
    bkv2_all = jnp.broadcast_to(b2s[1:2, :], (M * LP, D2))

    def mha_out(qp64, kvps, wo_slab, bo_b, a2_b, b2_b):
        """Single-query MHA over the per-slot fused K|V blocks, then ReLU + LayerNorm.

        qp64  : (8, 64)  q @ [Wq|0] + [bq|0]  (v-lanes zero)
        kvps  : list of (8, 64) blocks, lanes 0:32 = K proj, lanes 32:64 = V proj
        """
        # Per-slot per-head scores, replicated across each head's k- and v-lanes.
        scores = [jnp.dot(qp64 * kv, pmat64, preferred_element_type=f32) * scale
                  for kv in kvps]
        m = scores[0]
        for sc in scores[1:]:
            m = jnp.maximum(m, sc)
        exps = [jnp.exp(sc - m) for sc in scores]
        den = exps[0]
        acc = exps[0] * kvps[0]
        for ex, kv in zip(exps[1:], kvps[1:]):
            den = den + ex
            acc = acc + ex * kv                    # v-half accumulates the attention output
        attn = acc * pl.reciprocal(den, approx=True)          # softmax denom on EUP
        out = jnp.dot(attn, wo_slab, preferred_element_type=f32)[:, :d] + bo_b
        y = jnp.maximum(out, 0.0)                              # ReLU
        mu = jnp.mean(y, axis=-1, keepdims=True)
        var = jnp.sum((y - mu) ** 2, axis=-1, keepdims=True) * (1.0 / (d - 1.0))
        inv_std = pl.reciprocal(jnp.sqrt(var) + EPS, approx=False)   # torch std()+eps (unbiased)
        return a2_b * (y - mu) * inv_std + b2_b

    # ---- T-invariant work, hoisted before the T loop ----
    kvpE = jnp.dot(e_lm, wkv1, preferred_element_type=f32) + bkv1_all   # 'e' slot K|V, (24, 64)
    h_ref[...] = e_lm                                                   # initial 'h' = masked embeds
    # InitS: per-tree mean of 'e' (pad rows of s stay zero via the avg matrix)
    s_ref[...] = jnp.dot(avg_ref[...], e_lm, preferred_element_type=f32)   # (8, 32)

    @pl.loop(0, T_STEP)
    def _t(step):
        s_b = s_ref[...]                                                 # (8, 32) current S per tree
        # 's' ctx slot for every (level-major) node row + its attn1 K|V projection
        s_nodes = jnp.dot(sel_s, s_b, preferred_element_type=f32)        # (24, 32)
        kvpS = jnp.dot(s_nodes, wkv1, preferred_element_type=f32) + bkv1_all

        # ---- dgl.prop_nodes_topo: leaves -> root, one whole (padded) level per step ----
        for lvl in range(NLEV):
            lo = lvl * LP
            h_l = h_ref[lo:lo + LP, :]                                    # aligned 8-row load
            qp = jnp.dot(h_l, wq1, preferred_element_type=f32) + bq1_b    # (8, 64), v-lanes 0
            kvp_h = jnp.dot(h_l, wkv1, preferred_element_type=f32) + bkv1_b
            if lvl == 0:
                # leaves: mailbox 'c' stays at its zero init -> K|V = biases only
                kvp_c0 = bkv1_b
                kvp_c1 = bkv1_b
            else:
                gcl = gc[(lvl - 1) * 2 * LP: lvl * 2 * LP]                # (16, 24)
                c_lvl = jnp.dot(gcl, h_ref[...], preferred_element_type=f32)   # (16, 32) [c0;c1]
                kvp_c = jnp.dot(c_lvl, wkv1, preferred_element_type=f32)  # fused K|V, one dot
                kvp_c0 = kvp_c[0:LP] + bkv1_b
                kvp_c1 = kvp_c[LP:2 * LP] + bkv1_b
            h_new = mha_out(qp,
                            [kvp_c0, kvp_c1, kvp_h,
                             kvpE[lo:lo + LP], kvpS[lo:lo + LP]],          # slots [c0,c1,h,e,s]
                            wo1, bo1_b, a21_b, b21_b)
            h_ref[lo:lo + LP, :] = h_new                                   # aligned in-place store

        # ---- updateGlobalVec ----
        # TODO(synk): Transformer_Utils source not provided; self_mask=True is
        # interpreted as masking the appended S token, i.e. S attends over H only.
        ctx2 = jnp.dot(g2, h_ref[...], preferred_element_type=f32)        # (56, 32) slot-major H
        kvpH = jnp.dot(ctx2, wkv2, preferred_element_type=f32) + bkv2_all # (56, 64)
        qp2 = jnp.dot(s_b, wq2, preferred_element_type=f32) + bq2_b       # (8, 64)
        s_ref[...] = mha_out(qp2,
                             [kvpH[j * LP:(j + 1) * LP] for j in range(M)],
                             wo2, bo2_b, a22_b, b22_b)

    # ---- classifier (nn.Dropout is identity at inference); lane-dense aligned store ----
    out_ref[...] = jnp.dot(h_ref[...], lw_ref[...],
                           preferred_element_type=f32) + lb_ref[...]


# ---------------------------------------------------------------------------
# Host-side constants (static tree structure baked into small matrices)
# ---------------------------------------------------------------------------
def _build_constants():
    # level-major row assignment: within a level, tree 0's nodes then tree 1's
    lm_of = np.full((B, M), -1, np.int64)
    for lvl, locs in enumerate(LEVELS_LOCAL):
        for b in range(B):
            for idx, loc in enumerate(locs):
                lm_of[b, loc] = lvl * LP + b * len(locs) + idx
    orig_to_lm = np.array([lm_of[i // M, i % M] for i in range(N_NODES)], np.int32)

    # children gathers for levels 1 and 2: rows 0:8 = c0, rows 8:16 = c1 (per level)
    gc = np.zeros((2 * 2 * LP, HROWS), np.float32)
    for lvl in (1, 2):
        locs = LEVELS_LOCAL[lvl]
        base = (lvl - 1) * 2 * LP
        for b in range(B):
            for idx, loc in enumerate(locs):
                q = b * len(locs) + idx
                c0, c1 = CHILDREN[loc]
                gc[base + q, lm_of[b, c0]] = 1.0
                gc[base + LP + q, lm_of[b, c1]] = 1.0

    # per-tree node lists (level-major); slot order is irrelevant to attention
    tree_rows = [[lm_of[b, loc] for locs in LEVELS_LOCAL for loc in locs] for b in range(B)]

    g2 = np.zeros((M * LP, HROWS), np.float32)      # updateGlobalVec H gather, 8 rows/slot
    for j in range(M):
        for b in range(B):
            g2[j * LP + b, tree_rows[b][j]] = 1.0

    sel_s = np.zeros((HROWS, LP), np.float32)       # node row -> its tree's S
    avg = np.zeros((LP, HROWS), np.float32)         # InitS: per-tree mean of 'e'
    for b in range(B):
        for r in tree_rows[b]:
            sel_s[r, b] = 1.0
            avg[b, r] = 1.0 / M

    # per-head score sum, replicated onto both the head's k-lanes and v-lanes
    pmat64 = np.zeros((D2, D2), np.float32)
    for j in range(DMODEL):
        for jj in range(D2):
            if j // DK == (jj % DMODEL) // DK:
                pmat64[j, jj] = 1.0

    return {'gc': jnp.asarray(gc), 'g2': jnp.asarray(g2), 'sel_s': jnp.asarray(sel_s),
            'avg': jnp.asarray(avg), 'pmat': jnp.asarray(pmat64),
            'orig_to_lm': jnp.asarray(orig_to_lm)}


# ---------------------------------------------------------------------------
# Parameters (deterministic synthetic init) + packing into fused slabs
# ---------------------------------------------------------------------------
def init_params(key):
    ks = jax.random.split(key, 5)

    def rand(k, shape, s=0.1):
        return jax.random.normal(k, shape, jnp.float32) * s

    def attn(kbase):
        kk = jax.random.split(kbase, 8)
        return {
            'wq': rand(kk[0], (DMODEL, DMODEL)), 'bq': rand(kk[1], (1, DMODEL), 0.01),
            'wk': rand(kk[2], (DMODEL, DMODEL)), 'bk': rand(kk[3], (1, DMODEL), 0.01),
            'wv': rand(kk[4], (DMODEL, DMODEL)), 'bv': rand(kk[5], (1, DMODEL), 0.01),
            'wo': rand(kk[6], (DMODEL, DMODEL)), 'bo': rand(kk[7], (1, DMODEL), 0.01),
            'a2': jnp.ones((1, DMODEL), jnp.float32),
            'b2': jnp.zeros((1, DMODEL), jnp.float32),
        }

    return {
        'embedding': rand(ks[0], (NUM_VOCABS, DMODEL), 0.1),
        'attn1': attn(ks[1]),
        'attn2': attn(ks[2]),
        'lin_w': rand(ks[3], (DMODEL, NUM_CLASSES)),
        'lin_b': rand(ks[4], (1, NUM_CLASSES), 0.01),
    }


def pack_params(params):
    z32 = jnp.zeros((DMODEL, DMODEL), jnp.float32)
    zrow = jnp.zeros((1, DMODEL), jnp.float32)

    def pack_attn(p):
        wq64 = jnp.concatenate([p['wq'], z32], axis=1)                     # (32, 64)
        wkv = jnp.concatenate([p['wk'], p['wv']], axis=1)                  # (32, 64) fused K|V
        wo64 = jnp.concatenate([jnp.zeros((DMODEL, D2), jnp.float32),      # rows 0:32 kill k-lanes
                                jnp.concatenate([p['wo'], z32], axis=1)], axis=0)   # (64, 64)
        w = jnp.concatenate([wq64, wkv, wo64], axis=0)                     # (128, 64)
        b = jnp.concatenate([
            jnp.concatenate([p['bq'], zrow], axis=1),
            jnp.concatenate([p['bk'], p['bv']], axis=1),
            jnp.concatenate([p['bo'], zrow], axis=1),
            jnp.concatenate([p['a2'], zrow], axis=1),
            jnp.concatenate([p['b2'], zrow], axis=1),
            jnp.zeros((3, D2), jnp.float32)], axis=0)                      # (8, 64)
        return w, b

    w1, b1 = pack_attn(params['attn1'])
    w2, b2 = pack_attn(params['attn2'])
    lw = jnp.zeros((DMODEL, LANE), jnp.float32).at[:, :NUM_CLASSES].set(params['lin_w'])
    lb = jnp.zeros((1, LANE), jnp.float32).at[:, :NUM_CLASSES].set(params['lin_b'])
    packed = {'embedding': params['embedding'],
              'w1': w1, 'b1': b1, 'w2': w2, 'b2': b2, 'lw': lw, 'lb': lb}
    packed.update(_build_constants())
    return packed


# ---------------------------------------------------------------------------
# Forward: embedding gather + row permutation (host glue) + one fused pallas_call
# ---------------------------------------------------------------------------
def _full_spec(shape):
    return pl.BlockSpec(shape, lambda i: (0,) * len(shape))


@jax.jit
def forward(packed, wordid, mask):
    # nn.Embedding lookup — host-side XLA gather (table lookup; no Pallas win here)
    embeds = packed['embedding'][wordid * mask]
    e0 = embeds * mask.astype(jnp.float32)[:, None]                 # 'e' == initial 'h'
    # permute into the level-major, 8-row-padded node table (pad rows stay zero)
    e_lm = jnp.zeros((HROWS, DMODEL), jnp.float32).at[packed['orig_to_lm']].set(e0)

    args = (e_lm, packed['gc'], packed['g2'], packed['sel_s'], packed['avg'],
            packed['pmat'], packed['w1'], packed['b1'], packed['w2'], packed['b2'],
            packed['lw'], packed['lb'])

    out = pl.pallas_call(
        _graph_transformer_kernel,
        out_shape=jax.ShapeDtypeStruct((HROWS, LANE), jnp.float32),
        grid=(1,),
        in_specs=[_full_spec(a.shape) for a in args],
        out_specs=_full_spec((HROWS, LANE)),
        scratch_shapes=[pltpu.VMEM((HROWS, DMODEL), jnp.float32),   # h node table
                        pltpu.VMEM((LP, DMODEL), jnp.float32)],     # per-tree S (padded)
        compiler_params=pltpu.CompilerParams(
            dimension_semantics=("arbitrary",)),   # tiny, latency-bound: single core
    )(*args)

    # un-permute to original node order and strip lane / class padding
    return out[packed['orig_to_lm']][:, :NUM_CLASSES]


if __name__ == "__main__":
    key = jax.random.PRNGKey(0)
    pkey, wkey = jax.random.split(key)
    packed = pack_params(init_params(pkey))

    wordid = jax.random.randint(wkey, (N_NODES,), 0, NUM_VOCABS, dtype=jnp.int32)
    # mask = 1 for leaf nodes (words), 0 for internal nodes (as in SSTBatch)
    leaf_mask = np.zeros((M,), np.int32)
    leaf_mask[[3, 4, 5, 6]] = 1
    mask = jnp.asarray(np.tile(leaf_mask, B))

    logits = forward(packed, wordid, mask)
    jax.block_until_ready(logits)
    assert logits.shape == (N_NODES, NUM_CLASSES) and logits.dtype == jnp.float32
    assert bool(jnp.all(jnp.isfinite(logits)))
    print("KERNEL_OK")
</pallas_src>

<mosaic_0001>
module attributes {stable_mosaic.version = 11 : i64} {
  func.func @_graph_transformer_kernel(%arg0: i32, %arg1: memref<24x32xf32, #tpu.memory_space<vmem>>, %arg2: memref<32x24xf32, #tpu.memory_space<vmem>>, %arg3: memref<56x24xf32, #tpu.memory_space<vmem>>, %arg4: memref<24x8xf32, #tpu.memory_space<vmem>>, %arg5: memref<8x24xf32, #tpu.memory_space<vmem>>, %arg6: memref<64x64xf32, #tpu.memory_space<vmem>>, %arg7: memref<128x64xf32, #tpu.memory_space<vmem>>, %arg8: memref<8x64xf32, #tpu.memory_space<vmem>>, %arg9: memref<128x64xf32, #tpu.memory_space<vmem>>, %arg10: memref<8x64xf32, #tpu.memory_space<vmem>>, %arg11: memref<32x128xf32, #tpu.memory_space<vmem>>, %arg12: memref<1x128xf32, #tpu.memory_space<vmem>>, %arg13: memref<24x128xf32, #tpu.memory_space<vmem>>, %arg14: memref<24x32xf32, #tpu.memory_space<vmem>>, %arg15: memref<8x32xf32, #tpu.memory_space<vmem>>) attributes {dimension_semantics = [#tpu.dimension_semantics<arbitrary>], iteration_bounds = array<i64: 1>, scalar_prefetch = 0 : i64, scratch_operands = 2 : i64, tpu.core_type = #tpu.core_type<tc>, window_params = [{pipeline_mode = #tpu.pipeline_mode<synchronous>, transform_indices = @transform_0, window_bounds = array<i64: 24, 32>}, {pipeline_mode = #tpu.pipeline_mode<synchronous>, transform_indices = @transform_1, window_bounds = array<i64: 32, 24>}, {pipeline_mode = #tpu.pipeline_mode<synchronous>, transform_indices = @transform_2, window_bounds = array<i64: 56, 24>}, {pipeline_mode = #tpu.pipeline_mode<synchronous>, transform_indices = @transform_3, window_bounds = array<i64: 24, 8>}, {pipeline_mode = #tpu.pipeline_mode<synchronous>, transform_indices = @transform_4, window_bounds = array<i64: 8, 24>}, {pipeline_mode = #tpu.pipeline_mode<synchronous>, transform_indices = @transform_5, window_bounds = array<i64: 64, 64>}, {pipeline_mode = #tpu.pipeline_mode<synchronous>, transform_indices = @transform_6, window_bounds = array<i64: 128, 64>}, {pipeline_mode = #tpu.pipeline_mode<synchronous>, transform_indices = @transform_7, window_bounds = array<i64: 8, 64>}, {pipeline_mode = #tpu.pipeline_mode<synchronous>, transform_indices = @transform_8, window_bounds = array<i64: 128, 64>}, {pipeline_mode = #tpu.pipeline_mode<synchronous>, transform_indices = @transform_9, window_bounds = array<i64: 8, 64>}, {pipeline_mode = #tpu.pipeline_mode<synchronous>, transform_indices = @transform_10, window_bounds = array<i64: 32, 128>}, {pipeline_mode = #tpu.pipeline_mode<synchronous>, transform_indices = @transform_11, window_bounds = array<i64: 1, 128>}, {pipeline_mode = #tpu.pipeline_mode<synchronous>, transform_indices = @transform_12, window_bounds = array<i64: 24, 128>}]} {
    %c0 = arith.constant 0 : index
    %c0_0 = arith.constant 0 : index
    %0 = vector.load %arg1[%c0, %c0_0] : memref<24x32xf32, #tpu.memory_space<vmem>>, vector<24x32xf32>
    %c0_1 = arith.constant 0 : index
    %c0_2 = arith.constant 0 : index
    %1 = vector.load %arg2[%c0_1, %c0_2] : memref<32x24xf32, #tpu.memory_space<vmem>>, vector<32x24xf32>
    %c0_3 = arith.constant 0 : index
    %c0_4 = arith.constant 0 : index
    %2 = vector.load %arg3[%c0_3, %c0_4] : memref<56x24xf32, #tpu.memory_space<vmem>>, vector<56x24xf32>
    %c0_5 = arith.constant 0 : index
    %c0_6 = arith.constant 0 : index
    %3 = vector.load %arg4[%c0_5, %c0_6] : memref<24x8xf32, #tpu.memory_space<vmem>>, vector<24x8xf32>
    %c0_7 = arith.constant 0 : index
    %c0_8 = arith.constant 0 : index
    %4 = vector.load %arg6[%c0_7, %c0_8] : memref<64x64xf32, #tpu.memory_space<vmem>>, vector<64x64xf32>
    %c0_9 = arith.constant 0 : index
    %c0_10 = arith.constant 0 : index
    %5 = vector.load %arg7[%c0_9, %c0_10] : memref<128x64xf32, #tpu.memory_space<vmem>>, vector<128x64xf32>
    %c0_11 = arith.constant 0 : index
    %c0_12 = arith.constant 0 : index
    %6 = vector.load %arg9[%c0_11, %c0_12] : memref<128x64xf32, #tpu.memory_space<vmem>>, vector<128x64xf32>
    %7 = vector.extract_strided_slice %5 {offsets = [0, 0], sizes = [32, 64], strides = [1, 1]} : vector<128x64xf32> to vector<32x64xf32>
    %8 = vector.extract_strided_slice %5 {offsets = [32, 0], sizes = [32, 64], strides = [1, 1]} : vector<128x64xf32> to vector<32x64xf32>
    %9 = vector.extract_strided_slice %5 {offsets = [64, 0], sizes = [64, 64], strides = [1, 1]} : vector<128x64xf32> to vector<64x64xf32>
    %10 = vector.extract_strided_slice %6 {offsets = [0, 0], sizes = [32, 64], strides = [1, 1]} : vector<128x64xf32> to vector<32x64xf32>
    %11 = vector.extract_strided_slice %6 {offsets = [32, 0], sizes = [32, 64], strides = [1, 1]} : vector<128x64xf32> to vector<32x64xf32>
    %12 = vector.extract_strided_slice %6 {offsets = [64, 0], sizes = [64, 64], strides = [1, 1]} : vector<128x64xf32> to vector<64x64xf32>
    %c0_13 = arith.constant 0 : index
    %c0_14 = arith.constant 0 : index
    %13 = vector.load %arg8[%c0_13, %c0_14] : memref<8x64xf32, #tpu.memory_space<vmem>>, vector<8x64xf32>
    %c0_15 = arith.constant 0 : index
    %c0_16 = arith.constant 0 : index
    %14 = vector.load %arg10[%c0_15, %c0_16] : memref<8x64xf32, #tpu.memory_space<vmem>>, vector<8x64xf32>
    %15 = vector.extract_strided_slice %13 {offsets = [0, 0], sizes = [1, 64], strides = [1, 1]} : vector<8x64xf32> to vector<1x64xf32>
    %16 = vector.shape_cast %15 : vector<1x64xf32> to vector<1x64xf32>
    %17 = vector.broadcast %16 : vector<1x64xf32> to vector<8x64xf32>
    %18 = vector.extract_strided_slice %13 {offsets = [1, 0], sizes = [1, 64], strides = [1, 1]} : vector<8x64xf32> to vector<1x64xf32>
    %19 = vector.shape_cast %18 : vector<1x64xf32> to vector<1x64xf32>
    %20 = vector.broadcast %19 : vector<1x64xf32> to vector<8x64xf32>
    %21 = vector.extract_strided_slice %13 {offsets = [2, 0], sizes = [1, 32], strides = [1, 1]} : vector<8x64xf32> to vector<1x32xf32>
    %22 = vector.shape_cast %21 : vector<1x32xf32> to vector<1x32xf32>
    %23 = vector.broadcast %22 : vector<1x32xf32> to vector<8x32xf32>
    %24 = vector.extract_strided_slice %13 {offsets = [3, 0], sizes = [1, 32], strides = [1, 1]} : vector<8x64xf32> to vector<1x32xf32>
    %25 = vector.shape_cast %24 : vector<1x32xf32> to vector<1x32xf32>
    %26 = vector.broadcast %25 : vector<1x32xf32> to vector<8x32xf32>
    %27 = vector.extract_strided_slice %13 {offsets = [4, 0], sizes = [1, 32], strides = [1, 1]} : vector<8x64xf32> to vector<1x32xf32>
    %28 = vector.shape_cast %27 : vector<1x32xf32> to vector<1x32xf32>
    %29 = vector.broadcast %28 : vector<1x32xf32> to vector<8x32xf32>
    %30 = vector.extract_strided_slice %14 {offsets = [0, 0], sizes = [1, 64], strides = [1, 1]} : vector<8x64xf32> to vector<1x64xf32>
    %31 = vector.shape_cast %30 : vector<1x64xf32> to vector<1x64xf32>
    %32 = vector.broadcast %31 : vector<1x64xf32> to vector<8x64xf32>
    %33 = vector.extract_strided_slice %14 {offsets = [2, 0], sizes = [1, 32], strides = [1, 1]} : vector<8x64xf32> to vector<1x32xf32>
    %34 = vector.shape_cast %33 : vector<1x32xf32> to vector<1x32xf32>
    %35 = vector.broadcast %34 : vector<1x32xf32> to vector<8x32xf32>
    %36 = vector.extract_strided_slice %14 {offsets = [3, 0], sizes = [1, 32], strides = [1, 1]} : vector<8x64xf32> to vector<1x32xf32>
    %37 = vector.shape_cast %36 : vector<1x32xf32> to vector<1x32xf32>
    %38 = vector.broadcast %37 : vector<1x32xf32> to vector<8x32xf32>
    %39 = vector.extract_strided_slice %14 {offsets = [4, 0], sizes = [1, 32], strides = [1, 1]} : vector<8x64xf32> to vector<1x32xf32>
    %40 = vector.shape_cast %39 : vector<1x32xf32> to vector<1x32xf32>
    %41 = vector.broadcast %40 : vector<1x32xf32> to vector<8x32xf32>
    %42 = vector.extract_strided_slice %13 {offsets = [1, 0], sizes = [1, 64], strides = [1, 1]} : vector<8x64xf32> to vector<1x64xf32>
    %43 = vector.shape_cast %42 : vector<1x64xf32> to vector<1x64xf32>
    %44 = vector.broadcast %43 : vector<1x64xf32> to vector<24x64xf32>
    %45 = vector.extract_strided_slice %14 {offsets = [1, 0], sizes = [1, 64], strides = [1, 1]} : vector<8x64xf32> to vector<1x64xf32>
    %46 = vector.shape_cast %45 : vector<1x64xf32> to vector<1x64xf32>
    %47 = vector.broadcast %46 : vector<1x64xf32> to vector<56x64xf32>
    %cst = arith.constant dense<0.000000e+00> : vector<24x64xf32>
    %48 = tpu.matmul %0, %8, %cst {dimension_numbers = #tpu.dot_dimension_numbers<[1], [0], [0], [1], [0, 0, 1, 1], [], []>} : vector<24x32xf32>, vector<32x64xf32>, vector<24x64xf32> -> vector<24x64xf32>
    %49 = arith.addf %48, %44 : vector<24x64xf32>
    %c0_17 = arith.constant 0 : index
    %c0_18 = arith.constant 0 : index
    %50 = vector.load %arg14[%c0_17, %c0_18] : memref<24x32xf32, #tpu.memory_space<vmem>>, vector<24x32xf32>
    tpu.vector_store %arg14[%c0_17, %c0_18], %0 {strides = array<i32>} : memref<24x32xf32, #tpu.memory_space<vmem>>, vector<24x32xf32>,
    %c0_19 = arith.constant 0 : index
    %c0_20 = arith.constant 0 : index
    %51 = vector.load %arg5[%c0_19, %c0_20] : memref<8x24xf32, #tpu.memory_space<vmem>>, vector<8x24xf32>
    %cst_21 = arith.constant dense<0.000000e+00> : vector<8x32xf32>
    %52 = tpu.matmul %51, %0, %cst_21 {dimension_numbers = #tpu.dot_dimension_numbers<[1], [0], [0], [1], [0, 0, 1, 1], [], []>} : vector<8x24xf32>, vector<24x32xf32>, vector<8x32xf32> -> vector<8x32xf32>
    %c0_22 = arith.constant 0 : index
    %c0_23 = arith.constant 0 : index
    %53 = vector.load %arg15[%c0_22, %c0_23] : memref<8x32xf32, #tpu.memory_space<vmem>>, vector<8x32xf32>
    tpu.vector_store %arg15[%c0_22, %c0_23], %52 {strides = array<i32>} : memref<8x32xf32, #tpu.memory_space<vmem>>, vector<8x32xf32>,
    %c0_i32 = arith.constant 0 : i32
    %c5_i32 = arith.constant 5 : i32
    %54 = arith.addi %c0_i32, %c5_i32 : i32
    %c1_i32 = arith.constant 1 : i32
    scf.for %arg16 = %c0_i32 to %54 step %c1_i32  : i32 {
      %c0_33 = arith.constant 0 : index
      %c0_34 = arith.constant 0 : index
      %62 = vector.load %arg15[%c0_33, %c0_34] : memref<8x32xf32, #tpu.memory_space<vmem>>, vector<8x32xf32>
      %cst_35 = arith.constant dense<0.000000e+00> : vector<24x32xf32>
      %63 = tpu.matmul %3, %62, %cst_35 {dimension_numbers = #tpu.dot_dimension_numbers<[1], [0], [0], [1], [0, 0, 1, 1], [], []>} : vector<24x8xf32>, vector<8x32xf32>, vector<24x32xf32> -> vector<24x32xf32>
      %cst_36 = arith.constant dense<0.000000e+00> : vector<24x64xf32>
      %64 = tpu.matmul %63, %8, %cst_36 {dimension_numbers = #tpu.dot_dimension_numbers<[1], [0], [0], [1], [0, 0, 1, 1], [], []>} : vector<24x32xf32>, vector<32x64xf32>, vector<24x64xf32> -> vector<24x64xf32>
      %65 = arith.addf %64, %44 : vector<24x64xf32>
      %c0_37 = arith.constant 0 : index
      %c0_38 = arith.constant 0 : index
      %66 = vector.load %arg14[%c0_37, %c0_38] : memref<24x32xf32, #tpu.memory_space<vmem>>, vector<8x32xf32>
      %cst_39 = arith.constant dense<0.000000e+00> : vector<8x64xf32>
      %67 = tpu.matmul %66, %7, %cst_39 {dimension_numbers = #tpu.dot_dimension_numbers<[1], [0], [0], [1], [0, 0, 1, 1], [], []>} : vector<8x32xf32>, vector<32x64xf32>, vector<8x64xf32> -> vector<8x64xf32>
      %68 = arith.addf %67, %17 : vector<8x64xf32>
      %cst_40 = arith.constant dense<0.000000e+00> : vector<8x64xf32>
      %69 = tpu.matmul %66, %8, %cst_40 {dimension_numbers = #tpu.dot_dimension_numbers<[1], [0], [0], [1], [0, 0, 1, 1], [], []>} : vector<8x32xf32>, vector<32x64xf32>, vector<8x64xf32> -> vector<8x64xf32>
      %70 = arith.addf %69, %20 : vector<8x64xf32>
      %71 = vector.extract_strided_slice %49 {offsets = [0, 0], sizes = [8, 64], strides = [1, 1]} : vector<24x64xf32> to vector<8x64xf32>
      %72 = vector.extract_strided_slice %65 {offsets = [0, 0], sizes = [8, 64], strides = [1, 1]} : vector<24x64xf32> to vector<8x64xf32>
      %73 = arith.mulf %68, %20 : vector<8x64xf32>
      %cst_41 = arith.constant dense<0.000000e+00> : vector<8x64xf32>
      %74 = tpu.matmul %73, %4, %cst_41 {dimension_numbers = #tpu.dot_dimension_numbers<[1], [0], [0], [1], [0, 0, 1, 1], [], []>} : vector<8x64xf32>, vector<64x64xf32>, vector<8x64xf32> -> vector<8x64xf32>
      %cst_42 = arith.constant 5.000000e-01 : f32
      %75 = vector.broadcast %cst_42 : f32 to vector<8x64xf32>
      %76 = arith.mulf %74, %75 : vector<8x64xf32>
      %77 = arith.mulf %68, %20 : vector<8x64xf32>
      %cst_43 = arith.constant dense<0.000000e+00> : vector<8x64xf32>
      %78 = tpu.matmul %77, %4, %cst_43 {dimension_numbers = #tpu.dot_dimension_numbers<[1], [0], [0], [1], [0, 0, 1, 1], [], []>} : vector<8x64xf32>, vector<64x64xf32>, vector<8x64xf32> -> vector<8x64xf32>
      %cst_44 = arith.constant 5.000000e-01 : f32
      %79 = vector.broadcast %cst_44 : f32 to vector<8x64xf32>
      %80 = arith.mulf %78, %79 : vector<8x64xf32>
      %81 = arith.mulf %68, %70 : vector<8x64xf32>
      %cst_45 = arith.constant dense<0.000000e+00> : vector<8x64xf32>
      %82 = tpu.matmul %81, %4, %cst_45 {dimension_numbers = #tpu.dot_dimension_numbers<[1], [0], [0], [1], [0, 0, 1, 1], [], []>} : vector<8x64xf32>, vector<64x64xf32>, vector<8x64xf32> -> vector<8x64xf32>
      %cst_46 = arith.constant 5.000000e-01 : f32
      %83 = vector.broadcast %cst_46 : f32 to vector<8x64xf32>
      %84 = arith.mulf %82, %83 : vector<8x64xf32>
      %85 = arith.mulf %68, %71 : vector<8x64xf32>
      %cst_47 = arith.constant dense<0.000000e+00> : vector<8x64xf32>
      %86 = tpu.matmul %85, %4, %cst_47 {dimension_numbers = #tpu.dot_dimension_numbers<[1], [0], [0], [1], [0, 0, 1, 1], [], []>} : vector<8x64xf32>, vector<64x64xf32>, vector<8x64xf32> -> vector<8x64xf32>
      %cst_48 = arith.constant 5.000000e-01 : f32
      %87 = vector.broadcast %cst_48 : f32 to vector<8x64xf32>
      %88 = arith.mulf %86, %87 : vector<8x64xf32>
      %89 = arith.mulf %68, %72 : vector<8x64xf32>
      %cst_49 = arith.constant dense<0.000000e+00> : vector<8x64xf32>
      %90 = tpu.matmul %89, %4, %cst_49 {dimension_numbers = #tpu.dot_dimension_numbers<[1], [0], [0], [1], [0, 0, 1, 1], [], []>} : vector<8x64xf32>, vector<64x64xf32>, vector<8x64xf32> -> vector<8x64xf32>
      %cst_50 = arith.constant 5.000000e-01 : f32
      %91 = vector.broadcast %cst_50 : f32 to vector<8x64xf32>
      %92 = arith.mulf %90, %91 : vector<8x64xf32>
      %93 = arith.maximumf %76, %80 : vector<8x64xf32>
      %94 = arith.maximumf %93, %84 : vector<8x64xf32>
      %95 = arith.maximumf %94, %88 : vector<8x64xf32>
      %96 = arith.maximumf %95, %92 : vector<8x64xf32>
      %97 = arith.subf %76, %96 : vector<8x64xf32>
      %98 = math.exp %97 : vector<8x64xf32>
      %99 = arith.subf %80, %96 : vector<8x64xf32>
      %100 = math.exp %99 : vector<8x64xf32>
      %101 = arith.subf %84, %96 : vector<8x64xf32>
      %102 = math.exp %101 : vector<8x64xf32>
      %103 = arith.subf %88, %96 : vector<8x64xf32>
      %104 = math.exp %103 : vector<8x64xf32>
      %105 = arith.subf %92, %96 : vector<8x64xf32>
      %106 = math.exp %105 : vector<8x64xf32>
      %107 = arith.mulf %98, %20 : vector<8x64xf32>
      %108 = arith.addf %98, %100 : vector<8x64xf32>
      %109 = arith.mulf %100, %20 : vector<8x64xf32>
      %110 = arith.addf %107, %109 : vector<8x64xf32>
      %111 = arith.addf %108, %102 : vector<8x64xf32>
      %112 = arith.mulf %102, %70 : vector<8x64xf32>
      %113 = arith.addf %110, %112 : vector<8x64xf32>
      %114 = arith.addf %111, %104 : vector<8x64xf32>
      %115 = arith.mulf %104, %71 : vector<8x64xf32>
      %116 = arith.addf %113, %115 : vector<8x64xf32>
      %117 = arith.addf %114, %106 : vector<8x64xf32>
      %118 = arith.mulf %106, %72 : vector<8x64xf32>
      %119 = arith.addf %116, %118 : vector<8x64xf32>
      %120 = tpu.reciprocal %117 {approx = true} : vector<8x64xf32> -> vector<8x64xf32>
      %121 = arith.mulf %119, %120 : vector<8x64xf32>
      %cst_51 = arith.constant dense<0.000000e+00> : vector<8x64xf32>
      %122 = tpu.matmul %121, %9, %cst_51 {dimension_numbers = #tpu.dot_dimension_numbers<[1], [0], [0], [1], [0, 0, 1, 1], [], []>} : vector<8x64xf32>, vector<64x64xf32>, vector<8x64xf32> -> vector<8x64xf32>
      %123 = vector.extract_strided_slice %122 {offsets = [0, 0], sizes = [8, 32], strides = [1, 1]} : vector<8x64xf32> to vector<8x32xf32>
      %124 = arith.addf %123, %23 : vector<8x32xf32>
      %cst_52 = arith.constant 0.000000e+00 : f32
      %125 = vector.broadcast %cst_52 : f32 to vector<8x32xf32>
      %126 = arith.maximumf %124, %125 : vector<8x32xf32>
      %cst_53 = arith.constant dense<0.000000e+00> : vector<8xf32>
      %127 = vector.multi_reduction <add>, %126, %cst_53 [1] : vector<8x32xf32> to vector<8xf32>
      %128 = vector.shape_cast %127 : vector<8xf32> to vector<8x1xf32>
      %cst_54 = arith.constant 3.200000e+01 : f32
      %129 = vector.broadcast %cst_54 : f32 to vector<8x1xf32>
      %130 = arith.divf %128, %129 : vector<8x1xf32>
      %131 = vector.broadcast %130 : vector<8x1xf32> to vector<8x32xf32>
      %132 = arith.subf %126, %131 : vector<8x32xf32>
      %133 = arith.mulf %132, %132 : vector<8x32xf32>
      %cst_55 = arith.constant dense<0.000000e+00> : vector<8xf32>
      %134 = vector.multi_reduction <add>, %133, %cst_55 [1] : vector<8x32xf32> to vector<8xf32>
      %135 = vector.shape_cast %134 : vector<8xf32> to vector<8x1xf32>
      %cst_56 = arith.constant 0.0322580636 : f32
      %136 = vector.broadcast %cst_56 : f32 to vector<8x1xf32>
      %137 = arith.mulf %135, %136 : vector<8x1xf32>
      %138 = math.sqrt %137 : vector<8x1xf32>
      %cst_57 = arith.constant 9.99999997E-7 : f32
      %139 = vector.broadcast %cst_57 : f32 to vector<8x1xf32>
      %140 = arith.addf %138, %139 : vector<8x1xf32>
      %141 = tpu.reciprocal %140 : vector<8x1xf32> -> vector<8x1xf32>
      %142 = vector.broadcast %130 : vector<8x1xf32> to vector<8x32xf32>
      %143 = arith.subf %126, %142 : vector<8x32xf32>
      %144 = arith.mulf %26, %143 : vector<8x32xf32>
      %145 = vector.broadcast %141 : vector<8x1xf32> to vector<8x32xf32>
      %146 = arith.mulf %144, %145 : vector<8x32xf32>
      %147 = arith.addf %146, %29 : vector<8x32xf32>
      %c0_58 = arith.constant 0 : index
      %c0_59 = arith.constant 0 : index
      %148 = vector.load %arg14[%c0_58, %c0_59] : memref<24x32xf32, #tpu.memory_space<vmem>>, vector<8x32xf32>
      tpu.vector_store %arg14[%c0_58, %c0_59], %147 {strides = array<i32>} : memref<24x32xf32, #tpu.memory_space<vmem>>, vector<8x32xf32>,
      %c8 = arith.constant 8 : index
      %c0_60 = arith.constant 0 : index
      %149 = vector.load %arg14[%c8, %c0_60] : memref<24x32xf32, #tpu.memory_space<vmem>>, vector<8x32xf32>
      %cst_61 = arith.constant dense<0.000000e+00> : vector<8x64xf32>
      %150 = tpu.matmul %149, %7, %cst_61 {dimension_numbers = #tpu.dot_dimension_numbers<[1], [0], [0], [1], [0, 0, 1, 1], [], []>} : vector<8x32xf32>, vector<32x64xf32>, vector<8x64xf32> -> vector<8x64xf32>
      %151 = arith.addf %150, %17 : vector<8x64xf32>
      %cst_62 = arith.constant dense<0.000000e+00> : vector<8x64xf32>
      %152 = tpu.matmul %149, %8, %cst_62 {dimension_numbers = #tpu.dot_dimension_numbers<[1], [0], [0], [1], [0, 0, 1, 1], [], []>} : vector<8x32xf32>, vector<32x64xf32>, vector<8x64xf32> -> vector<8x64xf32>
      %153 = arith.addf %152, %20 : vector<8x64xf32>
      %154 = vector.extract_strided_slice %1 {offsets = [0, 0], sizes = [16, 24], strides = [1, 1]} : vector<32x24xf32> to vector<16x24xf32>
      %c0_63 = arith.constant 0 : index
      %c0_64 = arith.constant 0 : index
      %155 = vector.load %arg14[%c0_63, %c0_64] : memref<24x32xf32, #tpu.memory_space<vmem>>, vector<24x32xf32>
      %cst_65 = arith.constant dense<0.000000e+00> : vector<16x32xf32>
      %156 = tpu.matmul %154, %155, %cst_65 {dimension_numbers = #tpu.dot_dimension_numbers<[1], [0], [0], [1], [0, 0, 1, 1], [], []>} : vector<16x24xf32>, vector<24x32xf32>, vector<16x32xf32> -> vector<16x32xf32>
      %cst_66 = arith.constant dense<0.000000e+00> : vector<16x64xf32>
      %157 = tpu.matmul %156, %8, %cst_66 {dimension_numbers = #tpu.dot_dimension_numbers<[1], [0], [0], [1], [0, 0, 1, 1], [], []>} : vector<16x32xf32>, vector<32x64xf32>, vector<16x64xf32> -> vector<16x64xf32>
      %158 = vector.extract_strided_slice %157 {offsets = [0, 0], sizes = [8, 64], strides = [1, 1]} : vector<16x64xf32> to vector<8x64xf32>
      %159 = arith.addf %158, %20 : vector<8x64xf32>
      %160 = vector.extract_strided_slice %157 {offsets = [8, 0], sizes = [8, 64], strides = [1, 1]} : vector<16x64xf32> to vector<8x64xf32>
      %161 = arith.addf %160, %20 : vector<8x64xf32>
      %162 = vector.extract_strided_slice %49 {offsets = [8, 0], sizes = [8, 64], strides = [1, 1]} : vector<24x64xf32> to vector<8x64xf32>
      %163 = vector.extract_strided_slice %65 {offsets = [8, 0], sizes = [8, 64], strides = [1, 1]} : vector<24x64xf32> to vector<8x64xf32>
      %164 = arith.mulf %151, %159 : vector<8x64xf32>
      %cst_67 = arith.constant dense<0.000000e+00> : vector<8x64xf32>
      %165 = tpu.matmul %164, %4, %cst_67 {dimension_numbers = #tpu.dot_dimension_numbers<[1], [0], [0], [1], [0, 0, 1, 1], [], []>} : vector<8x64xf32>, vector<64x64xf32>, vector<8x64xf32> -> vector<8x64xf32>
      %cst_68 = arith.constant 5.000000e-01 : f32
      %166 = vector.broadcast %cst_68 : f32 to vector<8x64xf32>
      %167 = arith.mulf %165, %166 : vector<8x64xf32>
      %168 = arith.mulf %151, %161 : vector<8x64xf32>
      %cst_69 = arith.constant dense<0.000000e+00> : vector<8x64xf32>
      %169 = tpu.matmul %168, %4, %cst_69 {dimension_numbers = #tpu.dot_dimension_numbers<[1], [0], [0], [1], [0, 0, 1, 1], [], []>} : vector<8x64xf32>, vector<64x64xf32>, vector<8x64xf32> -> vector<8x64xf32>
      %cst_70 = arith.constant 5.000000e-01 : f32
      %170 = vector.broadcast %cst_70 : f32 to vector<8x64xf32>
      %171 = arith.mulf %169, %170 : vector<8x64xf32>
      %172 = arith.mulf %151, %153 : vector<8x64xf32>
      %cst_71 = arith.constant dense<0.000000e+00> : vector<8x64xf32>
      %173 = tpu.matmul %172, %4, %cst_71 {dimension_numbers = #tpu.dot_dimension_numbers<[1], [0], [0], [1], [0, 0, 1, 1], [], []>} : vector<8x64xf32>, vector<64x64xf32>, vector<8x64xf32> -> vector<8x64xf32>
      %cst_72 = arith.constant 5.000000e-01 : f32
      %174 = vector.broadcast %cst_72 : f32 to vector<8x64xf32>
      %175 = arith.mulf %173, %174 : vector<8x64xf32>
      %176 = arith.mulf %151, %162 : vector<8x64xf32>
      %cst_73 = arith.constant dense<0.000000e+00> : vector<8x64xf32>
      %177 = tpu.matmul %176, %4, %cst_73 {dimension_numbers = #tpu.dot_dimension_numbers<[1], [0], [0], [1], [0, 0, 1, 1], [], []>} : vector<8x64xf32>, vector<64x64xf32>, vector<8x64xf32> -> vector<8x64xf32>
      %cst_74 = arith.constant 5.000000e-01 : f32
      %178 = vector.broadcast %cst_74 : f32 to vector<8x64xf32>
      %179 = arith.mulf %177, %178 : vector<8x64xf32>
      %180 = arith.mulf %151, %163 : vector<8x64xf32>
      %cst_75 = arith.constant dense<0.000000e+00> : vector<8x64xf32>
      %181 = tpu.matmul %180, %4, %cst_75 {dimension_numbers = #tpu.dot_dimension_numbers<[1], [0], [0], [1], [0, 0, 1, 1], [], []>} : vector<8x64xf32>, vector<64x64xf32>, vector<8x64xf32> -> vector<8x64xf32>
      %cst_76 = arith.constant 5.000000e-01 : f32
      %182 = vector.broadcast %cst_76 : f32 to vector<8x64xf32>
      %183 = arith.mulf %181, %182 : vector<8x64xf32>
      %184 = arith.maximumf %167, %171 : vector<8x64xf32>
      %185 = arith.maximumf %184, %175 : vector<8x64xf32>
      %186 = arith.maximumf %185, %179 : vector<8x64xf32>
      %187 = arith.maximumf %186, %183 : vector<8x64xf32>
      %188 = arith.subf %167, %187 : vector<8x64xf32>
      %189 = math.exp %188 : vector<8x64xf32>
      %190 = arith.subf %171, %187 : vector<8x64xf32>
      %191 = math.exp %190 : vector<8x64xf32>
      %192 = arith.subf %175, %187 : vector<8x64xf32>
      %193 = math.exp %192 : vector<8x64xf32>
      %194 = arith.subf %179, %187 : vector<8x64xf32>
      %195 = math.exp %194 : vector<8x64xf32>
      %196 = arith.subf %183, %187 : vector<8x64xf32>
      %197 = math.exp %196 : vector<8x64xf32>
      %198 = arith.mulf %189, %159 : vector<8x64xf32>
      %199 = arith.addf %189, %191 : vector<8x64xf32>
      %200 = arith.mulf %191, %161 : vector<8x64xf32>
      %201 = arith.addf %198, %200 : vector<8x64xf32>
      %202 = arith.addf %199, %193 : vector<8x64xf32>
      %203 = arith.mulf %193, %153 : vector<8x64xf32>
      %204 = arith.addf %201, %203 : vector<8x64xf32>
      %205 = arith.addf %202, %195 : vector<8x64xf32>
      %206 = arith.mulf %195, %162 : vector<8x64xf32>
      %207 = arith.addf %204, %206 : vector<8x64xf32>
      %208 = arith.addf %205, %197 : vector<8x64xf32>
      %209 = arith.mulf %197, %163 : vector<8x64xf32>
      %210 = arith.addf %207, %209 : vector<8x64xf32>
      %211 = tpu.reciprocal %208 {approx = true} : vector<8x64xf32> -> vector<8x64xf32>
      %212 = arith.mulf %210, %211 : vector<8x64xf32>
      %cst_77 = arith.constant dense<0.000000e+00> : vector<8x64xf32>
      %213 = tpu.matmul %212, %9, %cst_77 {dimension_numbers = #tpu.dot_dimension_numbers<[1], [0], [0], [1], [0, 0, 1, 1], [], []>} : vector<8x64xf32>, vector<64x64xf32>, vector<8x64xf32> -> vector<8x64xf32>
      %214 = vector.extract_strided_slice %213 {offsets = [0, 0], sizes = [8, 32], strides = [1, 1]} : vector<8x64xf32> to vector<8x32xf32>
      %215 = arith.addf %214, %23 : vector<8x32xf32>
      %cst_78 = arith.constant 0.000000e+00 : f32
      %216 = vector.broadcast %cst_78 : f32 to vector<8x32xf32>
      %217 = arith.maximumf %215, %216 : vector<8x32xf32>
      %cst_79 = arith.constant dense<0.000000e+00> : vector<8xf32>
      %218 = vector.multi_reduction <add>, %217, %cst_79 [1] : vector<8x32xf32> to vector<8xf32>
      %219 = vector.shape_cast %218 : vector<8xf32> to vector<8x1xf32>
      %cst_80 = arith.constant 3.200000e+01 : f32
      %220 = vector.broadcast %cst_80 : f32 to vector<8x1xf32>
      %221 = arith.divf %219, %220 : vector<8x1xf32>
      %222 = vector.broadcast %221 : vector<8x1xf32> to vector<8x32xf32>
      %223 = arith.subf %217, %222 : vector<8x32xf32>
      %224 = arith.mulf %223, %223 : vector<8x32xf32>
      %cst_81 = arith.constant dense<0.000000e+00> : vector<8xf32>
      %225 = vector.multi_reduction <add>, %224, %cst_81 [1] : vector<8x32xf32> to vector<8xf32>
      %226 = vector.shape_cast %225 : vector<8xf32> to vector<8x1xf32>
      %cst_82 = arith.constant 0.0322580636 : f32
      %227 = vector.broadcast %cst_82 : f32 to vector<8x1xf32>
      %228 = arith.mulf %226, %227 : vector<8x1xf32>
      %229 = math.sqrt %228 : vector<8x1xf32>
      %cst_83 = arith.constant 9.99999997E-7 : f32
      %230 = vector.broadcast %cst_83 : f32 to vector<8x1xf32>
      %231 = arith.addf %229, %230 : vector<8x1xf32>
      %232 = tpu.reciprocal %231 : vector<8x1xf32> -> vector<8x1xf32>
      %233 = vector.broadcast %221 : vector<8x1xf32> to vector<8x32xf32>
      %234 = arith.subf %217, %233 : vector<8x32xf32>
      %235 = arith.mulf %26, %234 : vector<8x32xf32>
      %236 = vector.broadcast %232 : vector<8x1xf32> to vector<8x32xf32>
      %237 = arith.mulf %235, %236 : vector<8x32xf32>
      %238 = arith.addf %237, %29 : vector<8x32xf32>
      %c8_84 = arith.constant 8 : index
      %c0_85 = arith.constant 0 : index
      %239 = vector.load %arg14[%c8_84, %c0_85] : memref<24x32xf32, #tpu.memory_space<vmem>>, vector<8x32xf32>
      tpu.vector_store %arg14[%c8_84, %c0_85], %238 {strides = array<i32>} : memref<24x32xf32, #tpu.memory_space<vmem>>, vector<8x32xf32>,
      %c16 = arith.constant 16 : index
      %c0_86 = arith.constant 0 : index
      %240 = vector.load %arg14[%c16, %c0_86] : memref<24x32xf32, #tpu.memory_space<vmem>>, vector<8x32xf32>
      %cst_87 = arith.constant dense<0.000000e+00> : vector<8x64xf32>
      %241 = tpu.matmul %240, %7, %cst_87 {dimension_numbers = #tpu.dot_dimension_numbers<[1], [0], [0], [1], [0, 0, 1, 1], [], []>} : vector<8x32xf32>, vector<32x64xf32>, vector<8x64xf32> -> vector<8x64xf32>
      %242 = arith.addf %241, %17 : vector<8x64xf32>
      %cst_88 = arith.constant dense<0.000000e+00> : vector<8x64xf32>
      %243 = tpu.matmul %240, %8, %cst_88 {dimension_numbers = #tpu.dot_dimension_numbers<[1], [0], [0], [1], [0, 0, 1, 1], [], []>} : vector<8x32xf32>, vector<32x64xf32>, vector<8x64xf32> -> vector<8x64xf32>
      %244 = arith.addf %243, %20 : vector<8x64xf32>
      %245 = vector.extract_strided_slice %1 {offsets = [16, 0], sizes = [16, 24], strides = [1, 1]} : vector<32x24xf32> to vector<16x24xf32>
      %c0_89 = arith.constant 0 : index
      %c0_90 = arith.constant 0 : index
      %246 = vector.load %arg14[%c0_89, %c0_90] : memref<24x32xf32, #tpu.memory_space<vmem>>, vector<24x32xf32>
      %cst_91 = arith.constant dense<0.000000e+00> : vector<16x32xf32>
      %247 = tpu.matmul %245, %246, %cst_91 {dimension_numbers = #tpu.dot_dimension_numbers<[1], [0], [0], [1], [0, 0, 1, 1], [], []>} : vector<16x24xf32>, vector<24x32xf32>, vector<16x32xf32> -> vector<16x32xf32>
      %cst_92 = arith.constant dense<0.000000e+00> : vector<16x64xf32>
      %248 = tpu.matmul %247, %8, %cst_92 {dimension_numbers = #tpu.dot_dimension_numbers<[1], [0], [0], [1], [0, 0, 1, 1], [], []>} : vector<16x32xf32>, vector<32x64xf32>, vector<16x64xf32> -> vector<16x64xf32>
      %249 = vector.extract_strided_slice %248 {offsets = [0, 0], sizes = [8, 64], strides = [1, 1]} : vector<16x64xf32> to vector<8x64xf32>
      %250 = arith.addf %249, %20 : vector<8x64xf32>
      %251 = vector.extract_strided_slice %248 {offsets = [8, 0], sizes = [8, 64], strides = [1, 1]} : vector<16x64xf32> to vector<8x64xf32>
      %252 = arith.addf %251, %20 : vector<8x64xf32>
      %253 = vector.extract_strided_slice %49 {offsets = [16, 0], sizes = [8, 64], strides = [1, 1]} : vector<24x64xf32> to vector<8x64xf32>
      %254 = vector.extract_strided_slice %65 {offsets = [16, 0], sizes = [8, 64], strides = [1, 1]} : vector<24x64xf32> to vector<8x64xf32>
      %255 = arith.mulf %242, %250 : vector<8x64xf32>
      %cst_93 = arith.constant dense<0.000000e+00> : vector<8x64xf32>
      %256 = tpu.matmul %255, %4, %cst_93 {dimension_numbers = #tpu.dot_dimension_numbers<[1], [0], [0], [1], [0, 0, 1, 1], [], []>} : vector<8x64xf32>, vector<64x64xf32>, vector<8x64xf32> -> vector<8x64xf32>
      %cst_94 = arith.constant 5.000000e-01 : f32
      %257 = vector.broadcast %cst_94 : f32 to vector<8x64xf32>
      %258 = arith.mulf %256, %257 : vector<8x64xf32>
      %259 = arith.mulf %242, %252 : vector<8x64xf32>
      %cst_95 = arith.constant dense<0.000000e+00> : vector<8x64xf32>
      %260 = tpu.matmul %259, %4, %cst_95 {dimension_numbers = #tpu.dot_dimension_numbers<[1], [0], [0], [1], [0, 0, 1, 1], [], []>} : vector<8x64xf32>, vector<64x64xf32>, vector<8x64xf32> -> vector<8x64xf32>
      %cst_96 = arith.constant 5.000000e-01 : f32
      %261 = vector.broadcast %cst_96 : f32 to vector<8x64xf32>
      %262 = arith.mulf %260, %261 : vector<8x64xf32>
      %263 = arith.mulf %242, %244 : vector<8x64xf32>
      %cst_97 = arith.constant dense<0.000000e+00> : vector<8x64xf32>
      %264 = tpu.matmul %263, %4, %cst_97 {dimension_numbers = #tpu.dot_dimension_numbers<[1], [0], [0], [1], [0, 0, 1, 1], [], []>} : vector<8x64xf32>, vector<64x64xf32>, vector<8x64xf32> -> vector<8x64xf32>
      %cst_98 = arith.constant 5.000000e-01 : f32
      %265 = vector.broadcast %cst_98 : f32 to vector<8x64xf32>
      %266 = arith.mulf %264, %265 : vector<8x64xf32>
      %267 = arith.mulf %242, %253 : vector<8x64xf32>
      %cst_99 = arith.constant dense<0.000000e+00> : vector<8x64xf32>
      %268 = tpu.matmul %267, %4, %cst_99 {dimension_numbers = #tpu.dot_dimension_numbers<[1], [0], [0], [1], [0, 0, 1, 1], [], []>} : vector<8x64xf32>, vector<64x64xf32>, vector<8x64xf32> -> vector<8x64xf32>
      %cst_100 = arith.constant 5.000000e-01 : f32
      %269 = vector.broadcast %cst_100 : f32 to vector<8x64xf32>
      %270 = arith.mulf %268, %269 : vector<8x64xf32>
      %271 = arith.mulf %242, %254 : vector<8x64xf32>
      %cst_101 = arith.constant dense<0.000000e+00> : vector<8x64xf32>
      %272 = tpu.matmul %271, %4, %cst_101 {dimension_numbers = #tpu.dot_dimension_numbers<[1], [0], [0], [1], [0, 0, 1, 1], [], []>} : vector<8x64xf32>, vector<64x64xf32>, vector<8x64xf32> -> vector<8x64xf32>
      %cst_102 = arith.constant 5.000000e-01 : f32
      %273 = vector.broadcast %cst_102 : f32 to vector<8x64xf32>
      %274 = arith.mulf %272, %273 : vector<8x64xf32>
      %275 = arith.maximumf %258, %262 : vector<8x64xf32>
      %276 = arith.maximumf %275, %266 : vector<8x64xf32>
      %277 = arith.maximumf %276, %270 : vector<8x64xf32>
      %278 = arith.maximumf %277, %274 : vector<8x64xf32>
      %279 = arith.subf %258, %278 : vector<8x64xf32>
      %280 = math.exp %279 : vector<8x64xf32>
      %281 = arith.subf %262, %278 : vector<8x64xf32>
      %282 = math.exp %281 : vector<8x64xf32>
      %283 = arith.subf %266, %278 : vector<8x64xf32>
      %284 = math.exp %283 : vector<8x64xf32>
      %285 = arith.subf %270, %278 : vector<8x64xf32>
      %286 = math.exp %285 : vector<8x64xf32>
      %287 = arith.subf %274, %278 : vector<8x64xf32>
      %288 = math.exp %287 : vector<8x64xf32>
      %289 = arith.mulf %280, %250 : vector<8x64xf32>
      %290 = arith.addf %280, %282 : vector<8x64xf32>
      %291 = arith.mulf %282, %252 : vector<8x64xf32>
      %292 = arith.addf %289, %291 : vector<8x64xf32>
      %293 = arith.addf %290, %284 : vector<8x64xf32>
      %294 = arith.mulf %284, %244 : vector<8x64xf32>
      %295 = arith.addf %292, %294 : vector<8x64xf32>
      %296 = arith.addf %293, %286 : vector<8x64xf32>
      %297 = arith.mulf %286, %253 : vector<8x64xf32>
      %298 = arith.addf %295, %297 : vector<8x64xf32>
      %299 = arith.addf %296, %288 : vector<8x64xf32>
      %300 = arith.mulf %288, %254 : vector<8x64xf32>
      %301 = arith.addf %298, %300 : vector<8x64xf32>
      %302 = tpu.reciprocal %299 {approx = true} : vector<8x64xf32> -> vector<8x64xf32>
      %303 = arith.mulf %301, %302 : vector<8x64xf32>
      %cst_103 = arith.constant dense<0.000000e+00> : vector<8x64xf32>
      %304 = tpu.matmul %303, %9, %cst_103 {dimension_numbers = #tpu.dot_dimension_numbers<[1], [0], [0], [1], [0, 0, 1, 1], [], []>} : vector<8x64xf32>, vector<64x64xf32>, vector<8x64xf32> -> vector<8x64xf32>
      %305 = vector.extract_strided_slice %304 {offsets = [0, 0], sizes = [8, 32], strides = [1, 1]} : vector<8x64xf32> to vector<8x32xf32>
      %306 = arith.addf %305, %23 : vector<8x32xf32>
      %cst_104 = arith.constant 0.000000e+00 : f32
      %307 = vector.broadcast %cst_104 : f32 to vector<8x32xf32>
      %308 = arith.maximumf %306, %307 : vector<8x32xf32>
      %cst_105 = arith.constant dense<0.000000e+00> : vector<8xf32>
      %309 = vector.multi_reduction <add>, %308, %cst_105 [1] : vector<8x32xf32> to vector<8xf32>
      %310 = vector.shape_cast %309 : vector<8xf32> to vector<8x1xf32>
      %cst_106 = arith.constant 3.200000e+01 : f32
      %311 = vector.broadcast %cst_106 : f32 to vector<8x1xf32>
      %312 = arith.divf %310, %311 : vector<8x1xf32>
      %313 = vector.broadcast %312 : vector<8x1xf32> to vector<8x32xf32>
      %314 = arith.subf %308, %313 : vector<8x32xf32>
      %315 = arith.mulf %314, %314 : vector<8x32xf32>
      %cst_107 = arith.constant dense<0.000000e+00> : vector<8xf32>
      %316 = vector.multi_reduction <add>, %315, %cst_107 [1] : vector<8x32xf32> to vector<8xf32>
      %317 = vector.shape_cast %316 : vector<8xf32> to vector<8x1xf32>
      %cst_108 = arith.constant 0.0322580636 : f32
      %318 = vector.broadcast %cst_108 : f32 to vector<8x1xf32>
      %319 = arith.mulf %317, %318 : vector<8x1xf32>
      %320 = math.sqrt %319 : vector<8x1xf32>
      %cst_109 = arith.constant 9.99999997E-7 : f32
      %321 = vector.broadcast %cst_109 : f32 to vector<8x1xf32>
      %322 = arith.addf %320, %321 : vector<8x1xf32>
      %323 = tpu.reciprocal %322 : vector<8x1xf32> -> vector<8x1xf32>
      %324 = vector.broadcast %312 : vector<8x1xf32> to vector<8x32xf32>
      %325 = arith.subf %308, %324 : vector<8x32xf32>
      %326 = arith.mulf %26, %325 : vector<8x32xf32>
      %327 = vector.broadcast %323 : vector<8x1xf32> to vector<8x32xf32>
      %328 = arith.mulf %326, %327 : vector<8x32xf32>
      %329 = arith.addf %328, %29 : vector<8x32xf32>
      %c16_110 = arith.constant 16 : index
      %c0_111 = arith.constant 0 : index
      %330 = vector.load %arg14[%c16_110, %c0_111] : memref<24x32xf32, #tpu.memory_space<vmem>>, vector<8x32xf32>
      tpu.vector_store %arg14[%c16_110, %c0_111], %329 {strides = array<i32>} : memref<24x32xf32, #tpu.memory_space<vmem>>, vector<8x32xf32>,
      %c0_112 = arith.constant 0 : index
      %c0_113 = arith.constant 0 : index
      %331 = vector.load %arg14[%c0_112, %c0_113] : memref<24x32xf32, #tpu.memory_space<vmem>>, vector<24x32xf32>
      %cst_114 = arith.constant dense<0.000000e+00> : vector<56x32xf32>
      %332 = tpu.matmul %2, %331, %cst_114 {dimension_numbers = #tpu.dot_dimension_numbers<[1], [0], [0], [1], [0, 0, 1, 1], [], []>} : vector<56x24xf32>, vector<24x32xf32>, vector<56x32xf32> -> vector<56x32xf32>
      %cst_115 = arith.constant dense<0.000000e+00> : vector<56x64xf32>
      %333 = tpu.matmul %332, %11, %cst_115 {dimension_numbers = #tpu.dot_dimension_numbers<[1], [0], [0], [1], [0, 0, 1, 1], [], []>} : vector<56x32xf32>, vector<32x64xf32>, vector<56x64xf32> -> vector<56x64xf32>
      %334 = arith.addf %333, %47 : vector<56x64xf32>
      %cst_116 = arith.constant dense<0.000000e+00> : vector<8x64xf32>
      %335 = tpu.matmul %62, %10, %cst_116 {dimension_numbers = #tpu.dot_dimension_numbers<[1], [0], [0], [1], [0, 0, 1, 1], [], []>} : vector<8x32xf32>, vector<32x64xf32>, vector<8x64xf32> -> vector<8x64xf32>
      %336 = arith.addf %335, %32 : vector<8x64xf32>
      %337 = vector.extract_strided_slice %334 {offsets = [0, 0], sizes = [8, 64], strides = [1, 1]} : vector<56x64xf32> to vector<8x64xf32>
      %338 = vector.extract_strided_slice %334 {offsets = [8, 0], sizes = [8, 64], strides = [1, 1]} : vector<56x64xf32> to vector<8x64xf32>
      %339 = vector.extract_strided_slice %334 {offsets = [16, 0], sizes = [8, 64], strides = [1, 1]} : vector<56x64xf32> to vector<8x64xf32>
      %340 = vector.extract_strided_slice %334 {offsets = [24, 0], sizes = [8, 64], strides = [1, 1]} : vector<56x64xf32> to vector<8x64xf32>
      %341 = vector.extract_strided_slice %334 {offsets = [32, 0], sizes = [8, 64], strides = [1, 1]} : vector<56x64xf32> to vector<8x64xf32>
      %342 = vector.extract_strided_slice %334 {offsets = [40, 0], sizes = [8, 64], strides = [1, 1]} : vector<56x64xf32> to vector<8x64xf32>
      %343 = vector.extract_strided_slice %334 {offsets = [48, 0], sizes = [8, 64], strides = [1, 1]} : vector<56x64xf32> to vector<8x64xf32>
      %344 = arith.mulf %336, %337 : vector<8x64xf32>
      %cst_117 = arith.constant dense<0.000000e+00> : vector<8x64xf32>
      %345 = tpu.matmul %344, %4, %cst_117 {dimension_numbers = #tpu.dot_dimension_numbers<[1], [0], [0], [1], [0, 0, 1, 1], [], []>} : vector<8x64xf32>, vector<64x64xf32>, vector<8x64xf32> -> vector<8x64xf32>
      %cst_118 = arith.constant 5.000000e-01 : f32
      %346 = vector.broadcast %cst_118 : f32 to vector<8x64xf32>
      %347 = arith.mulf %345, %346 : vector<8x64xf32>
      %348 = arith.mulf %336, %338 : vector<8x64xf32>
      %cst_119 = arith.constant dense<0.000000e+00> : vector<8x64xf32>
      %349 = tpu.matmul %348, %4, %cst_119 {dimension_numbers = #tpu.dot_dimension_numbers<[1], [0], [0], [1], [0, 0, 1, 1], [], []>} : vector<8x64xf32>, vector<64x64xf32>, vector<8x64xf32> -> vector<8x64xf32>
      %cst_120 = arith.constant 5.000000e-01 : f32
      %350 = vector.broadcast %cst_120 : f32 to vector<8x64xf32>
      %351 = arith.mulf %349, %350 : vector<8x64xf32>
      %352 = arith.mulf %336, %339 : vector<8x64xf32>
      %cst_121 = arith.constant dense<0.000000e+00> : vector<8x64xf32>
      %353 = tpu.matmul %352, %4, %cst_121 {dimension_numbers = #tpu.dot_dimension_numbers<[1], [0], [0], [1], [0, 0, 1, 1], [], []>} : vector<8x64xf32>, vector<64x64xf32>, vector<8x64xf32> -> vector<8x64xf32>
      %cst_122 = arith.constant 5.000000e-01 : f32
      %354 = vector.broadcast %cst_122 : f32 to vector<8x64xf32>
      %355 = arith.mulf %353, %354 : vector<8x64xf32>
      %356 = arith.mulf %336, %340 : vector<8x64xf32>
      %cst_123 = arith.constant dense<0.000000e+00> : vector<8x64xf32>
      %357 = tpu.matmul %356, %4, %cst_123 {dimension_numbers = #tpu.dot_dimension_numbers<[1], [0], [0], [1], [0, 0, 1, 1], [], []>} : vector<8x64xf32>, vector<64x64xf32>, vector<8x64xf32> -> vector<8x64xf32>
      %cst_124 = arith.constant 5.000000e-01 : f32
      %358 = vector.broadcast %cst_124 : f32 to vector<8x64xf32>
      %359 = arith.mulf %357, %358 : vector<8x64xf32>
      %360 = arith.mulf %336, %341 : vector<8x64xf32>
      %cst_125 = arith.constant dense<0.000000e+00> : vector<8x64xf32>
      %361 = tpu.matmul %360, %4, %cst_125 {dimension_numbers = #tpu.dot_dimension_numbers<[1], [0], [0], [1], [0, 0, 1, 1], [], []>} : vector<8x64xf32>, vector<64x64xf32>, vector<8x64xf32> -> vector<8x64xf32>
      %cst_126 = arith.constant 5.000000e-01 : f32
      %362 = vector.broadcast %cst_126 : f32 to vector<8x64xf32>
      %363 = arith.mulf %361, %362 : vector<8x64xf32>
      %364 = arith.mulf %336, %342 : vector<8x64xf32>
      %cst_127 = arith.constant dense<0.000000e+00> : vector<8x64xf32>
      %365 = tpu.matmul %364, %4, %cst_127 {dimension_numbers = #tpu.dot_dimension_numbers<[1], [0], [0], [1], [0, 0, 1, 1], [], []>} : vector<8x64xf32>, vector<64x64xf32>, vector<8x64xf32> -> vector<8x64xf32>
      %cst_128 = arith.constant 5.000000e-01 : f32
      %366 = vector.broadcast %cst_128 : f32 to vector<8x64xf32>
      %367 = arith.mulf %365, %366 : vector<8x64xf32>
      %368 = arith.mulf %336, %343 : vector<8x64xf32>
      %cst_129 = arith.constant dense<0.000000e+00> : vector<8x64xf32>
      %369 = tpu.matmul %368, %4, %cst_129 {dimension_numbers = #tpu.dot_dimension_numbers<[1], [0], [0], [1], [0, 0, 1, 1], [], []>} : vector<8x64xf32>, vector<64x64xf32>, vector<8x64xf32> -> vector<8x64xf32>
      %cst_130 = arith.constant 5.000000e-01 : f32
      %370 = vector.broadcast %cst_130 : f32 to vector<8x64xf32>
      %371 = arith.mulf %369, %370 : vector<8x64xf32>
      %372 = arith.maximumf %347, %351 : vector<8x64xf32>
      %373 = arith.maximumf %372, %355 : vector<8x64xf32>
      %374 = arith.maximumf %373, %359 : vector<8x64xf32>
      %375 = arith.maximumf %374, %363 : vector<8x64xf32>
      %376 = arith.maximumf %375, %367 : vector<8x64xf32>
      %377 = arith.maximumf %376, %371 : vector<8x64xf32>
      %378 = arith.subf %347, %377 : vector<8x64xf32>
      %379 = math.exp %378 : vector<8x64xf32>
      %380 = arith.subf %351, %377 : vector<8x64xf32>
      %381 = math.exp %380 : vector<8x64xf32>
      %382 = arith.subf %355, %377 : vector<8x64xf32>
      %383 = math.exp %382 : vector<8x64xf32>
      %384 = arith.subf %359, %377 : vector<8x64xf32>
      %385 = math.exp %384 : vector<8x64xf32>
      %386 = arith.subf %363, %377 : vector<8x64xf32>
      %387 = math.exp %386 : vector<8x64xf32>
      %388 = arith.subf %367, %377 : vector<8x64xf32>
      %389 = math.exp %388 : vector<8x64xf32>
      %390 = arith.subf %371, %377 : vector<8x64xf32>
      %391 = math.exp %390 : vector<8x64xf32>
      %392 = arith.mulf %379, %337 : vector<8x64xf32>
      %393 = arith.addf %379, %381 : vector<8x64xf32>
      %394 = arith.mulf %381, %338 : vector<8x64xf32>
      %395 = arith.addf %392, %394 : vector<8x64xf32>
      %396 = arith.addf %393, %383 : vector<8x64xf32>
      %397 = arith.mulf %383, %339 : vector<8x64xf32>
      %398 = arith.addf %395, %397 : vector<8x64xf32>
      %399 = arith.addf %396, %385 : vector<8x64xf32>
      %400 = arith.mulf %385, %340 : vector<8x64xf32>
      %401 = arith.addf %398, %400 : vector<8x64xf32>
      %402 = arith.addf %399, %387 : vector<8x64xf32>
      %403 = arith.mulf %387, %341 : vector<8x64xf32>
      %404 = arith.addf %401, %403 : vector<8x64xf32>
      %405 = arith.addf %402, %389 : vector<8x64xf32>
      %406 = arith.mulf %389, %342 : vector<8x64xf32>
      %407 = arith.addf %404, %406 : vector<8x64xf32>
      %408 = arith.addf %405, %391 : vector<8x64xf32>
      %409 = arith.mulf %391, %343 : vector<8x64xf32>
      %410 = arith.addf %407, %409 : vector<8x64xf32>
      %411 = tpu.reciprocal %408 {approx = true} : vector<8x64xf32> -> vector<8x64xf32>
      %412 = arith.mulf %410, %411 : vector<8x64xf32>
      %cst_131 = arith.constant dense<0.000000e+00> : vector<8x64xf32>
      %413 = tpu.matmul %412, %12, %cst_131 {dimension_numbers = #tpu.dot_dimension_numbers<[1], [0], [0], [1], [0, 0, 1, 1], [], []>} : vector<8x64xf32>, vector<64x64xf32>, vector<8x64xf32> -> vector<8x64xf32>
      %414 = vector.extract_strided_slice %413 {offsets = [0, 0], sizes = [8, 32], strides = [1, 1]} : vector<8x64xf32> to vector<8x32xf32>
      %415 = arith.addf %414, %35 : vector<8x32xf32>
      %cst_132 = arith.constant 0.000000e+00 : f32
      %416 = vector.broadcast %cst_132 : f32 to vector<8x32xf32>
      %417 = arith.maximumf %415, %416 : vector<8x32xf32>
      %cst_133 = arith.constant dense<0.000000e+00> : vector<8xf32>
      %418 = vector.multi_reduction <add>, %417, %cst_133 [1] : vector<8x32xf32> to vector<8xf32>
      %419 = vector.shape_cast %418 : vector<8xf32> to vector<8x1xf32>
      %cst_134 = arith.constant 3.200000e+01 : f32
      %420 = vector.broadcast %cst_134 : f32 to vector<8x1xf32>
      %421 = arith.divf %419, %420 : vector<8x1xf32>
      %422 = vector.broadcast %421 : vector<8x1xf32> to vector<8x32xf32>
      %423 = arith.subf %417, %422 : vector<8x32xf32>
      %424 = arith.mulf %423, %423 : vector<8x32xf32>
      %cst_135 = arith.constant dense<0.000000e+00> : vector<8xf32>
      %425 = vector.multi_reduction <add>, %424, %cst_135 [1] : vector<8x32xf32> to vector<8xf32>
      %426 = vector.shape_cast %425 : vector<8xf32> to vector<8x1xf32>
      %cst_136 = arith.constant 0.0322580636 : f32
      %427 = vector.broadcast %cst_136 : f32 to vector<8x1xf32>
      %428 = arith.mulf %426, %427 : vector<8x1xf32>
      %429 = math.sqrt %428 : vector<8x1xf32>
      %cst_137 = arith.constant 9.99999997E-7 : f32
      %430 = vector.broadcast %cst_137 : f32 to vector<8x1xf32>
      %431 = arith.addf %429, %430 : vector<8x1xf32>
      %432 = tpu.reciprocal %431 : vector<8x1xf32> -> vector<8x1xf32>
      %433 = vector.broadcast %421 : vector<8x1xf32> to vector<8x32xf32>
      %434 = arith.subf %417, %433 : vector<8x32xf32>
      %435 = arith.mulf %38, %434 : vector<8x32xf32>
      %436 = vector.broadcast %432 : vector<8x1xf32> to vector<8x32xf32>
      %437 = arith.mulf %435, %436 : vector<8x32xf32>
      %438 = arith.addf %437, %41 : vector<8x32xf32>
      %c0_138 = arith.constant 0 : index
      %c0_139 = arith.constant 0 : index
      %439 = vector.load %arg15[%c0_138, %c0_139] : memref<8x32xf32, #tpu.memory_space<vmem>>, vector<8x32xf32>
      tpu.vector_store %arg15[%c0_138, %c0_139], %438 {strides = array<i32>} : memref<8x32xf32, #tpu.memory_space<vmem>>, vector<8x32xf32>,
    }
    %c0_24 = arith.constant 0 : index
    %c0_25 = arith.constant 0 : index
    %55 = vector.load %arg14[%c0_24, %c0_25] : memref<24x32xf32, #tpu.memory_space<vmem>>, vector<24x32xf32>
    %c0_26 = arith.constant 0 : index
    %c0_27 = arith.constant 0 : index
    %56 = vector.load %arg11[%c0_26, %c0_27] : memref<32x128xf32, #tpu.memory_space<vmem>>, vector<32x128xf32>
    %cst_28 = arith.constant dense<0.000000e+00> : vector<24x128xf32>
    %57 = tpu.matmul %55, %56, %cst_28 {dimension_numbers = #tpu.dot_dimension_numbers<[1], [0], [0], [1], [0, 0, 1, 1], [], []>} : vector<24x32xf32>, vector<32x128xf32>, vector<24x128xf32> -> vector<24x128xf32>
    %c0_29 = arith.constant 0 : index
    %c0_30 = arith.constant 0 : index
    %58 = vector.load %arg12[%c0_29, %c0_30] : memref<1x128xf32, #tpu.memory_space<vmem>>, vector<1x128xf32>
    %59 = vector.broadcast %58 : vector<1x128xf32> to vector<24x128xf32>
    %60 = arith.addf %57, %59 : vector<24x128xf32>
    %c0_31 = arith.constant 0 : index
    %c0_32 = arith.constant 0 : index
    %61 = vector.load %arg13[%c0_31, %c0_32] : memref<24x128xf32, #tpu.memory_space<vmem>>, vector<24x128xf32>
    tpu.vector_store %arg13[%c0_31, %c0_32], %60 {strides = array<i32>} : memref<24x128xf32, #tpu.memory_space<vmem>>, vector<24x128xf32>,
    return
  }
  func.func @transform_0(%arg0: i32) -> (i32, i32) {
    %c0_i32 = arith.constant 0 : i32
    %c0_i32_0 = arith.constant 0 : i32
    %c0_i32_1 = arith.constant 0 : i32
    return %c0_i32, %c0_i32_0 : i32, i32
  }
  func.func @transform_1(%arg0: i32) -> (i32, i32) {
    %c0_i32 = arith.constant 0 : i32
    %c0_i32_0 = arith.constant 0 : i32
    %c0_i32_1 = arith.constant 0 : i32
    return %c0_i32, %c0_i32_0 : i32, i32
  }
  func.func @transform_2(%arg0: i32) -> (i32, i32) {
    %c0_i32 = arith.constant 0 : i32
    %c0_i32_0 = arith.constant 0 : i32
    %c0_i32_1 = arith.constant 0 : i32
    return %c0_i32, %c0_i32_0 : i32, i32
  }
  func.func @transform_3(%arg0: i32) -> (i32, i32) {
    %c0_i32 = arith.constant 0 : i32
    %c0_i32_0 = arith.constant 0 : i32
    %c0_i32_1 = arith.constant 0 : i32
    return %c0_i32, %c0_i32_0 : i32, i32
  }
  func.func @transform_4(%arg0: i32) -> (i32, i32) {
    %c0_i32 = arith.constant 0 : i32
    %c0_i32_0 = arith.constant 0 : i32
    %c0_i32_1 = arith.constant 0 : i32
    return %c0_i32, %c0_i32_0 : i32, i32
  }
  func.func @transform_5(%arg0: i32) -> (i32, i32) {
    %c0_i32 = arith.constant 0 : i32
    %c0_i32_0 = arith.constant 0 : i32
    %c0_i32_1 = arith.constant 0 : i32
    return %c0_i32, %c0_i32_0 : i32, i32
  }
  func.func @transform_6(%arg0: i32) -> (i32, i32) {
    %c0_i32 = arith.constant 0 : i32
    %c0_i32_0 = arith.constant 0 : i32
    %c0_i32_1 = arith.constant 0 : i32
    return %c0_i32, %c0_i32_0 : i32, i32
  }
  func.func @transform_7(%arg0: i32) -> (i32, i32) {
    %c0_i32 = arith.constant 0 : i32
    %c0_i32_0 = arith.constant 0 : i32
    %c0_i32_1 = arith.constant 0 : i32
    return %c0_i32, %c0_i32_0 : i32, i32
  }
  func.func @transform_8(%arg0: i32) -> (i32, i32) {
    %c0_i32 = arith.constant 0 : i32
    %c0_i32_0 = arith.constant 0 : i32
    %c0_i32_1 = arith.constant 0 : i32
    return %c0_i32, %c0_i32_0 : i32, i32
  }
  func.func @transform_9(%arg0: i32) -> (i32, i32) {
    %c0_i32 = arith.constant 0 : i32
    %c0_i32_0 = arith.constant 0 : i32
    %c0_i32_1 = arith.constant 0 : i32
    return %c0_i32, %c0_i32_0 : i32, i32
  }
  func.func @transform_10(%arg0: i32) -> (i32, i32) {
    %c0_i32 = arith.constant 0 : i32
    %c0_i32_0 = arith.constant 0 : i32
    %c0_i32_1 = arith.constant 0 : i32
    return %c0_i32, %c0_i32_0 : i32, i32
  }
  func.func @transform_11(%arg0: i32) -> (i32, i32) {
    %c0_i32 = arith.constant 0 : i32
    %c0_i32_0 = arith.constant 0 : i32
    %c0_i32_1 = arith.constant 0 : i32
    return %c0_i32, %c0_i32_0 : i32, i32
  }
  func.func @transform_12(%arg0: i32) -> (i32, i32) {
    %c0_i32 = arith.constant 0 : i32
    %c0_i32_0 = arith.constant 0 : i32
    %c0_i32_1 = arith.constant 0 : i32
    return %c0_i32, %c0_i32_0 : i32, i32
  }
}

</mosaic_0001>

<llo_original>
// kernel: forward.1
$region0: #{forward.1}
  #allocation0 [shape = 'u32[]', space=smem, size = 0x4, offset = 0x4, fixed_abs, tag = 'smem constant byte address 0x4 - core index']
  #allocation1 [shape = 'u32[144,128]{1,0:T(1,128)}', space=vmem, size = 0x12000, scoped, tag = 'internal scratch']
  #allocation2 [shape = 'f32[24,32]{1,0:T(8,128)}', space=vmem, size = 0x3000, scoped, tag = 'scratch operand']
  #allocation3 [shape = 'f32[8,32]{1,0:T(8,128)}', space=vmem, size = 0x1000, scoped, tag = 'scratch operand']
  %s0 = inlined_call_operand.vmem [shape: f32[24,32], index: 0, kind: input, shape index: {}]
  %s1 = inlined_call_operand.vmem [shape: f32[32,24], index: 1, kind: input, shape index: {}]
  %s2 = inlined_call_operand.vmem [shape: f32[56,24], index: 2, kind: input, shape index: {}]
  %s3 = inlined_call_operand.vmem [shape: f32[24,8], index: 3, kind: input, shape index: {}]
  %s4 = inlined_call_operand.vmem [shape: f32[8,24], index: 4, kind: input, shape index: {}]
  %s5 = inlined_call_operand.vmem [shape: f32[64,64], index: 5, kind: input, shape index: {}]
  %s6 = inlined_call_operand.vmem [shape: f32[128,64], index: 6, kind: input, shape index: {}]
  %s7 = inlined_call_operand.vmem [shape: f32[8,64], index: 7, kind: input, shape index: {}]
  %s8 = inlined_call_operand.vmem [shape: f32[128,64], index: 8, kind: input, shape index: {}]
  %s9 = inlined_call_operand.vmem [shape: f32[8,64], index: 9, kind: input, shape index: {}]
  %s10 = inlined_call_operand.vmem [shape: f32[32,128], index: 10, kind: input, shape index: {}]
  %s11 = inlined_call_operand.vmem [shape: f32[1,128], index: 11, kind: input, shape index: {}]
  %s12 = inlined_call_operand.vmem [shape: f32[24,128], index: 12, kind: output, shape index: {}]
  %s13 = sld [smem:[#allocation0]]
  $region65: #{forward.1} parent=0
    _
  %s15 = ssub.s32 1, %s13
  %s16 = scalar_select 0, %s15, %s13
  // Predicated region
  $region2: #{forward.1} parent=0 // pred_check
    _
  $region3: #{forward.1} parent=0 // pred_check_branch
    %18 = sbr.rel (0) target = $region5
  $region4: #{forward.1} parent=0 // pred_region
    _
  $region5: #{forward.1} parent=0 // pred_fallthru
    _
  // Predicated region
  $region6: #{forward.1} parent=0 // pred_check
    _
  $region7: #{forward.1} parent=0 // pred_check_branch
    %20 = sbr.rel (0) target = $region9
  $region8: #{forward.1} parent=0 // pred_region
    _
  $region9: #{forward.1} parent=0 // pred_fallthru
    _
  // Predicated region
  $region10: #{forward.1} parent=0 // pred_check
    _
  $region11: #{forward.1} parent=0 // pred_check_branch
    %22 = sbr.rel (0) target = $region13
  $region12: #{forward.1} parent=0 // pred_region
    _
  $region13: #{forward.1} parent=0 // pred_fallthru
    _
  // Predicated region
  $region14: #{forward.1} parent=0 // pred_check
    _
  $region15: #{forward.1} parent=0 // pred_check_branch
    %24 = sbr.rel (0) target = $region17
  $region16: #{forward.1} parent=0 // pred_region
    _
  $region17: #{forward.1} parent=0 // pred_fallthru
    _
  // Predicated region
  $region18: #{forward.1} parent=0 // pred_check
    _
  $region19: #{forward.1} parent=0 // pred_check_branch
    %26 = sbr.rel (0) target = $region21
  $region20: #{forward.1} parent=0 // pred_region
    _
  $region21: #{forward.1} parent=0 // pred_fallthru
    _
  // Predicated region
  $region22: #{forward.1} parent=0 // pred_check
    _
  $region23: #{forward.1} parent=0 // pred_check_branch
    %28 = sbr.rel (0) target = $region25
  $region24: #{forward.1} parent=0 // pred_region
    _
  $region25: #{forward.1} parent=0 // pred_fallthru
    _
  // Predicated region
  $region26: #{forward.1} parent=0 // pred_check
    _
  $region27: #{forward.1} parent=0 // pred_check_branch
    %30 = sbr.rel (0) target = $region29
  $region28: #{forward.1} parent=0 // pred_region
    _
  $region29: #{forward.1} parent=0 // pred_fallthru
    _
  // Predicated region
  $region30: #{forward.1} parent=0 // pred_check
    _
  $region31: #{forward.1} parent=0 // pred_check_branch
    %32 = sbr.rel (0) target = $region33
  $region32: #{forward.1} parent=0 // pred_region
    _
  $region33: #{forward.1} parent=0 // pred_fallthru
    _
  // Predicated region
  $region34: #{forward.1} parent=0 // pred_check
    _
  $region35: #{forward.1} parent=0 // pred_check_branch
    %34 = sbr.rel (0) target = $region37
  $region36: #{forward.1} parent=0 // pred_region
    _
  $region37: #{forward.1} parent=0 // pred_fallthru
    _
  // Predicated region
  $region38: #{forward.1} parent=0 // pred_check
    _
  $region39: #{forward.1} parent=0 // pred_check_branch
    %36 = sbr.rel (0) target = $region41
  $region40: #{forward.1} parent=0 // pred_region
    _
  $region41: #{forward.1} parent=0 // pred_fallthru
    _
  // Predicated region
  $region42: #{forward.1} parent=0 // pred_check
    _
  $region43: #{forward.1} parent=0 // pred_check_branch
    %38 = sbr.rel (0) target = $region45
  $region44: #{forward.1} parent=0 // pred_region
    _
  $region45: #{forward.1} parent=0 // pred_fallthru
    _
  // Predicated region
  $region46: #{forward.1} parent=0 // pred_check
    _
  $region47: #{forward.1} parent=0 // pred_check_branch
    %40 = sbr.rel (0) target = $region49
  $region48: #{forward.1} parent=0 // pred_region
    _
  $region49: #{forward.1} parent=0 // pred_fallthru
    _
  %v41 = vld [vmem:[%s0] sm:$0xff]
  %v42 = vld [vmem:[%s0 + $0x8] sm:$0xff]
  %v43 = vld [vmem:[%s0 + $0x10] sm:$0xff]
  %v44 = vld [vmem:[%s1] sm:$0xff]
  %v45 = vld [vmem:[%s1 + $0x8] sm:$0xff]
  %v46 = vld [vmem:[%s1 + $0x10] sm:$0xff]
  %v47 = vld [vmem:[%s1 + $0x18] sm:$0xff]
  %v48 = vld [vmem:[%s2] sm:$0xff]
  %v49 = vld [vmem:[%s2 + $0x8] sm:$0xff]
  %v50 = vld [vmem:[%s2 + $0x10] sm:$0xff]
  %v51 = vld [vmem:[%s2 + $0x18] sm:$0xff]
  %v52 = vld [vmem:[%s2 + $0x20] sm:$0xff]
  %v53 = vld [vmem:[%s2 + $0x28] sm:$0xff]
  %v54 = vld [vmem:[%s2 + $0x30] sm:$0xff]
  %v55 = vld [vmem:[%s3] sm:$0xff]
  %v56 = vld [vmem:[%s3 + $0x8] sm:$0xff]
  %v57 = vld [vmem:[%s3 + $0x10] sm:$0xff]
  %v58 = vld [vmem:[%s5] sm:$0xff]
  %v59 = vld [vmem:[%s5 + $0x8] sm:$0xff]
  %v60 = vld [vmem:[%s5 + $0x10] sm:$0xff]
  %v61 = vld [vmem:[%s5 + $0x18] sm:$0xff]
  %v62 = vld [vmem:[%s5 + $0x20] sm:$0xff]
  %v63 = vld [vmem:[%s5 + $0x28] sm:$0xff]
  %v64 = vld [vmem:[%s5 + $0x30] sm:$0xff]
  %v65 = vld [vmem:[%s5 + $0x38] sm:$0xff]
  %v66 = vld [vmem:[%s6] sm:$0xff]
  %v67 = vld [vmem:[%s6 + $0x8] sm:$0xff]
  %v68 = vld [vmem:[%s6 + $0x10] sm:$0xff]
  %v69 = vld [vmem:[%s6 + $0x18] sm:$0xff]
  %v70 = vld [vmem:[%s6 + $0x20] sm:$0xff]
  %v71 = vld [vmem:[%s6 + $0x28] sm:$0xff]
  %v72 = vld [vmem:[%s6 + $0x30] sm:$0xff]
  %v73 = vld [vmem:[%s6 + $0x38] sm:$0xff]
  %v74 = vld [vmem:[%s6 + $0x40] sm:$0xff]
  %v75 = vld [vmem:[%s6 + $0x48] sm:$0xff]
  %v76 = vld [vmem:[%s6 + $0x50] sm:$0xff]
  %v77 = vld [vmem:[%s6 + $0x58] sm:$0xff]
  %v78 = vld [vmem:[%s6 + $0x60] sm:$0xff]
  %v79 = vld [vmem:[%s6 + $0x68] sm:$0xff]
  %v80 = vld [vmem:[%s6 + $0x70] sm:$0xff]
  %v81 = vld [vmem:[%s6 + $0x78] sm:$0xff]
  %v82 = vld [vmem:[%s8] sm:$0xff]
  %v83 = vld [vmem:[%s8 + $0x8] sm:$0xff]
  %v84 = vld [vmem:[%s8 + $0x10] sm:$0xff]
  %v85 = vld [vmem:[%s8 + $0x18] sm:$0xff]
  %v86 = vld [vmem:[%s8 + $0x20] sm:$0xff]
  %v87 = vld [vmem:[%s8 + $0x28] sm:$0xff]
  %v88 = vld [vmem:[%s8 + $0x30] sm:$0xff]
  %v89 = vld [vmem:[%s8 + $0x38] sm:$0xff]
  %v90 = vld [vmem:[%s8 + $0x40] sm:$0xff]
  %v91 = vld [vmem:[%s8 + $0x48] sm:$0xff]
  %v92 = vld [vmem:[%s8 + $0x50] sm:$0xff]
  %v93 = vld [vmem:[%s8 + $0x58] sm:$0xff]
  %v94 = vld [vmem:[%s8 + $0x60] sm:$0xff]
  %v95 = vld [vmem:[%s8 + $0x68] sm:$0xff]
  %v96 = vld [vmem:[%s8 + $0x70] sm:$0xff]
  %v97 = vld [vmem:[%s8 + $0x78] sm:$0xff]
  %v98 = vld [vmem:[%s7] sm:$0xff]
  %v99 = vld [vmem:[%s9] sm:$0xff]
  %v100 = vlaneseq
  %v101 = vshrl.u32 %v100, 7
  %v102 = vsub.s32 0, %v101
  %v103 = vrot.slane %v98, %v102
  %v104 = vlaneseq
  %v105 = vshrl.u32 %v104, 7
  %v106 = vsub.s32 1, %v105
  %v107 = vrot.slane %v98, %v106
  %v108 = vlaneseq
  %v109 = vshrl.u32 %v108, 7
  %v110 = vsub.s32 2, %v109
  %v111 = vrot.slane %v98, %v110
  %v112 = vlaneseq
  %v113 = vshrl.u32 %v112, 7
  %v114 = vsub.s32 3, %v113
  %v115 = vrot.slane %v98, %v114
  %v116 = vlaneseq
  %v117 = vshrl.u32 %v116, 7
  %v118 = vsub.s32 4, %v117
  %v119 = vrot.slane %v98, %v118
  %v120 = vlaneseq
  %v121 = vshrl.u32 %v120, 7
  %v122 = vsub.s32 0, %v121
  %v123 = vrot.slane %v99, %v122
  %v124 = vlaneseq
  %v125 = vshrl.u32 %v124, 7
  %v126 = vsub.s32 2, %v125
  %v127 = vrot.slane %v99, %v126
  %v128 = vlaneseq
  %v129 = vshrl.u32 %v128, 7
  %v130 = vsub.s32 3, %v129
  %v131 = vrot.slane %v99, %v130
  %v132 = vlaneseq
  %v133 = vshrl.u32 %v132, 7
  %v134 = vsub.s32 4, %v133
  %v135 = vrot.slane %v99, %v134
  %v136 = vlaneseq
  %v137 = vshrl.u32 %v136, 7
  %v138 = vsub.s32 1, %v137
  %v139 = vrot.slane %v99, %v138
  %vm140 = vcmask 261120
  %v142 = vsel %vm140, %v41, 0
  %v145 = vsel %vm140, %v42, 0
  %v148 = vsel %vm140, %v43, 0
  %150 = vmatprep.subr.mxu0 0.0
  %151 = vmatpush1.msra.mxu0 %v70
  %152 = vmatprep.subr.mxu0 0.0
  %153 = vmatpush1.msra.mxu0 %v71
  %154 = vmatprep.subr.mxu0 0.0
  %155 = vmatpush1.msra.mxu0 %v72
  %156 = vmatprep.subr.mxu0 0.0
  %157 = vmatpush1.msra.mxu0 %v73
  %158 = vmatprep.subr.mxu0 0.0
  %159 = vmatpush1.msra.mxu0 0.0
  %160 = vmatprep.subr.mxu0 0.0
  %161 = vmatpush1.msra.mxu0 0.0
  %162 = vmatprep.subr.mxu0 0.0
  %163 = vmatpush1.msra.mxu0 0.0
  %164 = vmatprep.subr.mxu0 0.0
  %165 = vmatpush1.msra.mxu0 0.0
  %166 = vmatprep.subr.mxu0 0.0
  %167 = vmatpush1.msra.mxu0 0.0
  %168 = vmatprep.subr.mxu0 0.0
  %169 = vmatpush1.msra.mxu0 0.0
  %170 = vmatprep.subr.mxu0 0.0
  %171 = vmatpush1.msra.mxu0 0.0
  %172 = vmatprep.subr.mxu0 0.0
  %173 = vmatpush1.msra.mxu0 0.0
  %174 = vmatprep.subr.mxu0 0.0
  %175 = vmatpush1.msra.mxu0 0.0
  %176 = vmatprep.subr.mxu0 0.0
  %177 = vmatpush1.msra.mxu0 0.0
  %178 = vmatprep.subr.mxu0 0.0
  %179 = vmatpush1.msra.mxu0 0.0
  %180 = vmatprep.subr.mxu0 0.0
  %181 = vmatpush1.msra.mxu0 0.0
  %182 = vmatprep.subr.mxu0 0.0
  %183 = vmatpush1.msra.mxu0 0.0
  %184 = vmatprep.subr.mxu0 0.0
  %185 = vmatpush1.msra.mxu0 0.0
  %186 = vmatprep.subr.mxu0 0.0
  %187 = vmatpush1.msra.mxu0 0.0
  %188 = vmatprep.subr.mxu0 0.0
  %189 = vmatpush1.msra.mxu0 0.0
  %190 = vmatprep.subr.mxu0 0.0
  %191 = vmatpush1.msra.mxu0 0.0
  %192 = vmatprep.subr.mxu0 0.0
  %193 = vmatpush1.msra.mxu0 0.0
  %194 = vmatprep.subr.mxu0 0.0
  %195 = vmatpush1.msra.mxu0 0.0
  %196 = vmatprep.subr.mxu0 0.0
  %197 = vmatpush1.msra.mxu0 0.0
  %198 = vmatprep.subr.mxu0 0.0
  %199 = vmatpush1.msra.mxu0 0.0
  %200 = vmatprep.subr.mxu0 0.0
  %201 = vmatpush1.msra.mxu0 0.0
  %202 = vmatprep.subr.mxu0 0.0
  %203 = vmatpush1.msra.mxu0 0.0
  %204 = vmatprep.subr.mxu0 0.0
  %205 = vmatpush1.msra.mxu0 0.0
  %206 = vmatprep.subr.mxu0 0.0
  %207 = vmatpush1.msra.mxu0 0.0
  %208 = vmatprep.subr.mxu0 0.0
  %209 = vmatpush1.msra.mxu0 0.0
  %210 = vmatprep.subr.mxu0 0.0
  %211 = vmatpush1.msra.mxu0 0.0
  %212 = vmatprep.subr.mxu0 0.0
  %213 = vmatpush1.msra.mxu0 0.0
  %214 = vmatprep.mubr.f32.mxu0 0.0
  %215 = vmatmul.mubr.f32.gmra.mrb[0].mxu0 %v142
  %v216 = vpop.f32.mrb[0].mxu0
  %v217 = vadd.f32 %v107, %v216
  %v218 = vpop.f32.mrb[0].mxu0
  %219 = vmatprep.mubr.f32.mxu0 0.0
  %220 = vmatmul.mubr.f32.gmra.mrb[0].mxu0 %v145
  %v221 = vpop.f32.mrb[0].mxu0
  %v222 = vadd.f32 %v107, %v221
  %v223 = vpop.f32.mrb[0].mxu0
  %224 = vmatprep.mubr.f32.mxu0 0.0
  %225 = vmatmul.mubr.f32.gmra.mrb[0].mxu0 %v148
  %v226 = vpop.f32.mrb[0].mxu0
  %v227 = vadd.f32 %v107, %v226
  %v228 = vpop.f32.mrb[0].mxu0
  %229 = vdwg.mxu0
  %230 = vst.msk [vmem:[#allocation2] sm:$0xff] %vm140, %v41
  %231 = vst.msk [vmem:[#allocation2 + $0x8] sm:$0xff] %vm140, %v42
  %232 = vst.msk [vmem:[#allocation2 + $0x10] sm:$0xff] %vm140, %v43
  %v233 = vld [vmem:[%s4] sm:$0xff]
  %vm234 = vcmask 195584
  %v236 = vsel %vm234, %v233, 0
  %238 = vmatprep.subr.mxu0 0.0
  %239 = vmatpush1.msra.mxu0 %v41
  %240 = vmatprep.subr.mxu0 0.0
  %241 = vmatpush1.msra.mxu0 %v42
  %242 = vmatprep.subr.mxu0 0.0
  %243 = vmatpush1.msra.mxu0 %v43
  %244 = vmatprep.subr.mxu0 0.0
  %245 = vmatpush1.msra.mxu0 0.0
  %246 = vmatprep.subr.mxu0 0.0
  %247 = vmatpush1.msra.mxu0 0.0
  %248 = vmatprep.subr.mxu0 0.0
  %249 = vmatpush1.msra.mxu0 0.0
  %250 = vmatprep.subr.mxu0 0.0
  %251 = vmatpush1.msra.mxu0 0.0
  %252 = vmatprep.subr.mxu0 0.0
  %253 = vmatpush1.msra.mxu0 0.0
  %254 = vmatprep.subr.mxu0 0.0
  %255 = vmatpush1.msra.mxu0 0.0
  %256 = vmatprep.subr.mxu0 0.0
  %257 = vmatpush1.msra.mxu0 0.0
  %258 = vmatprep.subr.mxu0 0.0
  %259 = vmatpush1.msra.mxu0 0.0
  %260 = vmatprep.subr.mxu0 0.0
  %261 = vmatpush1.msra.mxu0 0.0
  %262 = vmatprep.subr.mxu0 0.0
  %263 = vmatpush1.msra.mxu0 0.0
  %264 = vmatprep.subr.mxu0 0.0
  %265 = vmatpush1.msra.mxu0 0.0
  %266 = vmatprep.subr.mxu0 0.0
  %267 = vmatpush1.msra.mxu0 0.0
  %268 = vmatprep.subr.mxu0 0.0
  %269 = vmatpush1.msra.mxu0 0.0
  %270 = vmatprep.subr.mxu0 0.0
  %271 = vmatpush1.msra.mxu0 0.0
  %272 = vmatprep.subr.mxu0 0.0
  %273 = vmatpush1.msra.mxu0 0.0
  %274 = vmatprep.subr.mxu0 0.0
  %275 = vmatpush1.msra.mxu0 0.0
  %276 = vmatprep.subr.mxu0 0.0
  %277 = vmatpush1.msra.mxu0 0.0
  %278 = vmatprep.subr.mxu0 0.0
  %279 = vmatpush1.msra.mxu0 0.0
  %280 = vmatprep.subr.mxu0 0.0
  %281 = vmatpush1.msra.mxu0 0.0
  %282 = vmatprep.subr.mxu0 0.0
  %283 = vmatpush1.msra.mxu0 0.0
  %284 = vmatprep.subr.mxu0 0.0
  %285 = vmatpush1.msra.mxu0 0.0
  %286 = vmatprep.subr.mxu0 0.0
  %287 = vmatpush1.msra.mxu0 0.0
  %288 = vmatprep.subr.mxu0 0.0
  %289 = vmatpush1.msra.mxu0 0.0
  %290 = vmatprep.subr.mxu0 0.0
  %291 = vmatpush1.msra.mxu0 0.0
  %292 = vmatprep.subr.mxu0 0.0
  %293 = vmatpush1.msra.mxu0 0.0
  %294 = vmatprep.subr.mxu0 0.0
  %295 = vmatpush1.msra.mxu0 0.0
  %296 = vmatprep.subr.mxu0 0.0
  %297 = vmatpush1.msra.mxu0 0.0
  %298 = vmatprep.subr.mxu0 0.0
  %299 = vmatpush1.msra.mxu0 0.0
  %300 = vmatprep.subr.mxu0 0.0
  %301 = vmatpush1.msra.mxu0 0.0
  %302 = vmatprep.mubr.f32.mxu0 0.0
  %303 = vmatmul.mubr.f32.gmra.mrb[0].mxu0 %v236
  %v304 = vpop.f32.mrb[0].mxu0
  %v305 = vadd.f32 0.0, %v304
  %v306 = vpop.f32.mrb[0].mxu0
  %307 = vdwg.mxu0
  %308 = vst.msk [vmem:[#allocation3] sm:$0xff] %vm140, %v305
  loop: start=0, step=1, limit=5
  $region50: #{forward.1} parent=0 // loop_pre_header
    _
  $region51: #{forward.1} parent=0 // loop_header
    %s310 = sphi 0, %s314
    %p311 = scmp.ge.s32.totalorder %s310, 5
  $region52: #{forward.1} parent=0 // loop_header_branch
    %313 = sbr.rel (%p311) target = $region56
  $region53: #{forward.1} parent=0 // loop_body
    %v315 = vld [vmem:[#allocation3] sm:$0xff]
    %vm316 = vcmask 64512
    %v318 = vsel %vm316, %v55, 0
    %v321 = vsel %vm316, %v56, 0
    %v324 = vsel %vm316, %v57, 0
    %326 = vmatprep.subr.mxu0 0.0
    %327 = vmatpush1.msra.mxu0 %v315
    %328 = vmatprep.subr.mxu0 0.0
    %329 = vmatpush1.msra.mxu0 0.0
    %330 = vmatprep.subr.mxu0 0.0
    %331 = vmatpush1.msra.mxu0 0.0
    %332 = vmatprep.subr.mxu0 0.0
    %333 = vmatpush1.msra.mxu0 0.0
    %334 = vmatprep.subr.mxu0 0.0
    %335 = vmatpush1.msra.mxu0 0.0
    %336 = vmatprep.subr.mxu0 0.0
    %337 = vmatpush1.msra.mxu0 0.0
    %338 = vmatprep.subr.mxu0 0.0
    %339 = vmatpush1.msra.mxu0 0.0
    %340 = vmatprep.subr.mxu0 0.0
    %341 = vmatpush1.msra.mxu0 0.0
    %342 = vmatprep.subr.mxu0 0.0
    %343 = vmatpush1.msra.mxu0 0.0
    %344 = vmatprep.subr.mxu0 0.0
    %345 = vmatpush1.msra.mxu0 0.0
    %346 = vmatprep.subr.mxu0 0.0
    %347 = vmatpush1.msra.mxu0 0.0
    %348 = vmatprep.subr.mxu0 0.0
    %349 = vmatpush1.msra.mxu0 0.0
    %350 = vmatprep.subr.mxu0 0.0
    %351 = vmatpush1.msra.mxu0 0.0
    %352 = vmatprep.subr.mxu0 0.0
    %353 = vmatpush1.msra.mxu0 0.0
    %354 = vmatprep.subr.mxu0 0.0
    %355 = vmatpush1.msra.mxu0 0.0
    %356 = vmatprep.subr.mxu0 0.0
    %357 = vmatpush1.msra.mxu0 0.0
    %358 = vmatprep.subr.mxu0 0.0
    %359 = vmatpush1.msra.mxu0 0.0
    %360 = vmatprep.subr.mxu0 0.0
    %361 = vmatpush1.msra.mxu0 0.0
    %362 = vmatprep.subr.mxu0 0.0
    %363 = vmatpush1.msra.mxu0 0.0
    %364 = vmatprep.subr.mxu0 0.0
    %365 = vmatpush1.msra.mxu0 0.0
    %366 = vmatprep.subr.mxu0 0.0
    %367 = vmatpush1.msra.mxu0 0.0
    %368 = vmatprep.subr.mxu0 0.0
    %369 = vmatpush1.msra.mxu0 0.0
    %370 = vmatprep.subr.mxu0 0.0
    %371 = vmatpush1.msra.mxu0 0.0
    %372 = vmatprep.subr.mxu0 0.0
    %373 = vmatpush1.msra.mxu0 0.0
    %374 = vmatprep.subr.mxu0 0.0
    %375 = vmatpush1.msra.mxu0 0.0
    %376 = vmatprep.subr.mxu0 0.0
    %377 = vmatpush1.msra.mxu0 0.0
    %378 = vmatprep.subr.mxu0 0.0
    %379 = vmatpush1.msra.mxu0 0.0
    %380 = vmatprep.subr.mxu0 0.0
    %381 = vmatpush1.msra.mxu0 0.0
    %382 = vmatprep.subr.mxu0 0.0
    %383 = vmatpush1.msra.mxu0 0.0
    %384 = vmatprep.subr.mxu0 0.0
    %385 = vmatpush1.msra.mxu0 0.0
    %386 = vmatprep.subr.mxu0 0.0
    %387 = vmatpush1.msra.mxu0 0.0
    %388 = vmatprep.subr.mxu0 0.0
    %389 = vmatpush1.msra.mxu0 0.0
    %390 = vmatprep.mubr.f32.mxu0 0.0
    %391 = vmatmul.mubr.f32.gmra.mrb[0].mxu0 %v318
    %v392 = vpop.f32.mrb[0].mxu0
    %v393 = vadd.f32 0.0, %v392
    %v394 = vpop.f32.mrb[0].mxu0
    %395 = vmatprep.mubr.f32.mxu0 0.0
    %396 = vmatmul.mubr.f32.gmra.mrb[0].mxu0 %v321
    %v397 = vpop.f32.mrb[0].mxu0
    %v398 = vadd.f32 0.0, %v397
    %v399 = vpop.f32.mrb[0].mxu0
    %400 = vmatprep.mubr.f32.mxu0 0.0
    %401 = vmatmul.mubr.f32.gmra.mrb[0].mxu0 %v324
    %v402 = vpop.f32.mrb[0].mxu0
    %v403 = vadd.f32 0.0, %v402
    %v404 = vpop.f32.mrb[0].mxu0
    %405 = vdwg.mxu0
    %v407 = vsel %vm140, %v393, 0
    %v410 = vsel %vm140, %v398, 0
    %v413 = vsel %vm140, %v403, 0
    %415 = vmatprep.subr.mxu0 0.0
    %416 = vmatpush1.msra.mxu0 %v70
    %417 = vmatprep.subr.mxu0 0.0
    %418 = vmatpush1.msra.mxu0 %v71
    %419 = vmatprep.subr.mxu0 0.0
    %420 = vmatpush1.msra.mxu0 %v72
    %421 = vmatprep.subr.mxu0 0.0
    %422 = vmatpush1.msra.mxu0 %v73
    %423 = vmatprep.subr.mxu0 0.0
    %424 = vmatpush1.msra.mxu0 0.0
    %425 = vmatprep.subr.mxu0 0.0
    %426 = vmatpush1.msra.mxu0 0.0
    %427 = vmatprep.subr.mxu0 0.0
    %428 = vmatpush1.msra.mxu0 0.0
    %429 = vmatprep.subr.mxu0 0.0
    %430 = vmatpush1.msra.mxu0 0.0
    %431 = vmatprep.subr.mxu0 0.0
    %432 = vmatpush1.msra.mxu0 0.0
    %433 = vmatprep.subr.mxu0 0.0
    %434 = vmatpush1.msra.mxu0 0.0
    %435 = vmatprep.subr.mxu0 0.0
    %436 = vmatpush1.msra.mxu0 0.0
    %437 = vmatprep.subr.mxu0 0.0
    %438 = vmatpush1.msra.mxu0 0.0
    %439 = vmatprep.subr.mxu0 0.0
    %440 = vmatpush1.msra.mxu0 0.0
    %441 = vmatprep.subr.mxu0 0.0
    %442 = vmatpush1.msra.mxu0 0.0
    %443 = vmatprep.subr.mxu0 0.0
    %444 = vmatpush1.msra.mxu0 0.0
    %445 = vmatprep.subr.mxu0 0.0
    %446 = vmatpush1.msra.mxu0 0.0
    %447 = vmatprep.subr.mxu0 0.0
    %448 = vmatpush1.msra.mxu0 0.0
    %449 = vmatprep.subr.mxu0 0.0
    %450 = vmatpush1.msra.mxu0 0.0
    %451 = vmatprep.subr.mxu0 0.0
    %452 = vmatpush1.msra.mxu0 0.0
    %453 = vmatprep.subr.mxu0 0.0
    %454 = vmatpush1.msra.mxu0 0.0
    %455 = vmatprep.subr.mxu0 0.0
    %456 = vmatpush1.msra.mxu0 0.0
    %457 = vmatprep.subr.mxu0 0.0
    %458 = vmatpush1.msra.mxu0 0.0
    %459 = vmatprep.subr.mxu0 0.0
    %460 = vmatpush1.msra.mxu0 0.0
    %461 = vmatprep.subr.mxu0 0.0
    %462 = vmatpush1.msra.mxu0 0.0
    %463 = vmatprep.subr.mxu0 0.0
    %464 = vmatpush1.msra.mxu0 0.0
    %465 = vmatprep.subr.mxu0 0.0
    %466 = vmatpush1.msra.mxu0 0.0
    %467 = vmatprep.subr.mxu0 0.0
    %468 = vmatpush1.msra.mxu0 0.0
    %469 = vmatprep.subr.mxu0 0.0
    %470 = vmatpush1.msra.mxu0 0.0
    %471 = vmatprep.subr.mxu0 0.0
    %472 = vmatpush1.msra.mxu0 0.0
    %473 = vmatprep.subr.mxu0 0.0
    %474 = vmatpush1.msra.mxu0 0.0
    %475 = vmatprep.subr.mxu0 0.0
    %476 = vmatpush1.msra.mxu0 0.0
    %477 = vmatprep.subr.mxu0 0.0
    %478 = vmatpush1.msra.mxu0 0.0
    %479 = vmatprep.mubr.f32.mxu0 0.0
    %480 = vmatmul.mubr.f32.gmra.mrb[0].mxu0 %v407
    %v481 = vpop.f32.mrb[0].mxu0
    %v482 = vadd.f32 %v107, %v481
    %v483 = vpop.f32.mrb[0].mxu0
    %484 = vmatprep.mubr.f32.mxu0 0.0
    %485 = vmatmul.mubr.f32.gmra.mrb[0].mxu0 %v410
    %v486 = vpop.f32.mrb[0].mxu0
    %v487 = vadd.f32 %v107, %v486
    %v488 = vpop.f32.mrb[0].mxu0
    %489 = vmatprep.mubr.f32.mxu0 0.0
    %490 = vmatmul.mubr.f32.gmra.mrb[0].mxu0 %v413
    %v491 = vpop.f32.mrb[0].mxu0
    %v492 = vadd.f32 %v107, %v491
    %v493 = vpop.f32.mrb[0].mxu0
    %494 = vdwg.mxu0
    %v495 = vld [vmem:[#allocation2] sm:$0xff]
    %v497 = vsel %vm140, %v495, 0
    %499 = vmatprep.subr.mxu0 0.0
    %500 = vmatpush1.msra.mxu0 %v66
    %501 = vmatprep.subr.mxu0 0.0
    %502 = vmatpush1.msra.mxu0 %v67
    %503 = vmatprep.subr.mxu0 0.0
    %504 = vmatpush1.msra.mxu0 %v68
    %505 = vmatprep.subr.mxu0 0.0
    %506 = vmatpush1.msra.mxu0 %v69
    %507 = vmatprep.subr.mxu0 0.0
    %508 = vmatpush1.msra.mxu0 0.0
    %509 = vmatprep.subr.mxu0 0.0
    %510 = vmatpush1.msra.mxu0 0.0
    %511 = vmatprep.subr.mxu0 0.0
    %512 = vmatpush1.msra.mxu0 0.0
    %513 = vmatprep.subr.mxu0 0.0
    %514 = vmatpush1.msra.mxu0 0.0
    %515 = vmatprep.subr.mxu0 0.0
    %516 = vmatpush1.msra.mxu0 0.0
    %517 = vmatprep.subr.mxu0 0.0
    %518 = vmatpush1.msra.mxu0 0.0
    %519 = vmatprep.subr.mxu0 0.0
    %520 = vmatpush1.msra.mxu0 0.0
    %521 = vmatprep.subr.mxu0 0.0
    %522 = vmatpush1.msra.mxu0 0.0
    %523 = vmatprep.subr.mxu0 0.0
    %524 = vmatpush1.msra.mxu0 0.0
    %525 = vmatprep.subr.mxu0 0.0
    %526 = vmatpush1.msra.mxu0 0.0
    %527 = vmatprep.subr.mxu0 0.0
    %528 = vmatpush1.msra.mxu0 0.0
    %529 = vmatprep.subr.mxu0 0.0
    %530 = vmatpush1.msra.mxu0 0.0
    %531 = vmatprep.subr.mxu0 0.0
    %532 = vmatpush1.msra.mxu0 0.0
    %533 = vmatprep.subr.mxu0 0.0
    %534 = vmatpush1.msra.mxu0 0.0
    %535 = vmatprep.subr.mxu0 0.0
    %536 = vmatpush1.msra.mxu0 0.0
    %537 = vmatprep.subr.mxu0 0.0
    %538 = vmatpush1.msra.mxu0 0.0
    %539 = vmatprep.subr.mxu0 0.0
    %540 = vmatpush1.msra.mxu0 0.0
    %541 = vmatprep.subr.mxu0 0.0
    %542 = vmatpush1.msra.mxu0 0.0
    %543 = vmatprep.subr.mxu0 0.0
    %544 = vmatpush1.msra.mxu0 0.0
    %545 = vmatprep.subr.mxu0 0.0
    %546 = vmatpush1.msra.mxu0 0.0
    %547 = vmatprep.subr.mxu0 0.0
    %548 = vmatpush1.msra.mxu0 0.0
    %549 = vmatprep.subr.mxu0 0.0
    %550 = vmatpush1.msra.mxu0 0.0
    %551 = vmatprep.subr.mxu0 0.0
    %552 = vmatpush1.msra.mxu0 0.0
    %553 = vmatprep.subr.mxu0 0.0
    %554 = vmatpush1.msra.mxu0 0.0
    %555 = vmatprep.subr.mxu0 0.0
    %556 = vmatpush1.msra.mxu0 0.0
    %557 = vmatprep.subr.mxu0 0.0
    %558 = vmatpush1.msra.mxu0 0.0
    %559 = vmatprep.subr.mxu0 0.0
    %560 = vmatpush1.msra.mxu0 0.0
    %561 = vmatprep.subr.mxu0 0.0
    %562 = vmatpush1.msra.mxu0 0.0
    %563 = vmatprep.mubr.f32.mxu0 0.0
    %564 = vmatmul.mubr.f32.gmra.mrb[0].mxu0 %v497
    %v565 = vpop.f32.mrb[0].mxu0
    %v566 = vadd.f32 %v103, %v565
    %v567 = vpop.f32.mrb[0].mxu0
    %568 = vdwg.mxu0
    %569 = vmatprep.subr.mxu0 0.0
    %570 = vmatpush1.msra.mxu0 %v70
    %571 = vmatprep.subr.mxu0 0.0
    %572 = vmatpush1.msra.mxu0 %v71
    %573 = vmatprep.subr.mxu0 0.0
    %574 = vmatpush1.msra.mxu0 %v72
    %575 = vmatprep.subr.mxu0 0.0
    %576 = vmatpush1.msra.mxu0 %v73
    %577 = vmatprep.subr.mxu0 0.0
    %578 = vmatpush1.msra.mxu0 0.0
    %579 = vmatprep.subr.mxu0 0.0
    %580 = vmatpush1.msra.mxu0 0.0
    %581 = vmatprep.subr.mxu0 0.0
    %582 = vmatpush1.msra.mxu0 0.0
    %583 = vmatprep.subr.mxu0 0.0
    %584 = vmatpush1.msra.mxu0 0.0
    %585 = vmatprep.subr.mxu0 0.0
    %586 = vmatpush1.msra.mxu0 0.0
    %587 = vmatprep.subr.mxu0 0.0
    %588 = vmatpush1.msra.mxu0 0.0
    %589 = vmatprep.subr.mxu0 0.0
    %590 = vmatpush1.msra.mxu0 0.0
    %591 = vmatprep.subr.mxu0 0.0
    %592 = vmatpush1.msra.mxu0 0.0
    %593 = vmatprep.subr.mxu0 0.0
    %594 = vmatpush1.msra.mxu0 0.0
    %595 = vmatprep.subr.mxu0 0.0
    %596 = vmatpush1.msra.mxu0 0.0
    %597 = vmatprep.subr.mxu0 0.0
    %598 = vmatpush1.msra.mxu0 0.0
    %599 = vmatprep.subr.mxu0 0.0
    %600 = vmatpush1.msra.mxu0 0.0
    %601 = vmatprep.subr.mxu0 0.0
    %602 = vmatpush1.msra.mxu0 0.0
    %603 = vmatprep.subr.mxu0 0.0
    %604 = vmatpush1.msra.mxu0 0.0
    %605 = vmatprep.subr.mxu0 0.0
    %606 = vmatpush1.msra.mxu0 0.0
    %607 = vmatprep.subr.mxu0 0.0
    %608 = vmatpush1.msra.mxu0 0.0
    %609 = vmatprep.subr.mxu0 0.0
    %610 = vmatpush1.msra.mxu0 0.0
    %611 = vmatprep.subr.mxu0 0.0
    %612 = vmatpush1.msra.mxu0 0.0
    %613 = vmatprep.subr.mxu0 0.0
    %614 = vmatpush1.msra.mxu0 0.0
    %615 = vmatprep.subr.mxu0 0.0
    %616 = vmatpush1.msra.mxu0 0.0
    %617 = vmatprep.subr.mxu0 0.0
    %618 = vmatpush1.msra.mxu0 0.0
    %619 = vmatprep.subr.mxu0 0.0
    %620 = vmatpush1.msra.mxu0 0.0
    %621 = vmatprep.subr.mxu0 0.0
    %622 = vmatpush1.msra.mxu0 0.0
    %623 = vmatprep.subr.mxu0 0.0
    %624 = vmatpush1.msra.mxu0 0.0
    %625 = vmatprep.subr.mxu0 0.0
    %626 = vmatpush1.msra.mxu0 0.0
    %627 = vmatprep.subr.mxu0 0.0
    %628 = vmatpush1.msra.mxu0 0.0
    %629 = vmatprep.subr.mxu0 0.0
    %630 = vmatpush1.msra.mxu0 0.0
    %631 = vmatprep.subr.mxu0 0.0
    %632 = vmatpush1.msra.mxu0 0.0
    %633 = vmatprep.mubr.f32.mxu0 0.0
    %634 = vmatmul.mubr.f32.gmra.mrb[0].mxu0 %v497
    %v635 = vpop.f32.mrb[0].mxu0
    %v636 = vadd.f32 %v107, %v635
    %v637 = vpop.f32.mrb[0].mxu0
    %638 = vdwg.mxu0
    %v639 = vmul.f32 %v566, %v107
    %vm640 = vcmask 523264
    %v642 = vsel %vm640, %v639, 0
    %644 = vmatprep.subr.mxu0 0.0
    %645 = vmatpush1.msra.mxu0 %v58
    %646 = vmatprep.subr.mxu0 0.0
    %647 = vmatpush1.msra.mxu0 %v59
    %648 = vmatprep.subr.mxu0 0.0
    %649 = vmatpush1.msra.mxu0 %v60
    %650 = vmatprep.subr.mxu0 0.0
    %651 = vmatpush1.msra.mxu0 %v61
    %652 = vmatprep.subr.mxu0 0.0
    %653 = vmatpush1.msra.mxu0 %v62
    %654 = vmatprep.subr.mxu0 0.0
    %655 = vmatpush1.msra.mxu0 %v63
    %656 = vmatprep.subr.mxu0 0.0
    %657 = vmatpush1.msra.mxu0 %v64
    %658 = vmatprep.subr.mxu0 0.0
    %659 = vmatpush1.msra.mxu0 %v65
    %660 = vmatprep.subr.mxu0 0.0
    %661 = vmatpush1.msra.mxu0 0.0
    %662 = vmatprep.subr.mxu0 0.0
    %663 = vmatpush1.msra.mxu0 0.0
    %664 = vmatprep.subr.mxu0 0.0
    %665 = vmatpush1.msra.mxu0 0.0
    %666 = vmatprep.subr.mxu0 0.0
    %667 = vmatpush1.msra.mxu0 0.0
    %668 = vmatprep.subr.mxu0 0.0
    %669 = vmatpush1.msra.mxu0 0.0
    %670 = vmatprep.subr.mxu0 0.0
    %671 = vmatpush1.msra.mxu0 0.0
    %672 = vmatprep.subr.mxu0 0.0
    %673 = vmatpush1.msra.mxu0 0.0
    %674 = vmatprep.subr.mxu0 0.0
    %675 = vmatpush1.msra.mxu0 0.0
    %676 = vmatprep.subr.mxu0 0.0
    %677 = vmatpush1.msra.mxu0 0.0
    %678 = vmatprep.subr.mxu0 0.0
    %679 = vmatpush1.msra.mxu0 0.0
    %680 = vmatprep.subr.mxu0 0.0
    %681 = vmatpush1.msra.mxu0 0.0
    %682 = vmatprep.subr.mxu0 0.0
    %683 = vmatpush1.msra.mxu0 0.0
    %684 = vmatprep.subr.mxu0 0.0
    %685 = vmatpush1.msra.mxu0 0.0
    %686 = vmatprep.subr.mxu0 0.0
    %687 = vmatpush1.msra.mxu0 0.0
    %688 = vmatprep.subr.mxu0 0.0
    %689 = vmatpush1.msra.mxu0 0.0
    %690 = vmatprep.subr.mxu0 0.0
    %691 = vmatpush1.msra.mxu0 0.0
    %692 = vmatprep.subr.mxu0 0.0
    %693 = vmatpush1.msra.mxu0 0.0
    %694 = vmatprep.subr.mxu0 0.0
    %695 = vmatpush1.msra.mxu0 0.0
    %696 = vmatprep.subr.mxu0 0.0
    %697 = vmatpush1.msra.mxu0 0.0
    %698 = vmatprep.subr.mxu0 0.0
    %699 = vmatpush1.msra.mxu0 0.0
    %700 = vmatprep.subr.mxu0 0.0
    %701 = vmatpush1.msra.mxu0 0.0
    %702 = vmatprep.subr.mxu0 0.0
    %703 = vmatpush1.msra.mxu0 0.0
    %704 = vmatprep.subr.mxu0 0.0
    %705 = vmatpush1.msra.mxu0 0.0
    %706 = vmatprep.subr.mxu0 0.0
    %707 = vmatpush1.msra.mxu0 0.0
    %708 = vmatprep.mubr.f32.mxu0 0.0
    %709 = vmatmul.mubr.f32.gmra.mrb[0].mxu0 %v642
    %v710 = vpop.f32.mrb[0].mxu0
    %v711 = vadd.f32 0.0, %v710
    %v712 = vpop.f32.mrb[0].mxu0
    %713 = vdwg.mxu0
    %v714 = vmul.f32 %v711, 0.5
    %v715 = vmul.f32 %v566, %v636
    %v717 = vsel %vm640, %v715, 0
    %719 = vmatprep.subr.mxu0 0.0
    %720 = vmatpush1.msra.mxu0 %v58
    %721 = vmatprep.subr.mxu0 0.0
    %722 = vmatpush1.msra.mxu0 %v59
    %723 = vmatprep.subr.mxu0 0.0
    %724 = vmatpush1.msra.mxu0 %v60
    %725 = vmatprep.subr.mxu0 0.0
    %726 = vmatpush1.msra.mxu0 %v61
    %727 = vmatprep.subr.mxu0 0.0
    %728 = vmatpush1.msra.mxu0 %v62
    %729 = vmatprep.subr.mxu0 0.0
    %730 = vmatpush1.msra.mxu0 %v63
    %731 = vmatprep.subr.mxu0 0.0
    %732 = vmatpush1.msra.mxu0 %v64
    %733 = vmatprep.subr.mxu0 0.0
    %734 = vmatpush1.msra.mxu0 %v65
    %735 = vmatprep.subr.mxu0 0.0
    %736 = vmatpush1.msra.mxu0 0.0
    %737 = vmatprep.subr.mxu0 0.0
    %738 = vmatpush1.msra.mxu0 0.0
    %739 = vmatprep.subr.mxu0 0.0
    %740 = vmatpush1.msra.mxu0 0.0
    %741 = vmatprep.subr.mxu0 0.0
    %742 = vmatpush1.msra.mxu0 0.0
    %743 = vmatprep.subr.mxu0 0.0
    %744 = vmatpush1.msra.mxu0 0.0
    %745 = vmatprep.subr.mxu0 0.0
    %746 = vmatpush1.msra.mxu0 0.0
    %747 = vmatprep.subr.mxu0 0.0
    %748 = vmatpush1.msra.mxu0 0.0
    %749 = vmatprep.subr.mxu0 0.0
    %750 = vmatpush1.msra.mxu0 0.0
    %751 = vmatprep.subr.mxu0 0.0
    %752 = vmatpush1.msra.mxu0 0.0
    %753 = vmatprep.subr.mxu0 0.0
    %754 = vmatpush1.msra.mxu0 0.0
    %755 = vmatprep.subr.mxu0 0.0
    %756 = vmatpush1.msra.mxu0 0.0
    %757 = vmatprep.subr.mxu0 0.0
    %758 = vmatpush1.msra.mxu0 0.0
    %759 = vmatprep.subr.mxu0 0.0
    %760 = vmatpush1.msra.mxu0 0.0
    %761 = vmatprep.subr.mxu0 0.0
    %762 = vmatpush1.msra.mxu0 0.0
    %763 = vmatprep.subr.mxu0 0.0
    %764 = vmatpush1.msra.mxu0 0.0
    %765 = vmatprep.subr.mxu0 0.0
    %766 = vmatpush1.msra.mxu0 0.0
    %767 = vmatprep.subr.mxu0 0.0
    %768 = vmatpush1.msra.mxu0 0.0
    %769 = vmatprep.subr.mxu0 0.0
    %770 = vmatpush1.msra.mxu0 0.0
    %771 = vmatprep.subr.mxu0 0.0
    %772 = vmatpush1.msra.mxu0 0.0
    %773 = vmatprep.subr.mxu0 0.0
    %774 = vmatpush1.msra.mxu0 0.0
    %775 = vmatprep.subr.mxu0 0.0
    %776 = vmatpush1.msra.mxu0 0.0
    %777 = vmatprep.subr.mxu0 0.0
    %778 = vmatpush1.msra.mxu0 0.0
    %779 = vmatprep.subr.mxu0 0.0
    %780 = vmatpush1.msra.mxu0 0.0
    %781 = vmatprep.subr.mxu0 0.0
    %782 = vmatpush1.msra.mxu0 0.0
    %783 = vmatprep.mubr.f32.mxu0 0.0
    %784 = vmatmul.mubr.f32.gmra.mrb[0].mxu0 %v717
    %v785 = vpop.f32.mrb[0].mxu0
    %v786 = vadd.f32 0.0, %v785
    %v787 = vpop.f32.mrb[0].mxu0
    %788 = vdwg.mxu0
    %v789 = vmul.f32 %v786, 0.5
    %v790 = vmul.f32 %v566, %v217
    %v792 = vsel %vm640, %v790, 0
    %794 = vmatprep.subr.mxu0 0.0
    %795 = vmatpush1.msra.mxu0 %v58
    %796 = vmatprep.subr.mxu0 0.0
    %797 = vmatpush1.msra.mxu0 %v59
    %798 = vmatprep.subr.mxu0 0.0
    %799 = vmatpush1.msra.mxu0 %v60
    %800 = vmatprep.subr.mxu0 0.0
    %801 = vmatpush1.msra.mxu0 %v61
    %802 = vmatprep.subr.mxu0 0.0
    %803 = vmatpush1.msra.mxu0 %v62
    %804 = vmatprep.subr.mxu0 0.0
    %805 = vmatpush1.msra.mxu0 %v63
    %806 = vmatprep.subr.mxu0 0.0
    %807 = vmatpush1.msra.mxu0 %v64
    %808 = vmatprep.subr.mxu0 0.0
    %809 = vmatpush1.msra.mxu0 %v65
    %810 = vmatprep.subr.mxu0 0.0
    %811 = vmatpush1.msra.mxu0 0.0
    %812 = vmatprep.subr.mxu0 0.0
    %813 = vmatpush1.msra.mxu0 0.0
    %814 = vmatprep.subr.mxu0 0.0
    %815 = vmatpush1.msra.mxu0 0.0
    %816 = vmatprep.subr.mxu0 0.0
    %817 = vmatpush1.msra.mxu0 0.0
    %818 = vmatprep.subr.mxu0 0.0
    %819 = vmatpush1.msra.mxu0 0.0
    %820 = vmatprep.subr.mxu0 0.0
    %821 = vmatpush1.msra.mxu0 0.0
    %822 = vmatprep.subr.mxu0 0.0
    %823 = vmatpush1.msra.mxu0 0.0
    %824 = vmatprep.subr.mxu0 0.0
    %825 = vmatpush1.msra.mxu0 0.0
    %826 = vmatprep.subr.mxu0 0.0
    %827 = vmatpush1.msra.mxu0 0.0
    %828 = vmatprep.subr.mxu0 0.0
    %829 = vmatpush1.msra.mxu0 0.0
    %830 = vmatprep.subr.mxu0 0.0
    %831 = vmatpush1.msra.mxu0 0.0
    %832 = vmatprep.subr.mxu0 0.0
    %833 = vmatpush1.msra.mxu0 0.0
    %834 = vmatprep.subr.mxu0 0.0
    %835 = vmatpush1.msra.mxu0 0.0
    %836 = vmatprep.subr.mxu0 0.0
    %837 = vmatpush1.msra.mxu0 0.0
    %838 = vmatprep.subr.mxu0 0.0
    %839 = vmatpush1.msra.mxu0 0.0
    %840 = vmatprep.subr.mxu0 0.0
    %841 = vmatpush1.msra.mxu0 0.0
    %842 = vmatprep.subr.mxu0 0.0
    %843 = vmatpush1.msra.mxu0 0.0
    %844 = vmatprep.subr.mxu0 0.0
    %845 = vmatpush1.msra.mxu0 0.0
    %846 = vmatprep.subr.mxu0 0.0
    %847 = vmatpush1.msra.mxu0 0.0
    %848 = vmatprep.subr.mxu0 0.0
    %849 = vmatpush1.msra.mxu0 0.0
    %850 = vmatprep.subr.mxu0 0.0
    %851 = vmatpush1.msra.mxu0 0.0
    %852 = vmatprep.subr.mxu0 0.0
    %853 = vmatpush1.msra.mxu0 0.0
    %854 = vmatprep.subr.mxu0 0.0
    %855 = vmatpush1.msra.mxu0 0.0
    %856 = vmatprep.subr.mxu0 0.0
    %857 = vmatpush1.msra.mxu0 0.0
    %858 = vmatprep.mubr.f32.mxu0 0.0
    %859 = vmatmul.mubr.f32.gmra.mrb[0].mxu0 %v792
    %v860 = vpop.f32.mrb[0].mxu0
    %v861 = vadd.f32 0.0, %v860
    %v862 = vpop.f32.mrb[0].mxu0
    %863 = vdwg.mxu0
    %v864 = vmul.f32 %v861, 0.5
    %v865 = vmul.f32 %v566, %v482
    %v867 = vsel %vm640, %v865, 0
    %869 = vmatprep.subr.mxu0 0.0
    %870 = vmatpush1.msra.mxu0 %v58
    %871 = vmatprep.subr.mxu0 0.0
    %872 = vmatpush1.msra.mxu0 %v59
    %873 = vmatprep.subr.mxu0 0.0
    %874 = vmatpush1.msra.mxu0 %v60
    %875 = vmatprep.subr.mxu0 0.0
    %876 = vmatpush1.msra.mxu0 %v61
    %877 = vmatprep.subr.mxu0 0.0
    %878 = vmatpush1.msra.mxu0 %v62
    %879 = vmatprep.subr.mxu0 0.0
    %880 = vmatpush1.msra.mxu0 %v63
    %881 = vmatprep.subr.mxu0 0.0
    %882 = vmatpush1.msra.mxu0 %v64
    %883 = vmatprep.subr.mxu0 0.0
    %884 = vmatpush1.msra.mxu0 %v65
    %885 = vmatprep.subr.mxu0 0.0
    %886 = vmatpush1.msra.mxu0 0.0
    %887 = vmatprep.subr.mxu0 0.0
    %888 = vmatpush1.msra.mxu0 0.0
    %889 = vmatprep.subr.mxu0 0.0
    %890 = vmatpush1.msra.mxu0 0.0
    %891 = vmatprep.subr.mxu0 0.0
    %892 = vmatpush1.msra.mxu0 0.0
    %893 = vmatprep.subr.mxu0 0.0
    %894 = vmatpush1.msra.mxu0 0.0
    %895 = vmatprep.subr.mxu0 0.0
    %896 = vmatpush1.msra.mxu0 0.0
    %897 = vmatprep.subr.mxu0 0.0
    %898 = vmatpush1.msra.mxu0 0.0
    %899 = vmatprep.subr.mxu0 0.0
    %900 = vmatpush1.msra.mxu0 0.0
    %901 = vmatprep.subr.mxu0 0.0
    %902 = vmatpush1.msra.mxu0 0.0
    %903 = vmatprep.subr.mxu0 0.0
    %904 = vmatpush1.msra.mxu0 0.0
    %905 = vmatprep.subr.mxu0 0.0
    %906 = vmatpush1.msra.mxu0 0.0
    %907 = vmatprep.subr.mxu0 0.0
    %908 = vmatpush1.msra.mxu0 0.0
    %909 = vmatprep.subr.mxu0 0.0
    %910 = vmatpush1.msra.mxu0 0.0
    %911 = vmatprep.subr.mxu0 0.0
    %912 = vmatpush1.msra.mxu0 0.0
    %913 = vmatprep.subr.mxu0 0.0
    %914 = vmatpush1.msra.mxu0 0.0
    %915 = vmatprep.subr.mxu0 0.0
    %916 = vmatpush1.msra.mxu0 0.0
    %917 = vmatprep.subr.mxu0 0.0
    %918 = vmatpush1.msra.mxu0 0.0
    %919 = vmatprep.subr.mxu0 0.0
    %920 = vmatpush1.msra.mxu0 0.0
    %921 = vmatprep.subr.mxu0 0.0
    %922 = vmatpush1.msra.mxu0 0.0
    %923 = vmatprep.subr.mxu0 0.0
    %924 = vmatpush1.msra.mxu0 0.0
    %925 = vmatprep.subr.mxu0 0.0
    %926 = vmatpush1.msra.mxu0 0.0
    %927 = vmatprep.subr.mxu0 0.0
    %928 = vmatpush1.msra.mxu0 0.0
    %929 = vmatprep.subr.mxu0 0.0
    %930 = vmatpush1.msra.mxu0 0.0
    %931 = vmatprep.subr.mxu0 0.0
    %932 = vmatpush1.msra.mxu0 0.0
    %933 = vmatprep.mubr.f32.mxu0 0.0
    %934 = vmatmul.mubr.f32.gmra.mrb[0].mxu0 %v867
    %v935 = vpop.f32.mrb[0].mxu0
    %v936 = vadd.f32 0.0, %v935
    %v937 = vpop.f32.mrb[0].mxu0
    %938 = vdwg.mxu0
    %v939 = vmul.f32 %v936, 0.5
    %v940 = vmax.f32 %v714, %v789
    %v941 = vmax.f32 %v940, %v864
    %v942 = vmax.f32 %v941, %v939
    %v943 = vsub.f32 %v714, %v942
    %v944 = vmul.f32 %v943, 1.442695
    %v945 = vpow.pop %v944
    %v946 = vsub.f32 %v789, %v942
    %v947 = vmul.f32 %v946, 1.442695
    %v948 = vpow.pop %v947
    %v949 = vsub.f32 %v864, %v942
    %v950 = vmul.f32 %v949, 1.442695
    %v951 = vpow.pop %v950
    %v952 = vsub.f32 %v939, %v942
    %v953 = vmul.f32 %v952, 1.442695
    %v954 = vpow.pop %v953
    %v955 = vmul.f32 %v945, %v107
    %v956 = vadd.f32 %v945, %v945
    %v957 = vadd.f32 %v955, %v955
    %v958 = vadd.f32 %v956, %v948
    %v959 = vmul.f32 %v948, %v636
    %v960 = vadd.f32 %v957, %v959
    %v961 = vadd.f32 %v958, %v951
    %v962 = vmul.f32 %v951, %v217
    %v963 = vadd.f32 %v960, %v962
    %v964 = vadd.f32 %v961, %v954
    %v965 = vmul.f32 %v954, %v482
    %v966 = vadd.f32 %v963, %v965
    %v967 = vrcp.pop %v964
    %v968 = vmul.f32 %v966, %v967
    %v970 = vsel %vm640, %v968, 0
    %972 = vmatprep.subr.mxu0 0.0
    %973 = vmatpush1.msra.mxu0 %v74
    %974 = vmatprep.subr.mxu0 0.0
    %975 = vmatpush1.msra.mxu0 %v75
    %976 = vmatprep.subr.mxu0 0.0
    %977 = vmatpush1.msra.mxu0 %v76
    %978 = vmatprep.subr.mxu0 0.0
    %979 = vmatpush1.msra.mxu0 %v77
    %980 = vmatprep.subr.mxu0 0.0
    %981 = vmatpush1.msra.mxu0 %v78
    %982 = vmatprep.subr.mxu0 0.0
    %983 = vmatpush1.msra.mxu0 %v79
    %984 = vmatprep.subr.mxu0 0.0
    %985 = vmatpush1.msra.mxu0 %v80
    %986 = vmatprep.subr.mxu0 0.0
    %987 = vmatpush1.msra.mxu0 %v81
    %988 = vmatprep.subr.mxu0 0.0
    %989 = vmatpush1.msra.mxu0 0.0
    %990 = vmatprep.subr.mxu0 0.0
    %991 = vmatpush1.msra.mxu0 0.0
    %992 = vmatprep.subr.mxu0 0.0
    %993 = vmatpush1.msra.mxu0 0.0
    %994 = vmatprep.subr.mxu0 0.0
    %995 = vmatpush1.msra.mxu0 0.0
    %996 = vmatprep.subr.mxu0 0.0
    %997 = vmatpush1.msra.mxu0 0.0
    %998 = vmatprep.subr.mxu0 0.0
    %999 = vmatpush1.msra.mxu0 0.0
    %1000 = vmatprep.subr.mxu0 0.0
    %1001 = vmatpush1.msra.mxu0 0.0
    %1002 = vmatprep.subr.mxu0 0.0
    %1003 = vmatpush1.msra.mxu0 0.0
    %1004 = vmatprep.subr.mxu0 0.0
    %1005 = vmatpush1.msra.mxu0 0.0
    %1006 = vmatprep.subr.mxu0 0.0
    %1007 = vmatpush1.msra.mxu0 0.0
    %1008 = vmatprep.subr.mxu0 0.0
    %1009 = vmatpush1.msra.mxu0 0.0
    %1010 = vmatprep.subr.mxu0 0.0
    %1011 = vmatpush1.msra.mxu0 0.0
    %1012 = vmatprep.subr.mxu0 0.0
    %1013 = vmatpush1.msra.mxu0 0.0
    %1014 = vmatprep.subr.mxu0 0.0
    %1015 = vmatpush1.msra.mxu0 0.0
    %1016 = vmatprep.subr.mxu0 0.0
    %1017 = vmatpush1.msra.mxu0 0.0
    %1018 = vmatprep.subr.mxu0 0.0
    %1019 = vmatpush1.msra.mxu0 0.0
    %1020 = vmatprep.subr.mxu0 0.0
    %1021 = vmatpush1.msra.mxu0 0.0
    %1022 = vmatprep.subr.mxu0 0.0
    %1023 = vmatpush1.msra.mxu0 0.0
    %1024 = vmatprep.subr.mxu0 0.0
    %1025 = vmatpush1.msra.mxu0 0.0
    %1026 = vmatprep.subr.mxu0 0.0
    %1027 = vmatpush1.msra.mxu0 0.0
    %1028 = vmatprep.subr.mxu0 0.0
    %1029 = vmatpush1.msra.mxu0 0.0
    %1030 = vmatprep.subr.mxu0 0.0
    %1031 = vmatpush1.msra.mxu0 0.0
    %1032 = vmatprep.subr.mxu0 0.0
    %1033 = vmatpush1.msra.mxu0 0.0
    %1034 = vmatprep.subr.mxu0 0.0
    %1035 = vmatpush1.msra.mxu0 0.0
    %1036 = vmatprep.mubr.f32.mxu0 0.0
    %1037 = vmatmul.mubr.f32.gmra.mrb[0].mxu0 %v970
    %v1038 = vpop.f32.mrb[0].mxu0
    %v1039 = vadd.f32 0.0, %v1038
    %v1040 = vpop.f32.mrb[0].mxu0
    %1041 = vdwg.mxu0
    %v1042 = vadd.f32 %v1039, %v111
    %v1043 = vmax.f32 %v1042, 0.0
    %v1044 = vsel %vm140, %v1043, 0.0
    %1045 = vadd.xlane.f32.xlu0 %v1044
    %v1046 = vpop.xlane.xlu0 %1045
    %v1047 = vrcp.pop 32.0
    %v1048 = vmul.f32 %v1046, %v1047
    %v1049 = vsub.f32 %v1043, %v1048
    %v1050 = vmul.f32 %v1049, %v1049
    %v1051 = vsel %vm140, %v1050, 0.0
    %1052 = vadd.xlane.f32.xlu0 %v1051
    %v1053 = vpop.xlane.xlu0 %1052
    %v1054 = vmul.f32 %v1053, 0.032258064
    %v1055 = vrsqrt.pop %v1054
    %v1056 = vmul.f32 %v1054, %v1055
    %vm1057 = vcmp.eq.f32.partialorder %v1054, inf
    %v1058 = vsel %vm1057, %v1054, %v1056
    %vm1059 = vcmp.eq.f32.partialorder %v1054, 0.0
    %v1060 = vand.u32 %v1054, 2147483648
    %v1061 = vsel %vm1059, %v1060, %v1058
    %v1062 = vadd.f32 %v1061, 1e-06
    %v1063 = vrcp.pop %v1062
    %v1064 = vmul.f32 %v115, %v1049
    %v1065 = vmul.f32 %v1064, %v1063
    %v1066 = vadd.f32 %v1065, %v119
    %1067 = vst.msk [vmem:[#allocation2] sm:$0xff] %vm140, %v1066
    %v1068 = vld [vmem:[#allocation2 + $0x8] sm:$0xff]
    %v1070 = vsel %vm140, %v1068, 0
    %1072 = vmatprep.subr.mxu0 0.0
    %1073 = vmatpush1.msra.mxu0 %v66
    %1074 = vmatprep.subr.mxu0 0.0
    %1075 = vmatpush1.msra.mxu0 %v67
    %1076 = vmatprep.subr.mxu0 0.0
    %1077 = vmatpush1.msra.mxu0 %v68
    %1078 = vmatprep.subr.mxu0 0.0
    %1079 = vmatpush1.msra.mxu0 %v69
    %1080 = vmatprep.subr.mxu0 0.0
    %1081 = vmatpush1.msra.mxu0 0.0
    %1082 = vmatprep.subr.mxu0 0.0
    %1083 = vmatpush1.msra.mxu0 0.0
    %1084 = vmatprep.subr.mxu0 0.0
    %1085 = vmatpush1.msra.mxu0 0.0
    %1086 = vmatprep.subr.mxu0 0.0
    %1087 = vmatpush1.msra.mxu0 0.0
    %1088 = vmatprep.subr.mxu0 0.0
    %1089 = vmatpush1.msra.mxu0 0.0
    %1090 = vmatprep.subr.mxu0 0.0
    %1091 = vmatpush1.msra.mxu0 0.0
    %1092 = vmatprep.subr.mxu0 0.0
    %1093 = vmatpush1.msra.mxu0 0.0
    %1094 = vmatprep.subr.mxu0 0.0
    %1095 = vmatpush1.msra.mxu0 0.0
    %1096 = vmatprep.subr.mxu0 0.0
    %1097 = vmatpush1.msra.mxu0 0.0
    %1098 = vmatprep.subr.mxu0 0.0
    %1099 = vmatpush1.msra.mxu0 0.0
    %1100 = vmatprep.subr.mxu0 0.0
    %1101 = vmatpush1.msra.mxu0 0.0
    %1102 = vmatprep.subr.mxu0 0.0
    %1103 = vmatpush1.msra.mxu0 0.0
    %1104 = vmatprep.subr.mxu0 0.0
    %1105 = vmatpush1.msra.mxu0 0.0
    %1106 = vmatprep.subr.mxu0 0.0
    %1107 = vmatpush1.msra.mxu0 0.0
    %1108 = vmatprep.subr.mxu0 0.0
    %1109 = vmatpush1.msra.mxu0 0.0
    %1110 = vmatprep.subr.mxu0 0.0
    %1111 = vmatpush1.msra.mxu0 0.0
    %1112 = vmatprep.subr.mxu0 0.0
    %1113 = vmatpush1.msra.mxu0 0.0
    %1114 = vmatprep.subr.mxu0 0.0
    %1115 = vmatpush1.msra.mxu0 0.0
    %1116 = vmatprep.subr.mxu0 0.0
    %1117 = vmatpush1.msra.mxu0 0.0
    %1118 = vmatprep.subr.mxu0 0.0
    %1119 = vmatpush1.msra.mxu0 0.0
    %1120 = vmatprep.subr.mxu0 0.0
    %1121 = vmatpush1.msra.mxu0 0.0
    %1122 = vmatprep.subr.mxu0 0.0
    %1123 = vmatpush1.msra.mxu0 0.0
    %1124 = vmatprep.subr.mxu0 0.0
    %1125 = vmatpush1.msra.mxu0 0.0
    %1126 = vmatprep.subr.mxu0 0.0
    %1127 = vmatpush1.msra.mxu0 0.0
    %1128 = vmatprep.subr.mxu0 0.0
    %1129 = vmatpush1.msra.mxu0 0.0
    %1130 = vmatprep.subr.mxu0 0.0
    %1131 = vmatpush1.msra.mxu0 0.0
    %1132 = vmatprep.subr.mxu0 0.0
    %1133 = vmatpush1.msra.mxu0 0.0
    %1134 = vmatprep.subr.mxu0 0.0
    %1135 = vmatpush1.msra.mxu0 0.0
    %1136 = vmatprep.mubr.f32.mxu0 0.0
    %1137 = vmatmul.mubr.f32.gmra.mrb[0].mxu0 %v1070
    %v1138 = vpop.f32.mrb[0].mxu0
    %v1139 = vadd.f32 %v103, %v1138
    %v1140 = vpop.f32.mrb[0].mxu0
    %1141 = vdwg.mxu0
    %1142 = vmatprep.subr.mxu0 0.0
    %1143 = vmatpush1.msra.mxu0 %v70
    %1144 = vmatprep.subr.mxu0 0.0
    %1145 = vmatpush1.msra.mxu0 %v71
    %1146 = vmatprep.subr.mxu0 0.0
    %1147 = vmatpush1.msra.mxu0 %v72
    %1148 = vmatprep.subr.mxu0 0.0
    %1149 = vmatpush1.msra.mxu0 %v73
    %1150 = vmatprep.subr.mxu0 0.0
    %1151 = vmatpush1.msra.mxu0 0.0
    %1152 = vmatprep.subr.mxu0 0.0
    %1153 = vmatpush1.msra.mxu0 0.0
    %1154 = vmatprep.subr.mxu0 0.0
    %1155 = vmatpush1.msra.mxu0 0.0
    %1156 = vmatprep.subr.mxu0 0.0
    %1157 = vmatpush1.msra.mxu0 0.0
    %1158 = vmatprep.subr.mxu0 0.0
    %1159 = vmatpush1.msra.mxu0 0.0
    %1160 = vmatprep.subr.mxu0 0.0
    %1161 = vmatpush1.msra.mxu0 0.0
    %1162 = vmatprep.subr.mxu0 0.0
    %1163 = vmatpush1.msra.mxu0 0.0
    %1164 = vmatprep.subr.mxu0 0.0
    %1165 = vmatpush1.msra.mxu0 0.0
    %1166 = vmatprep.subr.mxu0 0.0
    %1167 = vmatpush1.msra.mxu0 0.0
    %1168 = vmatprep.subr.mxu0 0.0
    %1169 = vmatpush1.msra.mxu0 0.0
    %1170 = vmatprep.subr.mxu0 0.0
    %1171 = vmatpush1.msra.mxu0 0.0
    %1172 = vmatprep.subr.mxu0 0.0
    %1173 = vmatpush1.msra.mxu0 0.0
    %1174 = vmatprep.subr.mxu0 0.0
    %1175 = vmatpush1.msra.mxu0 0.0
    %1176 = vmatprep.subr.mxu0 0.0
    %1177 = vmatpush1.msra.mxu0 0.0
    %1178 = vmatprep.subr.mxu0 0.0
    %1179 = vmatpush1.msra.mxu0 0.0
    %1180 = vmatprep.subr.mxu0 0.0
    %1181 = vmatpush1.msra.mxu0 0.0
    %1182 = vmatprep.subr.mxu0 0.0
    %1183 = vmatpush1.msra.mxu0 0.0
    %1184 = vmatprep.subr.mxu0 0.0
    %1185 = vmatpush1.msra.mxu0 0.0
    %1186 = vmatprep.subr.mxu0 0.0
    %1187 = vmatpush1.msra.mxu0 0.0
    %1188 = vmatprep.subr.mxu0 0.0
    %1189 = vmatpush1.msra.mxu0 0.0
    %1190 = vmatprep.subr.mxu0 0.0
    %1191 = vmatpush1.msra.mxu0 0.0
    %1192 = vmatprep.subr.mxu0 0.0
    %1193 = vmatpush1.msra.mxu0 0.0
    %1194 = vmatprep.subr.mxu0 0.0
    %1195 = vmatpush1.msra.mxu0 0.0
    %1196 = vmatprep.subr.mxu0 0.0
    %1197 = vmatpush1.msra.mxu0 0.0
    %1198 = vmatprep.subr.mxu0 0.0
    %1199 = vmatpush1.msra.mxu0 0.0
    %1200 = vmatprep.subr.mxu0 0.0
    %1201 = vmatpush1.msra.mxu0 0.0
    %1202 = vmatprep.subr.mxu0 0.0
    %1203 = vmatpush1.msra.mxu0 0.0
    %1204 = vmatprep.subr.mxu0 0.0
    %1205 = vmatpush1.msra.mxu0 0.0
    %1206 = vmatprep.mubr.f32.mxu0 0.0
    %1207 = vmatmul.mubr.f32.gmra.mrb[0].mxu0 %v1070
    %v1208 = vpop.f32.mrb[0].mxu0
    %v1209 = vadd.f32 %v107, %v1208
    %v1210 = vpop.f32.mrb[0].mxu0
    %1211 = vdwg.mxu0
    %v1212 = vld [vmem:[#allocation2] sm:$0xff]
    %v1213 = vld [vmem:[#allocation2 + $0x8] sm:$0xff]
    %v1214 = vld [vmem:[#allocation2 + $0x10] sm:$0xff]
    %v1216 = vsel %vm234, %v44, 0
    %v1219 = vsel %vm234, %v45, 0
    %1221 = vmatprep.subr.mxu0 0.0
    %1222 = vmatpush1.msra.mxu0 %v1212
    %1223 = vmatprep.subr.mxu0 0.0
    %1224 = vmatpush1.msra.mxu0 %v1213
    %1225 = vmatprep.subr.mxu0 0.0
    %1226 = vmatpush1.msra.mxu0 %v1214
    %1227 = vmatprep.subr.mxu0 0.0
    %1228 = vmatpush1.msra.mxu0 0.0
    %1229 = vmatprep.subr.mxu0 0.0
    %1230 = vmatpush1.msra.mxu0 0.0
    %1231 = vmatprep.subr.mxu0 0.0
    %1232 = vmatpush1.msra.mxu0 0.0
    %1233 = vmatprep.subr.mxu0 0.0
    %1234 = vmatpush1.msra.mxu0 0.0
    %1235 = vmatprep.subr.mxu0 0.0
    %1236 = vmatpush1.msra.mxu0 0.0
    %1237 = vmatprep.subr.mxu0 0.0
    %1238 = vmatpush1.msra.mxu0 0.0
    %1239 = vmatprep.subr.mxu0 0.0
    %1240 = vmatpush1.msra.mxu0 0.0
    %1241 = vmatprep.subr.mxu0 0.0
    %1242 = vmatpush1.msra.mxu0 0.0
    %1243 = vmatprep.subr.mxu0 0.0
    %1244 = vmatpush1.msra.mxu0 0.0
    %1245 = vmatprep.subr.mxu0 0.0
    %1246 = vmatpush1.msra.mxu0 0.0
    %1247 = vmatprep.subr.mxu0 0.0
    %1248 = vmatpush1.msra.mxu0 0.0
    %1249 = vmatprep.subr.mxu0 0.0
    %1250 = vmatpush1.msra.mxu0 0.0
    %1251 = vmatprep.subr.mxu0 0.0
    %1252 = vmatpush1.msra.mxu0 0.0
    %1253 = vmatprep.subr.mxu0 0.0
    %1254 = vmatpush1.msra.mxu0 0.0
    %1255 = vmatprep.subr.mxu0 0.0
    %1256 = vmatpush1.msra.mxu0 0.0
    %1257 = vmatprep.subr.mxu0 0.0
    %1258 = vmatpush1.msra.mxu0 0.0
    %1259 = vmatprep.subr.mxu0 0.0
    %1260 = vmatpush1.msra.mxu0 0.0
    %1261 = vmatprep.subr.mxu0 0.0
    %1262 = vmatpush1.msra.mxu0 0.0
    %1263 = vmatprep.subr.mxu0 0.0
    %1264 = vmatpush1.msra.mxu0 0.0
    %1265 = vmatprep.subr.mxu0 0.0
    %1266 = vmatpush1.msra.mxu0 0.0
    %1267 = vmatprep.subr.mxu0 0.0
    %1268 = vmatpush1.msra.mxu0 0.0
    %1269 = vmatprep.subr.mxu0 0.0
    %1270 = vmatpush1.msra.mxu0 0.0
    %1271 = vmatprep.subr.mxu0 0.0
    %1272 = vmatpush1.msra.mxu0 0.0
    %1273 = vmatprep.subr.mxu0 0.0
    %1274 = vmatpush1.msra.mxu0 0.0
    %1275 = vmatprep.subr.mxu0 0.0
    %1276 = vmatpush1.msra.mxu0 0.0
    %1277 = vmatprep.subr.mxu0 0.0
    %1278 = vmatpush1.msra.mxu0 0.0
    %1279 = vmatprep.subr.mxu0 0.0
    %1280 = vmatpush1.msra.mxu0 0.0
    %1281 = vmatprep.subr.mxu0 0.0
    %1282 = vmatpush1.msra.mxu0 0.0
    %1283 = vmatprep.subr.mxu0 0.0
    %1284 = vmatpush1.msra.mxu0 0.0
    %1285 = vmatprep.mubr.f32.mxu0 0.0
    %1286 = vmatmul.mubr.f32.gmra.mrb[0].mxu0 %v1216
    %v1287 = vpop.f32.mrb[0].mxu0
    %v1288 = vadd.f32 0.0, %v1287
    %v1289 = vpop.f32.mrb[0].mxu0
    %1290 = vmatprep.mubr.f32.mxu0 0.0
    %1291 = vmatmul.mubr.f32.gmra.mrb[0].mxu0 %v1219
    %v1292 = vpop.f32.mrb[0].mxu0
    %v1293 = vadd.f32 0.0, %v1292
    %v1294 = vpop.f32.mrb[0].mxu0
    %1295 = vdwg.mxu0
    %v1297 = vsel %vm140, %v1288, 0
    %v1300 = vsel %vm140, %v1293, 0
    %1302 = vmatprep.subr.mxu0 0.0
    %1303 = vmatpush1.msra.mxu0 %v70
    %1304 = vmatprep.subr.mxu0 0.0
    %1305 = vmatpush1.msra.mxu0 %v71
    %1306 = vmatprep.subr.mxu0 0.0
    %1307 = vmatpush1.msra.mxu0 %v72
    %1308 = vmatprep.subr.mxu0 0.0
    %1309 = vmatpush1.msra.mxu0 %v73
    %1310 = vmatprep.subr.mxu0 0.0
    %1311 = vmatpush1.msra.mxu0 0.0
    %1312 = vmatprep.subr.mxu0 0.0
    %1313 = vmatpush1.msra.mxu0 0.0
    %1314 = vmatprep.subr.mxu0 0.0
    %1315 = vmatpush1.msra.mxu0 0.0
    %1316 = vmatprep.subr.mxu0 0.0
    %1317 = vmatpush1.msra.mxu0 0.0
    %1318 = vmatprep.subr.mxu0 0.0
    %1319 = vmatpush1.msra.mxu0 0.0
    %1320 = vmatprep.subr.mxu0 0.0
    %1321 = vmatpush1.msra.mxu0 0.0
    %1322 = vmatprep.subr.mxu0 0.0
    %1323 = vmatpush1.msra.mxu0 0.0
    %1324 = vmatprep.subr.mxu0 0.0
    %1325 = vmatpush1.msra.mxu0 0.0
    %1326 = vmatprep.subr.mxu0 0.0
    %1327 = vmatpush1.msra.mxu0 0.0
    %1328 = vmatprep.subr.mxu0 0.0
    %1329 = vmatpush1.msra.mxu0 0.0
    %1330 = vmatprep.subr.mxu0 0.0
    %1331 = vmatpush1.msra.mxu0 0.0
    %1332 = vmatprep.subr.mxu0 0.0
    %1333 = vmatpush1.msra.mxu0 0.0
    %1334 = vmatprep.subr.mxu0 0.0
    %1335 = vmatpush1.msra.mxu0 0.0
    %1336 = vmatprep.subr.mxu0 0.0
    %1337 = vmatpush1.msra.mxu0 0.0
    %1338 = vmatprep.subr.mxu0 0.0
    %1339 = vmatpush1.msra.mxu0 0.0
    %1340 = vmatprep.subr.mxu0 0.0
    %1341 = vmatpush1.msra.mxu0 0.0
    %1342 = vmatprep.subr.mxu0 0.0
    %1343 = vmatpush1.msra.mxu0 0.0
    %1344 = vmatprep.subr.mxu0 0.0
    %1345 = vmatpush1.msra.mxu0 0.0
    %1346 = vmatprep.subr.mxu0 0.0
    %1347 = vmatpush1.msra.mxu0 0.0
    %1348 = vmatprep.subr.mxu0 0.0
    %1349 = vmatpush1.msra.mxu0 0.0
    %1350 = vmatprep.subr.mxu0 0.0
    %1351 = vmatpush1.msra.mxu0 0.0
    %1352 = vmatprep.subr.mxu0 0.0
    %1353 = vmatpush1.msra.mxu0 0.0
    %1354 = vmatprep.subr.mxu0 0.0
    %1355 = vmatpush1.msra.mxu0 0.0
    %1356 = vmatprep.subr.mxu0 0.0
    %1357 = vmatpush1.msra.mxu0 0.0
    %1358 = vmatprep.subr.mxu0 0.0
    %1359 = vmatpush1.msra.mxu0 0.0
    %1360 = vmatprep.subr.mxu0 0.0
    %1361 = vmatpush1.msra.mxu0 0.0
    %1362 = vmatprep.subr.mxu0 0.0
    %1363 = vmatpush1.msra.mxu0 0.0
    %1364 = vmatprep.subr.mxu0 0.0
    %1365 = vmatpush1.msra.mxu0 0.0
    %1366 = vmatprep.mubr.f32.mxu0 0.0
    %1367 = vmatmul.mubr.f32.gmra.mrb[0].mxu0 %v1297
    %v1368 = vpop.f32.mrb[0].mxu0
    %v1369 = vadd.f32 0.0, %v1368
    %v1370 = vpop.f32.mrb[0].mxu0
    %1371 = vmatprep.mubr.f32.mxu0 0.0
    %1372 = vmatmul.mubr.f32.gmra.mrb[0].mxu0 %v1300
    %v1373 = vpop.f32.mrb[0].mxu0
    %v1374 = vadd.f32 0.0, %v1373
    %v1375 = vpop.f32.mrb[0].mxu0
    %1376 = vdwg.mxu0
    %v1377 = vadd.f32 %v1369, %v107
    %v1378 = vadd.f32 %v1374, %v107
    %v1379 = vmul.f32 %v1139, %v1377
    %v1381 = vsel %vm640, %v1379, 0
    %1383 = vmatprep.subr.mxu0 0.0
    %1384 = vmatpush1.msra.mxu0 %v58
    %1385 = vmatprep.subr.mxu0 0.0
    %1386 = vmatpush1.msra.mxu0 %v59
    %1387 = vmatprep.subr.mxu0 0.0
    %1388 = vmatpush1.msra.mxu0 %v60
    %1389 = vmatprep.subr.mxu0 0.0
    %1390 = vmatpush1.msra.mxu0 %v61
    %1391 = vmatprep.subr.mxu0 0.0
    %1392 = vmatpush1.msra.mxu0 %v62
    %1393 = vmatprep.subr.mxu0 0.0
    %1394 = vmatpush1.msra.mxu0 %v63
    %1395 = vmatprep.subr.mxu0 0.0
    %1396 = vmatpush1.msra.mxu0 %v64
    %1397 = vmatprep.subr.mxu0 0.0
    %1398 = vmatpush1.msra.mxu0 %v65
    %1399 = vmatprep.subr.mxu0 0.0
    %1400 = vmatpush1.msra.mxu0 0.0
    %1401 = vmatprep.subr.mxu0 0.0
    %1402 = vmatpush1.msra.mxu0 0.0
    %1403 = vmatprep.subr.mxu0 0.0
    %1404 = vmatpush1.msra.mxu0 0.0
    %1405 = vmatprep.subr.mxu0 0.0
    %1406 = vmatpush1.msra.mxu0 0.0
    %1407 = vmatprep.subr.mxu0 0.0
    %1408 = vmatpush1.msra.mxu0 0.0
    %1409 = vmatprep.subr.mxu0 0.0
    %1410 = vmatpush1.msra.mxu0 0.0
    %1411 = vmatprep.subr.mxu0 0.0
    %1412 = vmatpush1.msra.mxu0 0.0
    %1413 = vmatprep.subr.mxu0 0.0
    %1414 = vmatpush1.msra.mxu0 0.0
    %1415 = vmatprep.subr.mxu0 0.0
    %1416 = vmatpush1.msra.mxu0 0.0
    %1417 = vmatprep.subr.mxu0 0.0
    %1418 = vmatpush1.msra.mxu0 0.0
    %1419 = vmatprep.subr.mxu0 0.0
    %1420 = vmatpush1.msra.mxu0 0.0
    %1421 = vmatprep.subr.mxu0 0.0
    %1422 = vmatpush1.msra.mxu0 0.0
    %1423 = vmatprep.subr.mxu0 0.0
    %1424 = vmatpush1.msra.mxu0 0.0
    %1425 = vmatprep.subr.mxu0 0.0
    %1426 = vmatpush1.msra.mxu0 0.0
    %1427 = vmatprep.subr.mxu0 0.0
    %1428 = vmatpush1.msra.mxu0 0.0
    %1429 = vmatprep.subr.mxu0 0.0
    %1430 = vmatpush1.msra.mxu0 0.0
    %1431 = vmatprep.subr.mxu0 0.0
    %1432 = vmatpush1.msra.mxu0 0.0
    %1433 = vmatprep.subr.mxu0 0.0
    %1434 = vmatpush1.msra.mxu0 0.0
    %1435 = vmatprep.subr.mxu0 0.0
    %1436 = vmatpush1.msra.mxu0 0.0
    %1437 = vmatprep.subr.mxu0 0.0
    %1438 = vmatpush1.msra.mxu0 0.0
    %1439 = vmatprep.subr.mxu0 0.0
    %1440 = vmatpush1.msra.mxu0 0.0
    %1441 = vmatprep.subr.mxu0 0.0
    %1442 = vmatpush1.msra.mxu0 0.0
    %1443 = vmatprep.subr.mxu0 0.0
    %1444 = vmatpush1.msra.mxu0 0.0
    %1445 = vmatprep.subr.mxu0 0.0
    %1446 = vmatpush1.msra.mxu0 0.0
    %1447 = vmatprep.mubr.f32.mxu0 0.0
    %1448 = vmatmul.mubr.f32.gmra.mrb[0].mxu0 %v1381
    %v1449 = vpop.f32.mrb[0].mxu0
    %v1450 = vadd.f32 0.0, %v1449
    %v1451 = vpop.f32.mrb[0].mxu0
    %1452 = vdwg.mxu0
    %v1453 = vmul.f32 %v1450, 0.5
    %v1454 = vmul.f32 %v1139, %v1378
    %v1456 = vsel %vm640, %v1454, 0
    %1458 = vmatprep.subr.mxu0 0.0
    %1459 = vmatpush1.msra.mxu0 %v58
    %1460 = vmatprep.subr.mxu0 0.0
    %1461 = vmatpush1.msra.mxu0 %v59
    %1462 = vmatprep.subr.mxu0 0.0
    %1463 = vmatpush1.msra.mxu0 %v60
    %1464 = vmatprep.subr.mxu0 0.0
    %1465 = vmatpush1.msra.mxu0 %v61
    %1466 = vmatprep.subr.mxu0 0.0
    %1467 = vmatpush1.msra.mxu0 %v62
    %1468 = vmatprep.subr.mxu0 0.0
    %1469 = vmatpush1.msra.mxu0 %v63
    %1470 = vmatprep.subr.mxu0 0.0
    %1471 = vmatpush1.msra.mxu0 %v64
    %1472 = vmatprep.subr.mxu0 0.0
    %1473 = vmatpush1.msra.mxu0 %v65
    %1474 = vmatprep.subr.mxu0 0.0
    %1475 = vmatpush1.msra.mxu0 0.0
    %1476 = vmatprep.subr.mxu0 0.0
    %1477 = vmatpush1.msra.mxu0 0.0
    %1478 = vmatprep.subr.mxu0 0.0
    %1479 = vmatpush1.msra.mxu0 0.0
    %1480 = vmatprep.subr.mxu0 0.0
    %1481 = vmatpush1.msra.mxu0 0.0
    %1482 = vmatprep.subr.mxu0 0.0
    %1483 = vmatpush1.msra.mxu0 0.0
    %1484 = vmatprep.subr.mxu0 0.0
    %1485 = vmatpush1.msra.mxu0 0.0
    %1486 = vmatprep.subr.mxu0 0.0
    %1487 = vmatpush1.msra.mxu0 0.0
    %1488 = vmatprep.subr.mxu0 0.0
    %1489 = vmatpush1.msra.mxu0 0.0
    %1490 = vmatprep.subr.mxu0 0.0
    %1491 = vmatpush1.msra.mxu0 0.0
    %1492 = vmatprep.subr.mxu0 0.0
    %1493 = vmatpush1.msra.mxu0 0.0
    %1494 = vmatprep.subr.mxu0 0.0
    %1495 = vmatpush1.msra.mxu0 0.0
    %1496 = vmatprep.subr.mxu0 0.0
    %1497 = vmatpush1.msra.mxu0 0.0
    %1498 = vmatprep.subr.mxu0 0.0
    %1499 = vmatpush1.msra.mxu0 0.0
    %1500 = vmatprep.subr.mxu0 0.0
    %1501 = vmatpush1.msra.mxu0 0.0
    %1502 = vmatprep.subr.mxu0 0.0
    %1503 = vmatpush1.msra.mxu0 0.0
    %1504 = vmatprep.subr.mxu0 0.0
    %1505 = vmatpush1.msra.mxu0 0.0
    %1506 = vmatprep.subr.mxu0 0.0
    %1507 = vmatpush1.msra.mxu0 0.0
    %1508 = vmatprep.subr.mxu0 0.0
    %1509 = vmatpush1.msra.mxu0 0.0
    %1510 = vmatprep.subr.mxu0 0.0
    %1511 = vmatpush1.msra.mxu0 0.0
    %1512 = vmatprep.subr.mxu0 0.0
    %1513 = vmatpush1.msra.mxu0 0.0
    %1514 = vmatprep.subr.mxu0 0.0
    %1515 = vmatpush1.msra.mxu0 0.0
    %1516 = vmatprep.subr.mxu0 0.0
    %1517 = vmatpush1.msra.mxu0 0.0
    %1518 = vmatprep.subr.mxu0 0.0
    %1519 = vmatpush1.msra.mxu0 0.0
    %1520 = vmatprep.subr.mxu0 0.0
    %1521 = vmatpush1.msra.mxu0 0.0
    %1522 = vmatprep.mubr.f32.mxu0 0.0
    %1523 = vmatmul.mubr.f32.gmra.mrb[0].mxu0 %v1456
    %v1524 = vpop.f32.mrb[0].mxu0
    %v1525 = vadd.f32 0.0, %v1524
    %v1526 = vpop.f32.mrb[0].mxu0
    %1527 = vdwg.mxu0
    %v1528 = vmul.f32 %v1525, 0.5
    %v1529 = vmul.f32 %v1139, %v1209
    %v1531 = vsel %vm640, %v1529, 0
    %1533 = vmatprep.subr.mxu0 0.0
    %1534 = vmatpush1.msra.mxu0 %v58
    %1535 = vmatprep.subr.mxu0 0.0
    %1536 = vmatpush1.msra.mxu0 %v59
    %1537 = vmatprep.subr.mxu0 0.0
    %1538 = vmatpush1.msra.mxu0 %v60
    %1539 = vmatprep.subr.mxu0 0.0
    %1540 = vmatpush1.msra.mxu0 %v61
    %1541 = vmatprep.subr.mxu0 0.0
    %1542 = vmatpush1.msra.mxu0 %v62
    %1543 = vmatprep.subr.mxu0 0.0
    %1544 = vmatpush1.msra.mxu0 %v63
    %1545 = vmatprep.subr.mxu0 0.0
    %1546 = vmatpush1.msra.mxu0 %v64
    %1547 = vmatprep.subr.mxu0 0.0
    %1548 = vmatpush1.msra.mxu0 %v65
    %1549 = vmatprep.subr.mxu0 0.0
    %1550 = vmatpush1.msra.mxu0 0.0
    %1551 = vmatprep.subr.mxu0 0.0
    %1552 = vmatpush1.msra.mxu0 0.0
    %1553 = vmatprep.subr.mxu0 0.0
    %1554 = vmatpush1.msra.mxu0 0.0
    %1555 = vmatprep.subr.mxu0 0.0
    %1556 = vmatpush1.msra.mxu0 0.0
    %1557 = vmatprep.subr.mxu0 0.0
    %1558 = vmatpush1.msra.mxu0 0.0
    %1559 = vmatprep.subr.mxu0 0.0
    %1560 = vmatpush1.msra.mxu0 0.0
    %1561 = vmatprep.subr.mxu0 0.0
    %1562 = vmatpush1.msra.mxu0 0.0
    %1563 = vmatprep.subr.mxu0 0.0
    %1564 = vmatpush1.msra.mxu0 0.0
    %1565 = vmatprep.subr.mxu0 0.0
    %1566 = vmatpush1.msra.mxu0 0.0
    %1567 = vmatprep.subr.mxu0 0.0
    %1568 = vmatpush1.msra.mxu0 0.0
    %1569 = vmatprep.subr.mxu0 0.0
    %1570 = vmatpush1.msra.mxu0 0.0
    %1571 = vmatprep.subr.mxu0 0.0
    %1572 = vmatpush1.msra.mxu0 0.0
    %1573 = vmatprep.subr.mxu0 0.0
    %1574 = vmatpush1.msra.mxu0 0.0
    %1575 = vmatprep.subr.mxu0 0.0
    %1576 = vmatpush1.msra.mxu0 0.0
    %1577 = vmatprep.subr.mxu0 0.0
    %1578 = vmatpush1.msra.mxu0 0.0
    %1579 = vmatprep.subr.mxu0 0.0
    %1580 = vmatpush1.msra.mxu0 0.0
    %1581 = vmatprep.subr.mxu0 0.0
    %1582 = vmatpush1.msra.mxu0 0.0
    %1583 = vmatprep.subr.mxu0 0.0
    %1584 = vmatpush1.msra.mxu0 0.0
    %1585 = vmatprep.subr.mxu0 0.0
    %1586 = vmatpush1.msra.mxu0 0.0
    %1587 = vmatprep.subr.mxu0 0.0
    %1588 = vmatpush1.msra.mxu0 0.0
    %1589 = vmatprep.subr.mxu0 0.0
    %1590 = vmatpush1.msra.mxu0 0.0
    %1591 = vmatprep.subr.mxu0 0.0
    %1592 = vmatpush1.msra.mxu0 0.0
    %1593 = vmatprep.subr.mxu0 0.0
    %1594 = vmatpush1.msra.mxu0 0.0
    %1595 = vmatprep.subr.mxu0 0.0
    %1596 = vmatpush1.msra.mxu0 0.0
    %1597 = vmatprep.mubr.f32.mxu0 0.0
    %1598 = vmatmul.mubr.f32.gmra.mrb[0].mxu0 %v1531
    %v1599 = vpop.f32.mrb[0].mxu0
    %v1600 = vadd.f32 0.0, %v1599
    %v1601 = vpop.f32.mrb[0].mxu0
    %1602 = vdwg.mxu0
    %v1603 = vmul.f32 %v1600, 0.5
    %v1604 = vmul.f32 %v1139, %v222
    %v1606 = vsel %vm640, %v1604, 0
    %1608 = vmatprep.subr.mxu0 0.0
    %1609 = vmatpush1.msra.mxu0 %v58
    %1610 = vmatprep.subr.mxu0 0.0
    %1611 = vmatpush1.msra.mxu0 %v59
    %1612 = vmatprep.subr.mxu0 0.0
    %1613 = vmatpush1.msra.mxu0 %v60
    %1614 = vmatprep.subr.mxu0 0.0
    %1615 = vmatpush1.msra.mxu0 %v61
    %1616 = vmatprep.subr.mxu0 0.0
    %1617 = vmatpush1.msra.mxu0 %v62
    %1618 = vmatprep.subr.mxu0 0.0
    %1619 = vmatpush1.msra.mxu0 %v63
    %1620 = vmatprep.subr.mxu0 0.0
    %1621 = vmatpush1.msra.mxu0 %v64
    %1622 = vmatprep.subr.mxu0 0.0
    %1623 = vmatpush1.msra.mxu0 %v65
    %1624 = vmatprep.subr.mxu0 0.0
    %1625 = vmatpush1.msra.mxu0 0.0
    %1626 = vmatprep.subr.mxu0 0.0
    %1627 = vmatpush1.msra.mxu0 0.0
    %1628 = vmatprep.subr.mxu0 0.0
    %1629 = vmatpush1.msra.mxu0 0.0
    %1630 = vmatprep.subr.mxu0 0.0
    %1631 = vmatpush1.msra.mxu0 0.0
    %1632 = vmatprep.subr.mxu0 0.0
    %1633 = vmatpush1.msra.mxu0 0.0
    %1634 = vmatprep.subr.mxu0 0.0
    %1635 = vmatpush1.msra.mxu0 0.0
    %1636 = vmatprep.subr.mxu0 0.0
    %1637 = vmatpush1.msra.mxu0 0.0
    %1638 = vmatprep.subr.mxu0 0.0
    %1639 = vmatpush1.msra.mxu0 0.0
    %1640 = vmatprep.subr.mxu0 0.0
    %1641 = vmatpush1.msra.mxu0 0.0
    %1642 = vmatprep.subr.mxu0 0.0
    %1643 = vmatpush1.msra.mxu0 0.0
    %1644 = vmatprep.subr.mxu0 0.0
    %1645 = vmatpush1.msra.mxu0 0.0
    %1646 = vmatprep.subr.mxu0 0.0
    %1647 = vmatpush1.msra.mxu0 0.0
    %1648 = vmatprep.subr.mxu0 0.0
    %1649 = vmatpush1.msra.mxu0 0.0
    %1650 = vmatprep.subr.mxu0 0.0
    %1651 = vmatpush1.msra.mxu0 0.0
    %1652 = vmatprep.subr.mxu0 0.0
    %1653 = vmatpush1.msra.mxu0 0.0
    %1654 = vmatprep.subr.mxu0 0.0
    %1655 = vmatpush1.msra.mxu0 0.0
    %1656 = vmatprep.subr.mxu0 0.0
    %1657 = vmatpush1.msra.mxu0 0.0
    %1658 = vmatprep.subr.mxu0 0.0
    %1659 = vmatpush1.msra.mxu0 0.0
    %1660 = vmatprep.subr.mxu0 0.0
    %1661 = vmatpush1.msra.mxu0 0.0
    %1662 = vmatprep.subr.mxu0 0.0
    %1663 = vmatpush1.msra.mxu0 0.0
    %1664 = vmatprep.subr.mxu0 0.0
    %1665 = vmatpush1.msra.mxu0 0.0
    %1666 = vmatprep.subr.mxu0 0.0
    %1667 = vmatpush1.msra.mxu0 0.0
    %1668 = vmatprep.subr.mxu0 0.0
    %1669 = vmatpush1.msra.mxu0 0.0
    %1670 = vmatprep.subr.mxu0 0.0
    %1671 = vmatpush1.msra.mxu0 0.0
    %1672 = vmatprep.mubr.f32.mxu0 0.0
    %1673 = vmatmul.mubr.f32.gmra.mrb[0].mxu0 %v1606
    %v1674 = vpop.f32.mrb[0].mxu0
    %v1675 = vadd.f32 0.0, %v1674
    %v1676 = vpop.f32.mrb[0].mxu0
    %1677 = vdwg.mxu0
    %v1678 = vmul.f32 %v1675, 0.5
    %v1679 = vmul.f32 %v1139, %v487
    %v1681 = vsel %vm640, %v1679, 0
    %1683 = vmatprep.subr.mxu0 0.0
    %1684 = vmatpush1.msra.mxu0 %v58
    %1685 = vmatprep.subr.mxu0 0.0
    %1686 = vmatpush1.msra.mxu0 %v59
    %1687 = vmatprep.subr.mxu0 0.0
    %1688 = vmatpush1.msra.mxu0 %v60
    %1689 = vmatprep.subr.mxu0 0.0
    %1690 = vmatpush1.msra.mxu0 %v61
    %1691 = vmatprep.subr.mxu0 0.0
    %1692 = vmatpush1.msra.mxu0 %v62
    %1693 = vmatprep.subr.mxu0 0.0
    %1694 = vmatpush1.msra.mxu0 %v63
    %1695 = vmatprep.subr.mxu0 0.0
    %1696 = vmatpush1.msra.mxu0 %v64
    %1697 = vmatprep.subr.mxu0 0.0
    %1698 = vmatpush1.msra.mxu0 %v65
    %1699 = vmatprep.subr.mxu0 0.0
    %1700 = vmatpush1.msra.mxu0 0.0
    %1701 = vmatprep.subr.mxu0 0.0
    %1702 = vmatpush1.msra.mxu0 0.0
    %1703 = vmatprep.subr.mxu0 0.0
    %1704 = vmatpush1.msra.mxu0 0.0
    %1705 = vmatprep.subr.mxu0 0.0
    %1706 = vmatpush1.msra.mxu0 0.0
    %1707 = vmatprep.subr.mxu0 0.0
    %1708 = vmatpush1.msra.mxu0 0.0
    %1709 = vmatprep.subr.mxu0 0.0
    %1710 = vmatpush1.msra.mxu0 0.0
    %1711 = vmatprep.subr.mxu0 0.0
    %1712 = vmatpush1.msra.mxu0 0.0
    %1713 = vmatprep.subr.mxu0 0.0
    %1714 = vmatpush1.msra.mxu0 0.0
    %1715 = vmatprep.subr.mxu0 0.0
    %1716 = vmatpush1.msra.mxu0 0.0
    %1717 = vmatprep.subr.mxu0 0.0
    %1718 = vmatpush1.msra.mxu0 0.0
    %1719 = vmatprep.subr.mxu0 0.0
    %1720 = vmatpush1.msra.mxu0 0.0
    %1721 = vmatprep.subr.mxu0 0.0
    %1722 = vmatpush1.msra.mxu0 0.0
    %1723 = vmatprep.subr.mxu0 0.0
    %1724 = vmatpush1.msra.mxu0 0.0
    %1725 = vmatprep.subr.mxu0 0.0
    %1726 = vmatpush1.msra.mxu0 0.0
    %1727 = vmatprep.subr.mxu0 0.0
    %1728 = vmatpush1.msra.mxu0 0.0
    %1729 = vmatprep.subr.mxu0 0.0
    %1730 = vmatpush1.msra.mxu0 0.0
    %1731 = vmatprep.subr.mxu0 0.0
    %1732 = vmatpush1.msra.mxu0 0.0
    %1733 = vmatprep.subr.mxu0 0.0
    %1734 = vmatpush1.msra.mxu0 0.0
    %1735 = vmatprep.subr.mxu0 0.0
    %1736 = vmatpush1.msra.mxu0 0.0
    %1737 = vmatprep.subr.mxu0 0.0
    %1738 = vmatpush1.msra.mxu0 0.0
    %1739 = vmatprep.subr.mxu0 0.0
    %1740 = vmatpush1.msra.mxu0 0.0
    %1741 = vmatprep.subr.mxu0 0.0
    %1742 = vmatpush1.msra.mxu0 0.0
    %1743 = vmatprep.subr.mxu0 0.0
    %1744 = vmatpush1.msra.mxu0 0.0
    %1745 = vmatprep.subr.mxu0 0.0
    %1746 = vmatpush1.msra.mxu0 0.0
    %1747 = vmatprep.mubr.f32.mxu0 0.0
    %1748 = vmatmul.mubr.f32.gmra.mrb[0].mxu0 %v1681
    %v1749 = vpop.f32.mrb[0].mxu0
    %v1750 = vadd.f32 0.0, %v1749
    %v1751 = vpop.f32.mrb[0].mxu0
    %1752 = vdwg.mxu0
    %v1753 = vmul.f32 %v1750, 0.5
    %v1754 = vmax.f32 %v1453, %v1528
    %v1755 = vmax.f32 %v1754, %v1603
    %v1756 = vmax.f32 %v1755, %v1678
    %v1757 = vmax.f32 %v1756, %v1753
    %v1758 = vsub.f32 %v1453, %v1757
    %v1759 = vmul.f32 %v1758, 1.442695
    %v1760 = vpow.pop %v1759
    %v1761 = vsub.f32 %v1528, %v1757
    %v1762 = vmul.f32 %v1761, 1.442695
    %v1763 = vpow.pop %v1762
    %v1764 = vsub.f32 %v1603, %v1757
    %v1765 = vmul.f32 %v1764, 1.442695
    %v1766 = vpow.pop %v1765
    %v1767 = vsub.f32 %v1678, %v1757
    %v1768 = vmul.f32 %v1767, 1.442695
    %v1769 = vpow.pop %v1768
    %v1770 = vsub.f32 %v1753, %v1757
    %v1771 = vmul.f32 %v1770, 1.442695
    %v1772 = vpow.pop %v1771
    %v1773 = vmul.f32 %v1760, %v1377
    %v1774 = vadd.f32 %v1760, %v1763
    %v1775 = vmul.f32 %v1763, %v1378
    %v1776 = vadd.f32 %v1773, %v1775
    %v1777 = vadd.f32 %v1774, %v1766
    %v1778 = vmul.f32 %v1766, %v1209
    %v1779 = vadd.f32 %v1776, %v1778
    %v1780 = vadd.f32 %v1777, %v1769
    %v1781 = vmul.f32 %v1769, %v222
    %v1782 = vadd.f32 %v1779, %v1781
    %v1783 = vadd.f32 %v1780, %v1772
    %v1784 = vmul.f32 %v1772, %v487
    %v1785 = vadd.f32 %v1782, %v1784
    %v1786 = vrcp.pop %v1783
    %v1787 = vmul.f32 %v1785, %v1786
    %v1789 = vsel %vm640, %v1787, 0
    %1791 = vmatprep.subr.mxu0 0.0
    %1792 = vmatpush1.msra.mxu0 %v74
    %1793 = vmatprep.subr.mxu0 0.0
    %1794 = vmatpush1.msra.mxu0 %v75
    %1795 = vmatprep.subr.mxu0 0.0
    %1796 = vmatpush1.msra.mxu0 %v76
    %1797 = vmatprep.subr.mxu0 0.0
    %1798 = vmatpush1.msra.mxu0 %v77
    %1799 = vmatprep.subr.mxu0 0.0
    %1800 = vmatpush1.msra.mxu0 %v78
    %1801 = vmatprep.subr.mxu0 0.0
    %1802 = vmatpush1.msra.mxu0 %v79
    %1803 = vmatprep.subr.mxu0 0.0
    %1804 = vmatpush1.msra.mxu0 %v80
    %1805 = vmatprep.subr.mxu0 0.0
    %1806 = vmatpush1.msra.mxu0 %v81
    %1807 = vmatprep.subr.mxu0 0.0
    %1808 = vmatpush1.msra.mxu0 0.0
    %1809 = vmatprep.subr.mxu0 0.0
    %1810 = vmatpush1.msra.mxu0 0.0
    %1811 = vmatprep.subr.mxu0 0.0
    %1812 = vmatpush1.msra.mxu0 0.0
    %1813 = vmatprep.subr.mxu0 0.0
    %1814 = vmatpush1.msra.mxu0 0.0
    %1815 = vmatprep.subr.mxu0 0.0
    %1816 = vmatpush1.msra.mxu0 0.0
    %1817 = vmatprep.subr.mxu0 0.0
    %1818 = vmatpush1.msra.mxu0 0.0
    %1819 = vmatprep.subr.mxu0 0.0
    %1820 = vmatpush1.msra.mxu0 0.0
    %1821 = vmatprep.subr.mxu0 0.0
    %1822 = vmatpush1.msra.mxu0 0.0
    %1823 = vmatprep.subr.mxu0 0.0
    %1824 = vmatpush1.msra.mxu0 0.0
    %1825 = vmatprep.subr.mxu0 0.0
    %1826 = vmatpush1.msra.mxu0 0.0
    %1827 = vmatprep.subr.mxu0 0.0
    %1828 = vmatpush1.msra.mxu0 0.0
    %1829 = vmatprep.subr.mxu0 0.0
    %1830 = vmatpush1.msra.mxu0 0.0
    %1831 = vmatprep.subr.mxu0 0.0
    %1832 = vmatpush1.msra.mxu0 0.0
    %1833 = vmatprep.subr.mxu0 0.0
    %1834 = vmatpush1.msra.mxu0 0.0
    %1835 = vmatprep.subr.mxu0 0.0
    %1836 = vmatpush1.msra.mxu0 0.0
    %1837 = vmatprep.subr.mxu0 0.0
    %1838 = vmatpush1.msra.mxu0 0.0
    %1839 = vmatprep.subr.mxu0 0.0
    %1840 = vmatpush1.msra.mxu0 0.0
    %1841 = vmatprep.subr.mxu0 0.0
    %1842 = vmatpush1.msra.mxu0 0.0
    %1843 = vmatprep.subr.mxu0 0.0
    %1844 = vmatpush1.msra.mxu0 0.0
    %1845 = vmatprep.subr.mxu0 0.0
    %1846 = vmatpush1.msra.mxu0 0.0
    %1847 = vmatprep.subr.mxu0 0.0
    %1848 = vmatpush1.msra.mxu0 0.0
    %1849 = vmatprep.subr.mxu0 0.0
    %1850 = vmatpush1.msra.mxu0 0.0
    %1851 = vmatprep.subr.mxu0 0.0
    %1852 = vmatpush1.msra.mxu0 0.0
    %1853 = vmatprep.subr.mxu0 0.0
    %1854 = vmatpush1.msra.mxu0 0.0
    %1855 = vmatprep.mubr.f32.mxu0 0.0
    %1856 = vmatmul.mubr.f32.gmra.mrb[0].mxu0 %v1789
    %v1857 = vpop.f32.mrb[0].mxu0
    %v1858 = vadd.f32 0.0, %v1857
    %v1859 = vpop.f32.mrb[0].mxu0
    %1860 = vdwg.mxu0
    %v1861 = vadd.f32 %v1858, %v111
    %v1862 = vmax.f32 %v1861, 0.0
    %v1863 = vsel %vm140, %v1862, 0.0
    %1864 = vadd.xlane.f32.xlu0 %v1863
    %v1865 = vpop.xlane.xlu0 %1864
    %v1866 = vmul.f32 %v1865, %v1047
    %v1867 = vsub.f32 %v1862, %v1866
    %v1868 = vmul.f32 %v1867, %v1867
    %v1869 = vsel %vm140, %v1868, 0.0
    %1870 = vadd.xlane.f32.xlu0 %v1869
    %v1871 = vpop.xlane.xlu0 %1870
    %v1872 = vmul.f32 %v1871, 0.032258064
    %v1873 = vrsqrt.pop %v1872
    %v1874 = vmul.f32 %v1872, %v1873
    %vm1875 = vcmp.eq.f32.partialorder %v1872, inf
    %v1876 = vsel %vm1875, %v1872, %v1874
    %vm1877 = vcmp.eq.f32.partialorder %v1872, 0.0
    %v1878 = vand.u32 %v1872, 2147483648
    %v1879 = vsel %vm1877, %v1878, %v1876
    %v1880 = vadd.f32 %v1879, 1e-06
    %v1881 = vrcp.pop %v1880
    %v1882 = vmul.f32 %v115, %v1867
    %v1883 = vmul.f32 %v1882, %v1881
    %v1884 = vadd.f32 %v1883, %v119
    %1885 = vst.msk [vmem:[#allocation2 + $0x8] sm:$0xff] %vm140, %v1884
    %v1886 = vld [vmem:[#allocation2 + $0x10] sm:$0xff]
    %v1888 = vsel %vm140, %v1886, 0
    %1890 = vmatprep.subr.mxu0 0.0
    %1891 = vmatpush1.msra.mxu0 %v66
    %1892 = vmatprep.subr.mxu0 0.0
    %1893 = vmatpush1.msra.mxu0 %v67
    %1894 = vmatprep.subr.mxu0 0.0
    %1895 = vmatpush1.msra.mxu0 %v68
    %1896 = vmatprep.subr.mxu0 0.0
    %1897 = vmatpush1.msra.mxu0 %v69
    %1898 = vmatprep.subr.mxu0 0.0
    %1899 = vmatpush1.msra.mxu0 0.0
    %1900 = vmatprep.subr.mxu0 0.0
    %1901 = vmatpush1.msra.mxu0 0.0
    %1902 = vmatprep.subr.mxu0 0.0
    %1903 = vmatpush1.msra.mxu0 0.0
    %1904 = vmatprep.subr.mxu0 0.0
    %1905 = vmatpush1.msra.mxu0 0.0
    %1906 = vmatprep.subr.mxu0 0.0
    %1907 = vmatpush1.msra.mxu0 0.0
    %1908 = vmatprep.subr.mxu0 0.0
    %1909 = vmatpush1.msra.mxu0 0.0
    %1910 = vmatprep.subr.mxu0 0.0
    %1911 = vmatpush1.msra.mxu0 0.0
    %1912 = vmatprep.subr.mxu0 0.0
    %1913 = vmatpush1.msra.mxu0 0.0
    %1914 = vmatprep.subr.mxu0 0.0
    %1915 = vmatpush1.msra.mxu0 0.0
    %1916 = vmatprep.subr.mxu0 0.0
    %1917 = vmatpush1.msra.mxu0 0.0
    %1918 = vmatprep.subr.mxu0 0.0
    %1919 = vmatpush1.msra.mxu0 0.0
    %1920 = vmatprep.subr.mxu0 0.0
    %1921 = vmatpush1.msra.mxu0 0.0
    %1922 = vmatprep.subr.mxu0 0.0
    %1923 = vmatpush1.msra.mxu0 0.0
    %1924 = vmatprep.subr.mxu0 0.0
    %1925 = vmatpush1.msra.mxu0 0.0
    %1926 = vmatprep.subr.mxu0 0.0
    %1927 = vmatpush1.msra.mxu0 0.0
    %1928 = vmatprep.subr.mxu0 0.0
    %1929 = vmatpush1.msra.mxu0 0.0
    %1930 = vmatprep.subr.mxu0 0.0
    %1931 = vmatpush1.msra.mxu0 0.0
    %1932 = vmatprep.subr.mxu0 0.0
    %1933 = vmatpush1.msra.mxu0 0.0
    %1934 = vmatprep.subr.mxu0 0.0
    %1935 = vmatpush1.msra.mxu0 0.0
    %1936 = vmatprep.subr.mxu0 0.0
    %1937 = vmatpush1.msra.mxu0 0.0
    %1938 = vmatprep.subr.mxu0 0.0
    %1939 = vmatpush1.msra.mxu0 0.0
    %1940 = vmatprep.subr.mxu0 0.0
    %1941 = vmatpush1.msra.mxu0 0.0
    %1942 = vmatprep.subr.mxu0 0.0
    %1943 = vmatpush1.msra.mxu0 0.0
    %1944 = vmatprep.subr.mxu0 0.0
    %1945 = vmatpush1.msra.mxu0 0.0
    %1946 = vmatprep.subr.mxu0 0.0
    %1947 = vmatpush1.msra.mxu0 0.0
    %1948 = vmatprep.subr.mxu0 0.0
    %1949 = vmatpush1.msra.mxu0 0.0
    %1950 = vmatprep.subr.mxu0 0.0
    %1951 = vmatpush1.msra.mxu0 0.0
    %1952 = vmatprep.subr.mxu0 0.0
    %1953 = vmatpush1.msra.mxu0 0.0
    %1954 = vmatprep.mubr.f32.mxu0 0.0
    %1955 = vmatmul.mubr.f32.gmra.mrb[0].mxu0 %v1888
    %v1956 = vpop.f32.mrb[0].mxu0
    %v1957 = vadd.f32 %v103, %v1956
    %v1958 = vpop.f32.mrb[0].mxu0
    %1959 = vdwg.mxu0
    %1960 = vmatprep.subr.mxu0 0.0
    %1961 = vmatpush1.msra.mxu0 %v70
    %1962 = vmatprep.subr.mxu0 0.0
    %1963 = vmatpush1.msra.mxu0 %v71
    %1964 = vmatprep.subr.mxu0 0.0
    %1965 = vmatpush1.msra.mxu0 %v72
    %1966 = vmatprep.subr.mxu0 0.0
    %1967 = vmatpush1.msra.mxu0 %v73
    %1968 = vmatprep.subr.mxu0 0.0
    %1969 = vmatpush1.msra.mxu0 0.0
    %1970 = vmatprep.subr.mxu0 0.0
    %1971 = vmatpush1.msra.mxu0 0.0
    %1972 = vmatprep.subr.mxu0 0.0
    %1973 = vmatpush1.msra.mxu0 0.0
    %1974 = vmatprep.subr.mxu0 0.0
    %1975 = vmatpush1.msra.mxu0 0.0
    %1976 = vmatprep.subr.mxu0 0.0
    %1977 = vmatpush1.msra.mxu0 0.0
    %1978 = vmatprep.subr.mxu0 0.0
    %1979 = vmatpush1.msra.mxu0 0.0
    %1980 = vmatprep.subr.mxu0 0.0
    %1981 = vmatpush1.msra.mxu0 0.0
    %1982 = vmatprep.subr.mxu0 0.0
    %1983 = vmatpush1.msra.mxu0 0.0
    %1984 = vmatprep.subr.mxu0 0.0
    %1985 = vmatpush1.msra.mxu0 0.0
    %1986 = vmatprep.subr.mxu0 0.0
    %1987 = vmatpush1.msra.mxu0 0.0
    %1988 = vmatprep.subr.mxu0 0.0
    %1989 = vmatpush1.msra.mxu0 0.0
    %1990 = vmatprep.subr.mxu0 0.0
    %1991 = vmatpush1.msra.mxu0 0.0
    %1992 = vmatprep.subr.mxu0 0.0
    %1993 = vmatpush1.msra.mxu0 0.0
    %1994 = vmatprep.subr.mxu0 0.0
    %1995 = vmatpush1.msra.mxu0 0.0
    %1996 = vmatprep.subr.mxu0 0.0
    %1997 = vmatpush1.msra.mxu0 0.0
    %1998 = vmatprep.subr.mxu0 0.0
    %1999 = vmatpush1.msra.mxu0 0.0
    %2000 = vmatprep.subr.mxu0 0.0
    %2001 = vmatpush1.msra.mxu0 0.0
    %2002 = vmatprep.subr.mxu0 0.0
    %2003 = vmatpush1.msra.mxu0 0.0
    %2004 = vmatprep.subr.mxu0 0.0
    %2005 = vmatpush1.msra.mxu0 0.0
    %2006 = vmatprep.subr.mxu0 0.0
    %2007 = vmatpush1.msra.mxu0 0.0
    %2008 = vmatprep.subr.mxu0 0.0
    %2009 = vmatpush1.msra.mxu0 0.0
    %2010 = vmatprep.subr.mxu0 0.0
    %2011 = vmatpush1.msra.mxu0 0.0
    %2012 = vmatprep.subr.mxu0 0.0
    %2013 = vmatpush1.msra.mxu0 0.0
    %2014 = vmatprep.subr.mxu0 0.0
    %2015 = vmatpush1.msra.mxu0 0.0
    %2016 = vmatprep.subr.mxu0 0.0
    %2017 = vmatpush1.msra.mxu0 0.0
    %2018 = vmatprep.subr.mxu0 0.0
    %2019 = vmatpush1.msra.mxu0 0.0
    %2020 = vmatprep.subr.mxu0 0.0
    %2021 = vmatpush1.msra.mxu0 0.0
    %2022 = vmatprep.subr.mxu0 0.0
    %2023 = vmatpush1.msra.mxu0 0.0
    %2024 = vmatprep.mubr.f32.mxu0 0.0
    %2025 = vmatmul.mubr.f32.gmra.mrb[0].mxu0 %v1888
    %v2026 = vpop.f32.mrb[0].mxu0
    %v2027 = vadd.f32 %v107, %v2026
    %v2028 = vpop.f32.mrb[0].mxu0
    %2029 = vdwg.mxu0
    %v2030 = vld [vmem:[#allocation2] sm:$0xff]
    %v2031 = vld [vmem:[#allocation2 + $0x8] sm:$0xff]
    %v2033 = vsel %vm234, %v46, 0
    %v2036 = vsel %vm234, %v47, 0
    %2038 = vmatprep.subr.mxu0 0.0
    %2039 = vmatpush1.msra.mxu0 %v2030
    %2040 = vmatprep.subr.mxu0 0.0
    %2041 = vmatpush1.msra.mxu0 %v2031
    %2042 = vmatprep.subr.mxu0 0.0
    %2043 = vmatpush1.msra.mxu0 %v1886
    %2044 = vmatprep.subr.mxu0 0.0
    %2045 = vmatpush1.msra.mxu0 0.0
    %2046 = vmatprep.subr.mxu0 0.0
    %2047 = vmatpush1.msra.mxu0 0.0
    %2048 = vmatprep.subr.mxu0 0.0
    %2049 = vmatpush1.msra.mxu0 0.0
    %2050 = vmatprep.subr.mxu0 0.0
    %2051 = vmatpush1.msra.mxu0 0.0
    %2052 = vmatprep.subr.mxu0 0.0
    %2053 = vmatpush1.msra.mxu0 0.0
    %2054 = vmatprep.subr.mxu0 0.0
    %2055 = vmatpush1.msra.mxu0 0.0
    %2056 = vmatprep.subr.mxu0 0.0
    %2057 = vmatpush1.msra.mxu0 0.0
    %2058 = vmatprep.subr.mxu0 0.0
    %2059 = vmatpush1.msra.mxu0 0.0
    %2060 = vmatprep.subr.mxu0 0.0
    %2061 = vmatpush1.msra.mxu0 0.0
    %2062 = vmatprep.subr.mxu0 0.0
    %2063 = vmatpush1.msra.mxu0 0.0
    %2064 = vmatprep.subr.mxu0 0.0
    %2065 = vmatpush1.msra.mxu0 0.0
    %2066 = vmatprep.subr.mxu0 0.0
    %2067 = vmatpush1.msra.mxu0 0.0
    %2068 = vmatprep.subr.mxu0 0.0
    %2069 = vmatpush1.msra.mxu0 0.0
    %2070 = vmatprep.subr.mxu0 0.0
    %2071 = vmatpush1.msra.mxu0 0.0
    %2072 = vmatprep.subr.mxu0 0.0
    %2073 = vmatpush1.msra.mxu0 0.0
    %2074 = vmatprep.subr.mxu0 0.0
    %2075 = vmatpush1.msra.mxu0 0.0
    %2076 = vmatprep.subr.mxu0 0.0
    %2077 = vmatpush1.msra.mxu0 0.0
    %2078 = vmatprep.subr.mxu0 0.0
    %2079 = vmatpush1.msra.mxu0 0.0
    %2080 = vmatprep.subr.mxu0 0.0
    %2081 = vmatpush1.msra.mxu0 0.0
    %2082 = vmatprep.subr.mxu0 0.0
    %2083 = vmatpush1.msra.mxu0 0.0
    %2084 = vmatprep.subr.mxu0 0.0
    %2085 = vmatpush1.msra.mxu0 0.0
    %2086 = vmatprep.subr.mxu0 0.0
    %2087 = vmatpush1.msra.mxu0 0.0
    %2088 = vmatprep.subr.mxu0 0.0
    %2089 = vmatpush1.msra.mxu0 0.0
    %2090 = vmatprep.subr.mxu0 0.0
    %2091 = vmatpush1.msra.mxu0 0.0
    %2092 = vmatprep.subr.mxu0 0.0
    %2093 = vmatpush1.msra.mxu0 0.0
    %2094 = vmatprep.subr.mxu0 0.0
    %2095 = vmatpush1.msra.mxu0 0.0
    %2096 = vmatprep.subr.mxu0 0.0
    %2097 = vmatpush1.msra.mxu0 0.0
    %2098 = vmatprep.subr.mxu0 0.0
    %2099 = vmatpush1.msra.mxu0 0.0
    %2100 = vmatprep.subr.mxu0 0.0
    %2101 = vmatpush1.msra.mxu0 0.0
    %2102 = vmatprep.mubr.f32.mxu0 0.0
    %2103 = vmatmul.mubr.f32.gmra.mrb[0].mxu0 %v2033
    %v2104 = vpop.f32.mrb[0].mxu0
    %v2105 = vadd.f32 0.0, %v2104
    %v2106 = vpop.f32.mrb[0].mxu0
    %2107 = vmatprep.mubr.f32.mxu0 0.0
    %2108 = vmatmul.mubr.f32.gmra.mrb[0].mxu0 %v2036
    %v2109 = vpop.f32.mrb[0].mxu0
    %v2110 = vadd.f32 0.0, %v2109
    %v2111 = vpop.f32.mrb[0].mxu0
    %2112 = vdwg.mxu0
    %v2114 = vsel %vm140, %v2105, 0
    %v2117 = vsel %vm140, %v2110, 0
    %2119 = vmatprep.subr.mxu0 0.0
    %2120 = vmatpush1.msra.mxu0 %v70
    %2121 = vmatprep.subr.mxu0 0.0
    %2122 = vmatpush1.msra.mxu0 %v71
    %2123 = vmatprep.subr.mxu0 0.0
    %2124 = vmatpush1.msra.mxu0 %v72
    %2125 = vmatprep.subr.mxu0 0.0
    %2126 = vmatpush1.msra.mxu0 %v73
    %2127 = vmatprep.subr.mxu0 0.0
    %2128 = vmatpush1.msra.mxu0 0.0
    %2129 = vmatprep.subr.mxu0 0.0
    %2130 = vmatpush1.msra.mxu0 0.0
    %2131 = vmatprep.subr.mxu0 0.0
    %2132 = vmatpush1.msra.mxu0 0.0
    %2133 = vmatprep.subr.mxu0 0.0
    %2134 = vmatpush1.msra.mxu0 0.0
    %2135 = vmatprep.subr.mxu0 0.0
    %2136 = vmatpush1.msra.mxu0 0.0
    %2137 = vmatprep.subr.mxu0 0.0
    %2138 = vmatpush1.msra.mxu0 0.0
    %2139 = vmatprep.subr.mxu0 0.0
    %2140 = vmatpush1.msra.mxu0 0.0
    %2141 = vmatprep.subr.mxu0 0.0
    %2142 = vmatpush1.msra.mxu0 0.0
    %2143 = vmatprep.subr.mxu0 0.0
    %2144 = vmatpush1.msra.mxu0 0.0
    %2145 = vmatprep.subr.mxu0 0.0
    %2146 = vmatpush1.msra.mxu0 0.0
    %2147 = vmatprep.subr.mxu0 0.0
    %2148 = vmatpush1.msra.mxu0 0.0
    %2149 = vmatprep.subr.mxu0 0.0
    %2150 = vmatpush1.msra.mxu0 0.0
    %2151 = vmatprep.subr.mxu0 0.0
    %2152 = vmatpush1.msra.mxu0 0.0
    %2153 = vmatprep.subr.mxu0 0.0
    %2154 = vmatpush1.msra.mxu0 0.0
    %2155 = vmatprep.subr.mxu0 0.0
    %2156 = vmatpush1.msra.mxu0 0.0
    %2157 = vmatprep.subr.mxu0 0.0
    %2158 = vmatpush1.msra.mxu0 0.0
    %2159 = vmatprep.subr.mxu0 0.0
    %2160 = vmatpush1.msra.mxu0 0.0
    %2161 = vmatprep.subr.mxu0 0.0
    %2162 = vmatpush1.msra.mxu0 0.0
    %2163 = vmatprep.subr.mxu0 0.0
    %2164 = vmatpush1.msra.mxu0 0.0
    %2165 = vmatprep.subr.mxu0 0.0
    %2166 = vmatpush1.msra.mxu0 0.0
    %2167 = vmatprep.subr.mxu0 0.0
    %2168 = vmatpush1.msra.mxu0 0.0
    %2169 = vmatprep.subr.mxu0 0.0
    %2170 = vmatpush1.msra.mxu0 0.0
    %2171 = vmatprep.subr.mxu0 0.0
    %2172 = vmatpush1.msra.mxu0 0.0
    %2173 = vmatprep.subr.mxu0 0.0
    %2174 = vmatpush1.msra.mxu0 0.0
    %2175 = vmatprep.subr.mxu0 0.0
    %2176 = vmatpush1.msra.mxu0 0.0
    %2177 = vmatprep.subr.mxu0 0.0
    %2178 = vmatpush1.msra.mxu0 0.0
    %2179 = vmatprep.subr.mxu0 0.0
    %2180 = vmatpush1.msra.mxu0 0.0
    %2181 = vmatprep.subr.mxu0 0.0
    %2182 = vmatpush1.msra.mxu0 0.0
    %2183 = vmatprep.mubr.f32.mxu0 0.0
    %2184 = vmatmul.mubr.f32.gmra.mrb[0].mxu0 %v2114
    %v2185 = vpop.f32.mrb[0].mxu0
    %v2186 = vadd.f32 0.0, %v2185
    %v2187 = vpop.f32.mrb[0].mxu0
    %2188 = vmatprep.mubr.f32.mxu0 0.0
    %2189 = vmatmul.mubr.f32.gmra.mrb[0].mxu0 %v2117
    %v2190 = vpop.f32.mrb[0].mxu0
    %v2191 = vadd.f32 0.0, %v2190
    %v2192 = vpop.f32.mrb[0].mxu0
    %2193 = vdwg.mxu0
    %v2194 = vadd.f32 %v2186, %v107
    %v2195 = vadd.f32 %v2191, %v107
    %v2196 = vmul.f32 %v1957, %v2194
    %v2198 = vsel %vm640, %v2196, 0
    %2200 = vmatprep.subr.mxu0 0.0
    %2201 = vmatpush1.msra.mxu0 %v58
    %2202 = vmatprep.subr.mxu0 0.0
    %2203 = vmatpush1.msra.mxu0 %v59
    %2204 = vmatprep.subr.mxu0 0.0
    %2205 = vmatpush1.msra.mxu0 %v60
    %2206 = vmatprep.subr.mxu0 0.0
    %2207 = vmatpush1.msra.mxu0 %v61
    %2208 = vmatprep.subr.mxu0 0.0
    %2209 = vmatpush1.msra.mxu0 %v62
    %2210 = vmatprep.subr.mxu0 0.0
    %2211 = vmatpush1.msra.mxu0 %v63
    %2212 = vmatprep.subr.mxu0 0.0
    %2213 = vmatpush1.msra.mxu0 %v64
    %2214 = vmatprep.subr.mxu0 0.0
    %2215 = vmatpush1.msra.mxu0 %v65
    %2216 = vmatprep.subr.mxu0 0.0
    %2217 = vmatpush1.msra.mxu0 0.0
    %2218 = vmatprep.subr.mxu0 0.0
    %2219 = vmatpush1.msra.mxu0 0.0
    %2220 = vmatprep.subr.mxu0 0.0
    %2221 = vmatpush1.msra.mxu0 0.0
    %2222 = vmatprep.subr.mxu0 0.0
    %2223 = vmatpush1.msra.mxu0 0.0
    %2224 = vmatprep.subr.mxu0 0.0
    %2225 = vmatpush1.msra.mxu0 0.0
    %2226 = vmatprep.subr.mxu0 0.0
    %2227 = vmatpush1.msra.mxu0 0.0
    %2228 = vmatprep.subr.mxu0 0.0
    %2229 = vmatpush1.msra.mxu0 0.0
    %2230 = vmatprep.subr.mxu0 0.0
    %2231 = vmatpush1.msra.mxu0 0.0
    %2232 = vmatprep.subr.mxu0 0.0
    %2233 = vmatpush1.msra.mxu0 0.0
    %2234 = vmatprep.subr.mxu0 0.0
    %2235 = vmatpush1.msra.mxu0 0.0
    %2236 = vmatprep.subr.mxu0 0.0
    %2237 = vmatpush1.msra.mxu0 0.0
    %2238 = vmatprep.subr.mxu0 0.0
    %2239 = vmatpush1.msra.mxu0 0.0
    %2240 = vmatprep.subr.mxu0 0.0
    %2241 = vmatpush1.msra.mxu0 0.0
    %2242 = vmatprep.subr.mxu0 0.0
    %2243 = vmatpush1.msra.mxu0 0.0
    %2244 = vmatprep.subr.mxu0 0.0
    %2245 = vmatpush1.msra.mxu0 0.0
    %2246 = vmatprep.subr.mxu0 0.0
    %2247 = vmatpush1.msra.mxu0 0.0
    %2248 = vmatprep.subr.mxu0 0.0
    %2249 = vmatpush1.msra.mxu0 0.0
    %2250 = vmatprep.subr.mxu0 0.0
    %2251 = vmatpush1.msra.mxu0 0.0
    %2252 = vmatprep.subr.mxu0 0.0
    %2253 = vmatpush1.msra.mxu0 0.0
    %2254 = vmatprep.subr.mxu0 0.0
    %2255 = vmatpush1.msra.mxu0 0.0
    %2256 = vmatprep.subr.mxu0 0.0
    %2257 = vmatpush1.msra.mxu0 0.0
    %2258 = vmatprep.subr.mxu0 0.0
    %2259 = vmatpush1.msra.mxu0 0.0
    %2260 = vmatprep.subr.mxu0 0.0
    %2261 = vmatpush1.msra.mxu0 0.0
    %2262 = vmatprep.subr.mxu0 0.0
    %2263 = vmatpush1.msra.mxu0 0.0
    %2264 = vmatprep.mubr.f32.mxu0 0.0
    %2265 = vmatmul.mubr.f32.gmra.mrb[0].mxu0 %v2198
    %v2266 = vpop.f32.mrb[0].mxu0
    %v2267 = vadd.f32 0.0, %v2266
    %v2268 = vpop.f32.mrb[0].mxu0
    %2269 = vdwg.mxu0
    %v2270 = vmul.f32 %v2267, 0.5
    %v2271 = vmul.f32 %v1957, %v2195
    %v2273 = vsel %vm640, %v2271, 0
    %2275 = vmatprep.subr.mxu0 0.0
    %2276 = vmatpush1.msra.mxu0 %v58
    %2277 = vmatprep.subr.mxu0 0.0
    %2278 = vmatpush1.msra.mxu0 %v59
    %2279 = vmatprep.subr.mxu0 0.0
    %2280 = vmatpush1.msra.mxu0 %v60
    %2281 = vmatprep.subr.mxu0 0.0
    %2282 = vmatpush1.msra.mxu0 %v61
    %2283 = vmatprep.subr.mxu0 0.0
    %2284 = vmatpush1.msra.mxu0 %v62
    %2285 = vmatprep.subr.mxu0 0.0
    %2286 = vmatpush1.msra.mxu0 %v63
    %2287 = vmatprep.subr.mxu0 0.0
    %2288 = vmatpush1.msra.mxu0 %v64
    %2289 = vmatprep.subr.mxu0 0.0
    %2290 = vmatpush1.msra.mxu0 %v65
    %2291 = vmatprep.subr.mxu0 0.0
    %2292 = vmatpush1.msra.mxu0 0.0
    %2293 = vmatprep.subr.mxu0 0.0
    %2294 = vmatpush1.msra.mxu0 0.0
    %2295 = vmatprep.subr.mxu0 0.0
    %2296 = vmatpush1.msra.mxu0 0.0
    %2297 = vmatprep.subr.mxu0 0.0
    %2298 = vmatpush1.msra.mxu0 0.0
    %2299 = vmatprep.subr.mxu0 0.0
    %2300 = vmatpush1.msra.mxu0 0.0
    %2301 = vmatprep.subr.mxu0 0.0
    %2302 = vmatpush1.msra.mxu0 0.0
    %2303 = vmatprep.subr.mxu0 0.0
    %2304 = vmatpush1.msra.mxu0 0.0
    %2305 = vmatprep.subr.mxu0 0.0
    %2306 = vmatpush1.msra.mxu0 0.0
    %2307 = vmatprep.subr.mxu0 0.0
    %2308 = vmatpush1.msra.mxu0 0.0
    %2309 = vmatprep.subr.mxu0 0.0
    %2310 = vmatpush1.msra.mxu0 0.0
    %2311 = vmatprep.subr.mxu0 0.0
    %2312 = vmatpush1.msra.mxu0 0.0
    %2313 = vmatprep.subr.mxu0 0.0
    %2314 = vmatpush1.msra.mxu0 0.0
    %2315 = vmatprep.subr.mxu0 0.0
    %2316 = vmatpush1.msra.mxu0 0.0
    %2317 = vmatprep.subr.mxu0 0.0
    %2318 = vmatpush1.msra.mxu0 0.0
    %2319 = vmatprep.subr.mxu0 0.0
    %2320 = vmatpush1.msra.mxu0 0.0
    %2321 = vmatprep.subr.mxu0 0.0
    %2322 = vmatpush1.msra.mxu0 0.0
    %2323 = vmatprep.subr.mxu0 0.0
    %2324 = vmatpush1.msra.mxu0 0.0
    %2325 = vmatprep.subr.mxu0 0.0
    %2326 = vmatpush1.msra.mxu0 0.0
    %2327 = vmatprep.subr.mxu0 0.0
    %2328 = vmatpush1.msra.mxu0 0.0
    %2329 = vmatprep.subr.mxu0 0.0
    %2330 = vmatpush1.msra.mxu0 0.0
    %2331 = vmatprep.subr.mxu0 0.0
    %2332 = vmatpush1.msra.mxu0 0.0
    %2333 = vmatprep.subr.mxu0 0.0
    %2334 = vmatpush1.msra.mxu0 0.0
    %2335 = vmatprep.subr.mxu0 0.0
    %2336 = vmatpush1.msra.mxu0 0.0
    %2337 = vmatprep.subr.mxu0 0.0
    %2338 = vmatpush1.msra.mxu0 0.0
    %2339 = vmatprep.mubr.f32.mxu0 0.0
    %2340 = vmatmul.mubr.f32.gmra.mrb[0].mxu0 %v2273
    %v2341 = vpop.f32.mrb[0].mxu0
    %v2342 = vadd.f32 0.0, %v2341
    %v2343 = vpop.f32.mrb[0].mxu0
    %2344 = vdwg.mxu0
    %v2345 = vmul.f32 %v2342, 0.5
    %v2346 = vmul.f32 %v1957, %v2027
    %v2348 = vsel %vm640, %v2346, 0
    %2350 = vmatprep.subr.mxu0 0.0
    %2351 = vmatpush1.msra.mxu0 %v58
    %2352 = vmatprep.subr.mxu0 0.0
    %2353 = vmatpush1.msra.mxu0 %v59
    %2354 = vmatprep.subr.mxu0 0.0
    %2355 = vmatpush1.msra.mxu0 %v60
    %2356 = vmatprep.subr.mxu0 0.0
    %2357 = vmatpush1.msra.mxu0 %v61
    %2358 = vmatprep.subr.mxu0 0.0
    %2359 = vmatpush1.msra.mxu0 %v62
    %2360 = vmatprep.subr.mxu0 0.0
    %2361 = vmatpush1.msra.mxu0 %v63
    %2362 = vmatprep.subr.mxu0 0.0
    %2363 = vmatpush1.msra.mxu0 %v64
    %2364 = vmatprep.subr.mxu0 0.0
    %2365 = vmatpush1.msra.mxu0 %v65
    %2366 = vmatprep.subr.mxu0 0.0
    %2367 = vmatpush1.msra.mxu0 0.0
    %2368 = vmatprep.subr.mxu0 0.0
    %2369 = vmatpush1.msra.mxu0 0.0
    %2370 = vmatprep.subr.mxu0 0.0
    %2371 = vmatpush1.msra.mxu0 0.0
    %2372 = vmatprep.subr.mxu0 0.0
    %2373 = vmatpush1.msra.mxu0 0.0
    %2374 = vmatprep.subr.mxu0 0.0
    %2375 = vmatpush1.msra.mxu0 0.0
    %2376 = vmatprep.subr.mxu0 0.0
    %2377 = vmatpush1.msra.mxu0 0.0
    %2378 = vmatprep.subr.mxu0 0.0
    %2379 = vmatpush1.msra.mxu0 0.0
    %2380 = vmatprep.subr.mxu0 0.0
    %2381 = vmatpush1.msra.mxu0 0.0
    %2382 = vmatprep.subr.mxu0 0.0
    %2383 = vmatpush1.msra.mxu0 0.0
    %2384 = vmatprep.subr.mxu0 0.0
    %2385 = vmatpush1.msra.mxu0 0.0
    %2386 = vmatprep.subr.mxu0 0.0
    %2387 = vmatpush1.msra.mxu0 0.0
    %2388 = vmatprep.subr.mxu0 0.0
    %2389 = vmatpush1.msra.mxu0 0.0
    %2390 = vmatprep.subr.mxu0 0.0
    %2391 = vmatpush1.msra.mxu0 0.0
    %2392 = vmatprep.subr.mxu0 0.0
    %2393 = vmatpush1.msra.mxu0 0.0
    %2394 = vmatprep.subr.mxu0 0.0
    %2395 = vmatpush1.msra.mxu0 0.0
    %2396 = vmatprep.subr.mxu0 0.0
    %2397 = vmatpush1.msra.mxu0 0.0
    %2398 = vmatprep.subr.mxu0 0.0
    %2399 = vmatpush1.msra.mxu0 0.0
    %2400 = vmatprep.subr.mxu0 0.0
    %2401 = vmatpush1.msra.mxu0 0.0
    %2402 = vmatprep.subr.mxu0 0.0
    %2403 = vmatpush1.msra.mxu0 0.0
    %2404 = vmatprep.subr.mxu0 0.0
    %2405 = vmatpush1.msra.mxu0 0.0
    %2406 = vmatprep.subr.mxu0 0.0
    %2407 = vmatpush1.msra.mxu0 0.0
    %2408 = vmatprep.subr.mxu0 0.0
    %2409 = vmatpush1.msra.mxu0 0.0
    %2410 = vmatprep.subr.mxu0 0.0
    %2411 = vmatpush1.msra.mxu0 0.0
    %2412 = vmatprep.subr.mxu0 0.0
    %2413 = vmatpush1.msra.mxu0 0.0
    %2414 = vmatprep.mubr.f32.mxu0 0.0
    %2415 = vmatmul.mubr.f32.gmra.mrb[0].mxu0 %v2348
    %v2416 = vpop.f32.mrb[0].mxu0
    %v2417 = vadd.f32 0.0, %v2416
    %v2418 = vpop.f32.mrb[0].mxu0
    %2419 = vdwg.mxu0
    %v2420 = vmul.f32 %v2417, 0.5
    %v2421 = vmul.f32 %v1957, %v227
    %v2423 = vsel %vm640, %v2421, 0
    %2425 = vmatprep.subr.mxu0 0.0
    %2426 = vmatpush1.msra.mxu0 %v58
    %2427 = vmatprep.subr.mxu0 0.0
    %2428 = vmatpush1.msra.mxu0 %v59
    %2429 = vmatprep.subr.mxu0 0.0
    %2430 = vmatpush1.msra.mxu0 %v60
    %2431 = vmatprep.subr.mxu0 0.0
    %2432 = vmatpush1.msra.mxu0 %v61
    %2433 = vmatprep.subr.mxu0 0.0
    %2434 = vmatpush1.msra.mxu0 %v62
    %2435 = vmatprep.subr.mxu0 0.0
    %2436 = vmatpush1.msra.mxu0 %v63
    %2437 = vmatprep.subr.mxu0 0.0
    %2438 = vmatpush1.msra.mxu0 %v64
    %2439 = vmatprep.subr.mxu0 0.0
    %2440 = vmatpush1.msra.mxu0 %v65
    %2441 = vmatprep.subr.mxu0 0.0
    %2442 = vmatpush1.msra.mxu0 0.0
    %2443 = vmatprep.subr.mxu0 0.0
    %2444 = vmatpush1.msra.mxu0 0.0
    %2445 = vmatprep.subr.mxu0 0.0
    %2446 = vmatpush1.msra.mxu0 0.0
    %2447 = vmatprep.subr.mxu0 0.0
    %2448 = vmatpush1.msra.mxu0 0.0
    %2449 = vmatprep.subr.mxu0 0.0
    %2450 = vmatpush1.msra.mxu0 0.0
    %2451 = vmatprep.subr.mxu0 0.0
    %2452 = vmatpush1.msra.mxu0 0.0
    %2453 = vmatprep.subr.mxu0 0.0
    %2454 = vmatpush1.msra.mxu0 0.0
    %2455 = vmatprep.subr.mxu0 0.0
    %2456 = vmatpush1.msra.mxu0 0.0
    %2457 = vmatprep.subr.mxu0 0.0
    %2458 = vmatpush1.msra.mxu0 0.0
    %2459 = vmatprep.subr.mxu0 0.0
    %2460 = vmatpush1.msra.mxu0 0.0
    %2461 = vmatprep.subr.mxu0 0.0
    %2462 = vmatpush1.msra.mxu0 0.0
    %2463 = vmatprep.subr.mxu0 0.0
    %2464 = vmatpush1.msra.mxu0 0.0
    %2465 = vmatprep.subr.mxu0 0.0
    %2466 = vmatpush1.msra.mxu0 0.0
    %2467 = vmatprep.subr.mxu0 0.0
    %2468 = vmatpush1.msra.mxu0 0.0
    %2469 = vmatprep.subr.mxu0 0.0
    %2470 = vmatpush1.msra.mxu0 0.0
    %2471 = vmatprep.subr.mxu0 0.0
    %2472 = vmatpush1.msra.mxu0 0.0
    %2473 = vmatprep.subr.mxu0 0.0
    %2474 = vmatpush1.msra.mxu0 0.0
    %2475 = vmatprep.subr.mxu0 0.0
    %2476 = vmatpush1.msra.mxu0 0.0
    %2477 = vmatprep.subr.mxu0 0.0
    %2478 = vmatpush1.msra.mxu0 0.0
    %2479 = vmatprep.subr.mxu0 0.0
    %2480 = vmatpush1.msra.mxu0 0.0
    %2481 = vmatprep.subr.mxu0 0.0
    %2482 = vmatpush1.msra.mxu0 0.0
    %2483 = vmatprep.subr.mxu0 0.0
    %2484 = vmatpush1.msra.mxu0 0.0
    %2485 = vmatprep.subr.mxu0 0.0
    %2486 = vmatpush1.msra.mxu0 0.0
    %2487 = vmatprep.subr.mxu0 0.0
    %2488 = vmatpush1.msra.mxu0 0.0
    %2489 = vmatprep.mubr.f32.mxu0 0.0
    %2490 = vmatmul.mubr.f32.gmra.mrb[0].mxu0 %v2423
    %v2491 = vpop.f32.mrb[0].mxu0
    %v2492 = vadd.f32 0.0, %v2491
    %v2493 = vpop.f32.mrb[0].mxu0
    %2494 = vdwg.mxu0
    %v2495 = vmul.f32 %v2492, 0.5
    %v2496 = vmul.f32 %v1957, %v492
    %v2498 = vsel %vm640, %v2496, 0
    %2500 = vmatprep.subr.mxu0 0.0
    %2501 = vmatpush1.msra.mxu0 %v58
    %2502 = vmatprep.subr.mxu0 0.0
    %2503 = vmatpush1.msra.mxu0 %v59
    %2504 = vmatprep.subr.mxu0 0.0
    %2505 = vmatpush1.msra.mxu0 %v60
    %2506 = vmatprep.subr.mxu0 0.0
    %2507 = vmatpush1.msra.mxu0 %v61
    %2508 = vmatprep.subr.mxu0 0.0
    %2509 = vmatpush1.msra.mxu0 %v62
    %2510 = vmatprep.subr.mxu0 0.0
    %2511 = vmatpush1.msra.mxu0 %v63
    %2512 = vmatprep.subr.mxu0 0.0
    %2513 = vmatpush1.msra.mxu0 %v64
    %2514 = vmatprep.subr.mxu0 0.0
    %2515 = vmatpush1.msra.mxu0 %v65
    %2516 = vmatprep.subr.mxu0 0.0
    %2517 = vmatpush1.msra.mxu0 0.0
    %2518 = vmatprep.subr.mxu0 0.0
    %2519 = vmatpush1.msra.mxu0 0.0
    %2520 = vmatprep.subr.mxu0 0.0
    %2521 = vmatpush1.msra.mxu0 0.0
    %2522 = vmatprep.subr.mxu0 0.0
    %2523 = vmatpush1.msra.mxu0 0.0
    %2524 = vmatprep.subr.mxu0 0.0
    %2525 = vmatpush1.msra.mxu0 0.0
    %2526 = vmatprep.subr.mxu0 0.0
    %2527 = vmatpush1.msra.mxu0 0.0
    %2528 = vmatprep.subr.mxu0 0.0
    %2529 = vmatpush1.msra.mxu0 0.0
    %2530 = vmatprep.subr.mxu0 0.0
    %2531 = vmatpush1.msra.mxu0 0.0
    %2532 = vmatprep.subr.mxu0 0.0
    %2533 = vmatpush1.msra.mxu0 0.0
    %2534 = vmatprep.subr.mxu0 0.0
    %2535 = vmatpush1.msra.mxu0 0.0
    %2536 = vmatprep.subr.mxu0 0.0
    %2537 = vmatpush1.msra.mxu0 0.0
    %2538 = vmatprep.subr.mxu0 0.0
    %2539 = vmatpush1.msra.mxu0 0.0
    %2540 = vmatprep.subr.mxu0 0.0
    %2541 = vmatpush1.msra.mxu0 0.0
    %2542 = vmatprep.subr.mxu0 0.0
    %2543 = vmatpush1.msra.mxu0 0.0
    %2544 = vmatprep.subr.mxu0 0.0
    %2545 = vmatpush1.msra.mxu0 0.0
    %2546 = vmatprep.subr.mxu0 0.0
    %2547 = vmatpush1.msra.mxu0 0.0
    %2548 = vmatprep.subr.mxu0 0.0
    %2549 = vmatpush1.msra.mxu0 0.0
    %2550 = vmatprep.subr.mxu0 0.0
    %2551 = vmatpush1.msra.mxu0 0.0
    %2552 = vmatprep.subr.mxu0 0.0
    %2553 = vmatpush1.msra.mxu0 0.0
    %2554 = vmatprep.subr.mxu0 0.0
    %2555 = vmatpush1.msra.mxu0 0.0
    %2556 = vmatprep.subr.mxu0 0.0
    %2557 = vmatpush1.msra.mxu0 0.0
    %2558 = vmatprep.subr.mxu0 0.0
    %2559 = vmatpush1.msra.mxu0 0.0
    %2560 = vmatprep.subr.mxu0 0.0
    %2561 = vmatpush1.msra.mxu0 0.0
    %2562 = vmatprep.subr.mxu0 0.0
    %2563 = vmatpush1.msra.mxu0 0.0
    %2564 = vmatprep.mubr.f32.mxu0 0.0
    %2565 = vmatmul.mubr.f32.gmra.mrb[0].mxu0 %v2498
    %v2566 = vpop.f32.mrb[0].mxu0
    %v2567 = vadd.f32 0.0, %v2566
    %v2568 = vpop.f32.mrb[0].mxu0
    %2569 = vdwg.mxu0
    %v2570 = vmul.f32 %v2567, 0.5
    %v2571 = vmax.f32 %v2270, %v2345
    %v2572 = vmax.f32 %v2571, %v2420
    %v2573 = vmax.f32 %v2572, %v2495
    %v2574 = vmax.f32 %v2573, %v2570
    %v2575 = vsub.f32 %v2270, %v2574
    %v2576 = vmul.f32 %v2575, 1.442695
    %v2577 = vpow.pop %v2576
    %v2578 = vsub.f32 %v2345, %v2574
    %v2579 = vmul.f32 %v2578, 1.442695
    %v2580 = vpow.pop %v2579
    %v2581 = vsub.f32 %v2420, %v2574
    %v2582 = vmul.f32 %v2581, 1.442695
    %v2583 = vpow.pop %v2582
    %v2584 = vsub.f32 %v2495, %v2574
    %v2585 = vmul.f32 %v2584, 1.442695
    %v2586 = vpow.pop %v2585
    %v2587 = vsub.f32 %v2570, %v2574
    %v2588 = vmul.f32 %v2587, 1.442695
    %v2589 = vpow.pop %v2588
    %v2590 = vmul.f32 %v2577, %v2194
    %v2591 = vadd.f32 %v2577, %v2580
    %v2592 = vmul.f32 %v2580, %v2195
    %v2593 = vadd.f32 %v2590, %v2592
    %v2594 = vadd.f32 %v2591, %v2583
    %v2595 = vmul.f32 %v2583, %v2027
    %v2596 = vadd.f32 %v2593, %v2595
    %v2597 = vadd.f32 %v2594, %v2586
    %v2598 = vmul.f32 %v2586, %v227
    %v2599 = vadd.f32 %v2596, %v2598
    %v2600 = vadd.f32 %v2597, %v2589
    %v2601 = vmul.f32 %v2589, %v492
    %v2602 = vadd.f32 %v2599, %v2601
    %v2603 = vrcp.pop %v2600
    %v2604 = vmul.f32 %v2602, %v2603
    %v2606 = vsel %vm640, %v2604, 0
    %2608 = vmatprep.subr.mxu0 0.0
    %2609 = vmatpush1.msra.mxu0 %v74
    %2610 = vmatprep.subr.mxu0 0.0
    %2611 = vmatpush1.msra.mxu0 %v75
    %2612 = vmatprep.subr.mxu0 0.0
    %2613 = vmatpush1.msra.mxu0 %v76
    %2614 = vmatprep.subr.mxu0 0.0
    %2615 = vmatpush1.msra.mxu0 %v77
    %2616 = vmatprep.subr.mxu0 0.0
    %2617 = vmatpush1.msra.mxu0 %v78
    %2618 = vmatprep.subr.mxu0 0.0
    %2619 = vmatpush1.msra.mxu0 %v79
    %2620 = vmatprep.subr.mxu0 0.0
    %2621 = vmatpush1.msra.mxu0 %v80
    %2622 = vmatprep.subr.mxu0 0.0
    %2623 = vmatpush1.msra.mxu0 %v81
    %2624 = vmatprep.subr.mxu0 0.0
    %2625 = vmatpush1.msra.mxu0 0.0
    %2626 = vmatprep.subr.mxu0 0.0
    %2627 = vmatpush1.msra.mxu0 0.0
    %2628 = vmatprep.subr.mxu0 0.0
    %2629 = vmatpush1.msra.mxu0 0.0
    %2630 = vmatprep.subr.mxu0 0.0
    %2631 = vmatpush1.msra.mxu0 0.0
    %2632 = vmatprep.subr.mxu0 0.0
    %2633 = vmatpush1.msra.mxu0 0.0
    %2634 = vmatprep.subr.mxu0 0.0
    %2635 = vmatpush1.msra.mxu0 0.0
    %2636 = vmatprep.subr.mxu0 0.0
    %2637 = vmatpush1.msra.mxu0 0.0
    %2638 = vmatprep.subr.mxu0 0.0
    %2639 = vmatpush1.msra.mxu0 0.0
    %2640 = vmatprep.subr.mxu0 0.0
    %2641 = vmatpush1.msra.mxu0 0.0
    %2642 = vmatprep.subr.mxu0 0.0
    %2643 = vmatpush1.msra.mxu0 0.0
    %2644 = vmatprep.subr.mxu0 0.0
    %2645 = vmatpush1.msra.mxu0 0.0
    %2646 = vmatprep.subr.mxu0 0.0
    %2647 = vmatpush1.msra.mxu0 0.0
    %2648 = vmatprep.subr.mxu0 0.0
    %2649 = vmatpush1.msra.mxu0 0.0
    %2650 = vmatprep.subr.mxu0 0.0
    %2651 = vmatpush1.msra.mxu0 0.0
    %2652 = vmatprep.subr.mxu0 0.0
    %2653 = vmatpush1.msra.mxu0 0.0
    %2654 = vmatprep.subr.mxu0 0.0
    %2655 = vmatpush1.msra.mxu0 0.0
    %2656 = vmatprep.subr.mxu0 0.0
    %2657 = vmatpush1.msra.mxu0 0.0
    %2658 = vmatprep.subr.mxu0 0.0
    %2659 = vmatpush1.msra.mxu0 0.0
    %2660 = vmatprep.subr.mxu0 0.0
    %2661 = vmatpush1.msra.mxu0 0.0
    %2662 = vmatprep.subr.mxu0 0.0
    %2663 = vmatpush1.msra.mxu0 0.0
    %2664 = vmatprep.subr.mxu0 0.0
    %2665 = vmatpush1.msra.mxu0 0.0
    %2666 = vmatprep.subr.mxu0 0.0
    %2667 = vmatpush1.msra.mxu0 0.0
    %2668 = vmatprep.subr.mxu0 0.0
    %2669 = vmatpush1.msra.mxu0 0.0
    %2670 = vmatprep.subr.mxu0 0.0
    %2671 = vmatpush1.msra.mxu0 0.0
    %2672 = vmatprep.mubr.f32.mxu0 0.0
    %2673 = vmatmul.mubr.f32.gmra.mrb[0].mxu0 %v2606
    %v2674 = vpop.f32.mrb[0].mxu0
    %v2675 = vadd.f32 0.0, %v2674
    %v2676 = vpop.f32.mrb[0].mxu0
    %2677 = vdwg.mxu0
    %v2678 = vadd.f32 %v2675, %v111
    %v2679 = vmax.f32 %v2678, 0.0
    %v2680 = vsel %vm140, %v2679, 0.0
    %2681 = vadd.xlane.f32.xlu0 %v2680
    %v2682 = vpop.xlane.xlu0 %2681
    %v2683 = vmul.f32 %v2682, %v1047
    %v2684 = vsub.f32 %v2679, %v2683
    %v2685 = vmul.f32 %v2684, %v2684
    %v2686 = vsel %vm140, %v2685, 0.0
    %2687 = vadd.xlane.f32.xlu0 %v2686
    %v2688 = vpop.xlane.xlu0 %2687
    %v2689 = vmul.f32 %v2688, 0.032258064
    %v2690 = vrsqrt.pop %v2689
    %v2691 = vmul.f32 %v2689, %v2690
    %vm2692 = vcmp.eq.f32.partialorder %v2689, inf
    %v2693 = vsel %vm2692, %v2689, %v2691
    %vm2694 = vcmp.eq.f32.partialorder %v2689, 0.0
    %v2695 = vand.u32 %v2689, 2147483648
    %v2696 = vsel %vm2694, %v2695, %v2693
    %v2697 = vadd.f32 %v2696, 1e-06
    %v2698 = vrcp.pop %v2697
    %v2699 = vmul.f32 %v115, %v2684
    %v2700 = vmul.f32 %v2699, %v2698
    %v2701 = vadd.f32 %v2700, %v119
    %2702 = vst.msk [vmem:[#allocation2 + $0x10] sm:$0xff] %vm140, %v2701
    %v2703 = vld [vmem:[#allocation2] sm:$0xff]
    %v2704 = vld [vmem:[#allocation2 + $0x8] sm:$0xff]
    %v2705 = vld [vmem:[#allocation2 + $0x10] sm:$0xff]
    %v2707 = vsel %vm234, %v48, 0
    %v2710 = vsel %vm234, %v49, 0
    %v2713 = vsel %vm234, %v50, 0
    %v2716 = vsel %vm234, %v51, 0
    %v2719 = vsel %vm234, %v52, 0
    %v2722 = vsel %vm234, %v53, 0
    %v2725 = vsel %vm234, %v54, 0
    %2727 = vmatprep.subr.mxu0 0.0
    %2728 = vmatpush1.msra.mxu0 %v2703
    %2729 = vmatprep.subr.mxu0 0.0
    %2730 = vmatpush1.msra.mxu0 %v2704
    %2731 = vmatprep.subr.mxu0 0.0
    %2732 = vmatpush1.msra.mxu0 %v2705
    %2733 = vmatprep.subr.mxu0 0.0
    %2734 = vmatpush1.msra.mxu0 0.0
    %2735 = vmatprep.subr.mxu0 0.0
    %2736 = vmatpush1.msra.mxu0 0.0
    %2737 = vmatprep.subr.mxu0 0.0
    %2738 = vmatpush1.msra.mxu0 0.0
    %2739 = vmatprep.subr.mxu0 0.0
    %2740 = vmatpush1.msra.mxu0 0.0
    %2741 = vmatprep.subr.mxu0 0.0
    %2742 = vmatpush1.msra.mxu0 0.0
    %2743 = vmatprep.subr.mxu0 0.0
    %2744 = vmatpush1.msra.mxu0 0.0
    %2745 = vmatprep.subr.mxu0 0.0
    %2746 = vmatpush1.msra.mxu0 0.0
    %2747 = vmatprep.subr.mxu0 0.0
    %2748 = vmatpush1.msra.mxu0 0.0
    %2749 = vmatprep.subr.mxu0 0.0
    %2750 = vmatpush1.msra.mxu0 0.0
    %2751 = vmatprep.subr.mxu0 0.0
    %2752 = vmatpush1.msra.mxu0 0.0
    %2753 = vmatprep.subr.mxu0 0.0
    %2754 = vmatpush1.msra.mxu0 0.0
    %2755 = vmatprep.subr.mxu0 0.0
    %2756 = vmatpush1.msra.mxu0 0.0
    %2757 = vmatprep.subr.mxu0 0.0
    %2758 = vmatpush1.msra.mxu0 0.0
    %2759 = vmatprep.subr.mxu0 0.0
    %2760 = vmatpush1.msra.mxu0 0.0
    %2761 = vmatprep.subr.mxu0 0.0
    %2762 = vmatpush1.msra.mxu0 0.0
    %2763 = vmatprep.subr.mxu0 0.0
    %2764 = vmatpush1.msra.mxu0 0.0
    %2765 = vmatprep.subr.mxu0 0.0
    %2766 = vmatpush1.msra.mxu0 0.0
    %2767 = vmatprep.subr.mxu0 0.0
    %2768 = vmatpush1.msra.mxu0 0.0
    %2769 = vmatprep.subr.mxu0 0.0
    %2770 = vmatpush1.msra.mxu0 0.0
    %2771 = vmatprep.subr.mxu0 0.0
    %2772 = vmatpush1.msra.mxu0 0.0
    %2773 = vmatprep.subr.mxu0 0.0
    %2774 = vmatpush1.msra.mxu0 0.0
    %2775 = vmatprep.subr.mxu0 0.0
    %2776 = vmatpush1.msra.mxu0 0.0
    %2777 = vmatprep.subr.mxu0 0.0
    %2778 = vmatpush1.msra.mxu0 0.0
    %2779 = vmatprep.subr.mxu0 0.0
    %2780 = vmatpush1.msra.mxu0 0.0
    %2781 = vmatprep.subr.mxu0 0.0
    %2782 = vmatpush1.msra.mxu0 0.0
    %2783 = vmatprep.subr.mxu0 0.0
    %2784 = vmatpush1.msra.mxu0 0.0
    %2785 = vmatprep.subr.mxu0 0.0
    %2786 = vmatpush1.msra.mxu0 0.0
    %2787 = vmatprep.subr.mxu0 0.0
    %2788 = vmatpush1.msra.mxu0 0.0
    %2789 = vmatprep.subr.mxu0 0.0
    %2790 = vmatpush1.msra.mxu0 0.0
    %2791 = vmatprep.mubr.f32.mxu0 0.0
    %2792 = vmatmul.mubr.f32.gmra.mrb[0].mxu0 %v2707
    %v2793 = vpop.f32.mrb[0].mxu0
    %v2794 = vadd.f32 0.0, %v2793
    %v2795 = vpop.f32.mrb[0].mxu0
    %2796 = vmatprep.mubr.f32.mxu0 0.0
    %2797 = vmatmul.mubr.f32.gmra.mrb[0].mxu0 %v2710
    %v2798 = vpop.f32.mrb[0].mxu0
    %v2799 = vadd.f32 0.0, %v2798
    %v2800 = vpop.f32.mrb[0].mxu0
    %2801 = vmatprep.mubr.f32.mxu0 0.0
    %2802 = vmatmul.mubr.f32.gmra.mrb[0].mxu0 %v2713
    %v2803 = vpop.f32.mrb[0].mxu0
    %v2804 = vadd.f32 0.0, %v2803
    %v2805 = vpop.f32.mrb[0].mxu0
    %2806 = vmatprep.mubr.f32.mxu0 0.0
    %2807 = vmatmul.mubr.f32.gmra.mrb[0].mxu0 %v2716
    %v2808 = vpop.f32.mrb[0].mxu0
    %v2809 = vadd.f32 0.0, %v2808
    %v2810 = vpop.f32.mrb[0].mxu0
    %2811 = vmatprep.mubr.f32.mxu0 0.0
    %2812 = vmatmul.mubr.f32.gmra.mrb[0].mxu0 %v2719
    %v2813 = vpop.f32.mrb[0].mxu0
    %v2814 = vadd.f32 0.0, %v2813
    %v2815 = vpop.f32.mrb[0].mxu0
    %2816 = vmatprep.mubr.f32.mxu0 0.0
    %2817 = vmatmul.mubr.f32.gmra.mrb[0].mxu0 %v2722
    %v2818 = vpop.f32.mrb[0].mxu0
    %v2819 = vadd.f32 0.0, %v2818
    %v2820 = vpop.f32.mrb[0].mxu0
    %2821 = vmatprep.mubr.f32.mxu0 0.0
    %2822 = vmatmul.mubr.f32.gmra.mrb[0].mxu0 %v2725
    %v2823 = vpop.f32.mrb[0].mxu0
    %v2824 = vadd.f32 0.0, %v2823
    %v2825 = vpop.f32.mrb[0].mxu0
    %2826 = vdwg.mxu0
    %v2828 = vsel %vm140, %v2794, 0
    %v2831 = vsel %vm140, %v2799, 0
    %v2834 = vsel %vm140, %v2804, 0
    %v2837 = vsel %vm140, %v2809, 0
    %v2840 = vsel %vm140, %v2814, 0
    %v2843 = vsel %vm140, %v2819, 0
    %v2846 = vsel %vm140, %v2824, 0
    %2848 = vmatprep.subr.mxu0 0.0
    %2849 = vmatpush1.msra.mxu0 %v86
    %2850 = vmatprep.subr.mxu0 0.0
    %2851 = vmatpush1.msra.mxu0 %v87
    %2852 = vmatprep.subr.mxu0 0.0
    %2853 = vmatpush1.msra.mxu0 %v88
    %2854 = vmatprep.subr.mxu0 0.0
    %2855 = vmatpush1.msra.mxu0 %v89
    %2856 = vmatprep.subr.mxu0 0.0
    %2857 = vmatpush1.msra.mxu0 0.0
    %2858 = vmatprep.subr.mxu0 0.0
    %2859 = vmatpush1.msra.mxu0 0.0
    %2860 = vmatprep.subr.mxu0 0.0
    %2861 = vmatpush1.msra.mxu0 0.0
    %2862 = vmatprep.subr.mxu0 0.0
    %2863 = vmatpush1.msra.mxu0 0.0
    %2864 = vmatprep.subr.mxu0 0.0
    %2865 = vmatpush1.msra.mxu0 0.0
    %2866 = vmatprep.subr.mxu0 0.0
    %2867 = vmatpush1.msra.mxu0 0.0
    %2868 = vmatprep.subr.mxu0 0.0
    %2869 = vmatpush1.msra.mxu0 0.0
    %2870 = vmatprep.subr.mxu0 0.0
    %2871 = vmatpush1.msra.mxu0 0.0
    %2872 = vmatprep.subr.mxu0 0.0
    %2873 = vmatpush1.msra.mxu0 0.0
    %2874 = vmatprep.subr.mxu0 0.0
    %2875 = vmatpush1.msra.mxu0 0.0
    %2876 = vmatprep.subr.mxu0 0.0
    %2877 = vmatpush1.msra.mxu0 0.0
    %2878 = vmatprep.subr.mxu0 0.0
    %2879 = vmatpush1.msra.mxu0 0.0
    %2880 = vmatprep.subr.mxu0 0.0
    %2881 = vmatpush1.msra.mxu0 0.0
    %2882 = vmatprep.subr.mxu0 0.0
    %2883 = vmatpush1.msra.mxu0 0.0
    %2884 = vmatprep.subr.mxu0 0.0
    %2885 = vmatpush1.msra.mxu0 0.0
    %2886 = vmatprep.subr.mxu0 0.0
    %2887 = vmatpush1.msra.mxu0 0.0
    %2888 = vmatprep.subr.mxu0 0.0
    %2889 = vmatpush1.msra.mxu0 0.0
    %2890 = vmatprep.subr.mxu0 0.0
    %2891 = vmatpush1.msra.mxu0 0.0
    %2892 = vmatprep.subr.mxu0 0.0
    %2893 = vmatpush1.msra.mxu0 0.0
    %2894 = vmatprep.subr.mxu0 0.0
    %2895 = vmatpush1.msra.mxu0 0.0
    %2896 = vmatprep.subr.mxu0 0.0
    %2897 = vmatpush1.msra.mxu0 0.0
    %2898 = vmatprep.subr.mxu0 0.0
    %2899 = vmatpush1.msra.mxu0 0.0
    %2900 = vmatprep.subr.mxu0 0.0
    %2901 = vmatpush1.msra.mxu0 0.0
    %2902 = vmatprep.subr.mxu0 0.0
    %2903 = vmatpush1.msra.mxu0 0.0
    %2904 = vmatprep.subr.mxu0 0.0
    %2905 = vmatpush1.msra.mxu0 0.0
    %2906 = vmatprep.subr.mxu0 0.0
    %2907 = vmatpush1.msra.mxu0 0.0
    %2908 = vmatprep.subr.mxu0 0.0
    %2909 = vmatpush1.msra.mxu0 0.0
    %2910 = vmatprep.subr.mxu0 0.0
    %2911 = vmatpush1.msra.mxu0 0.0
    %2912 = vmatprep.mubr.f32.mxu0 0.0
    %2913 = vmatmul.mubr.f32.gmra.mrb[0].mxu0 %v2828
    %v2914 = vpop.f32.mrb[0].mxu0
    %v2915 = vadd.f32 %v139, %v2914
    %v2916 = vpop.f32.mrb[0].mxu0
    %2917 = vmatprep.mubr.f32.mxu0 0.0
    %2918 = vmatmul.mubr.f32.gmra.mrb[0].mxu0 %v2831
    %v2919 = vpop.f32.mrb[0].mxu0
    %v2920 = vadd.f32 %v139, %v2919
    %v2921 = vpop.f32.mrb[0].mxu0
    %2922 = vmatprep.mubr.f32.mxu0 0.0
    %2923 = vmatmul.mubr.f32.gmra.mrb[0].mxu0 %v2834
    %v2924 = vpop.f32.mrb[0].mxu0
    %v2925 = vadd.f32 %v139, %v2924
    %v2926 = vpop.f32.mrb[0].mxu0
    %2927 = vmatprep.mubr.f32.mxu0 0.0
    %2928 = vmatmul.mubr.f32.gmra.mrb[0].mxu0 %v2837
    %v2929 = vpop.f32.mrb[0].mxu0
    %v2930 = vadd.f32 %v139, %v2929
    %v2931 = vpop.f32.mrb[0].mxu0
    %2932 = vmatprep.mubr.f32.mxu0 0.0
    %2933 = vmatmul.mubr.f32.gmra.mrb[0].mxu0 %v2840
    %v2934 = vpop.f32.mrb[0].mxu0
    %v2935 = vadd.f32 %v139, %v2934
    %v2936 = vpop.f32.mrb[0].mxu0
    %2937 = vmatprep.mubr.f32.mxu0 0.0
    %2938 = vmatmul.mubr.f32.gmra.mrb[0].mxu0 %v2843
    %v2939 = vpop.f32.mrb[0].mxu0
    %v2940 = vadd.f32 %v139, %v2939
    %v2941 = vpop.f32.mrb[0].mxu0
    %2942 = vmatprep.mubr.f32.mxu0 0.0
    %2943 = vmatmul.mubr.f32.gmra.mrb[0].mxu0 %v2846
    %v2944 = vpop.f32.mrb[0].mxu0
    %v2945 = vadd.f32 %v139, %v2944
    %v2946 = vpop.f32.mrb[0].mxu0
    %2947 = vdwg.mxu0
    %v2949 = vsel %vm140, %v315, 0
    %2951 = vmatprep.subr.mxu0 0.0
    %2952 = vmatpush1.msra.mxu0 %v82
    %2953 = vmatprep.subr.mxu0 0.0
    %2954 = vmatpush1.msra.mxu0 %v83
    %2955 = vmatprep.subr.mxu0 0.0
    %2956 = vmatpush1.msra.mxu0 %v84
    %2957 = vmatprep.subr.mxu0 0.0
    %2958 = vmatpush1.msra.mxu0 %v85
    %2959 = vmatprep.subr.mxu0 0.0
    %2960 = vmatpush1.msra.mxu0 0.0
    %2961 = vmatprep.subr.mxu0 0.0
    %2962 = vmatpush1.msra.mxu0 0.0
    %2963 = vmatprep.subr.mxu0 0.0
    %2964 = vmatpush1.msra.mxu0 0.0
    %2965 = vmatprep.subr.mxu0 0.0
    %2966 = vmatpush1.msra.mxu0 0.0
    %2967 = vmatprep.subr.mxu0 0.0
    %2968 = vmatpush1.msra.mxu0 0.0
    %2969 = vmatprep.subr.mxu0 0.0
    %2970 = vmatpush1.msra.mxu0 0.0
    %2971 = vmatprep.subr.mxu0 0.0
    %2972 = vmatpush1.msra.mxu0 0.0
    %2973 = vmatprep.subr.mxu0 0.0
    %2974 = vmatpush1.msra.mxu0 0.0
    %2975 = vmatprep.subr.mxu0 0.0
    %2976 = vmatpush1.msra.mxu0 0.0
    %2977 = vmatprep.subr.mxu0 0.0
    %2978 = vmatpush1.msra.mxu0 0.0
    %2979 = vmatprep.subr.mxu0 0.0
    %2980 = vmatpush1.msra.mxu0 0.0
    %2981 = vmatprep.subr.mxu0 0.0
    %2982 = vmatpush1.msra.mxu0 0.0
    %2983 = vmatprep.subr.mxu0 0.0
    %2984 = vmatpush1.msra.mxu0 0.0
    %2985 = vmatprep.subr.mxu0 0.0
    %2986 = vmatpush1.msra.mxu0 0.0
    %2987 = vmatprep.subr.mxu0 0.0
    %2988 = vmatpush1.msra.mxu0 0.0
    %2989 = vmatprep.subr.mxu0 0.0
    %2990 = vmatpush1.msra.mxu0 0.0
    %2991 = vmatprep.subr.mxu0 0.0
    %2992 = vmatpush1.msra.mxu0 0.0
    %2993 = vmatprep.subr.mxu0 0.0
    %2994 = vmatpush1.msra.mxu0 0.0
    %2995 = vmatprep.subr.mxu0 0.0
    %2996 = vmatpush1.msra.mxu0 0.0
    %2997 = vmatprep.subr.mxu0 0.0
    %2998 = vmatpush1.msra.mxu0 0.0
    %2999 = vmatprep.subr.mxu0 0.0
    %3000 = vmatpush1.msra.mxu0 0.0
    %3001 = vmatprep.subr.mxu0 0.0
    %3002 = vmatpush1.msra.mxu0 0.0
    %3003 = vmatprep.subr.mxu0 0.0
    %3004 = vmatpush1.msra.mxu0 0.0
    %3005 = vmatprep.subr.mxu0 0.0
    %3006 = vmatpush1.msra.mxu0 0.0
    %3007 = vmatprep.subr.mxu0 0.0
    %3008 = vmatpush1.msra.mxu0 0.0
    %3009 = vmatprep.subr.mxu0 0.0
    %3010 = vmatpush1.msra.mxu0 0.0
    %3011 = vmatprep.subr.mxu0 0.0
    %3012 = vmatpush1.msra.mxu0 0.0
    %3013 = vmatprep.subr.mxu0 0.0
    %3014 = vmatpush1.msra.mxu0 0.0
    %3015 = vmatprep.mubr.f32.mxu0 0.0
    %3016 = vmatmul.mubr.f32.gmra.mrb[0].mxu0 %v2949
    %v3017 = vpop.f32.mrb[0].mxu0
    %v3018 = vadd.f32 %v123, %v3017
    %v3019 = vpop.f32.mrb[0].mxu0
    %3020 = vdwg.mxu0
    %v3021 = vmul.f32 %v3018, %v2915
    %v3023 = vsel %vm640, %v3021, 0
    %3025 = vmatprep.subr.mxu0 0.0
    %3026 = vmatpush1.msra.mxu0 %v58
    %3027 = vmatprep.subr.mxu0 0.0
    %3028 = vmatpush1.msra.mxu0 %v59
    %3029 = vmatprep.subr.mxu0 0.0
    %3030 = vmatpush1.msra.mxu0 %v60
    %3031 = vmatprep.subr.mxu0 0.0
    %3032 = vmatpush1.msra.mxu0 %v61
    %3033 = vmatprep.subr.mxu0 0.0
    %3034 = vmatpush1.msra.mxu0 %v62
    %3035 = vmatprep.subr.mxu0 0.0
    %3036 = vmatpush1.msra.mxu0 %v63
    %3037 = vmatprep.subr.mxu0 0.0
    %3038 = vmatpush1.msra.mxu0 %v64
    %3039 = vmatprep.subr.mxu0 0.0
    %3040 = vmatpush1.msra.mxu0 %v65
    %3041 = vmatprep.subr.mxu0 0.0
    %3042 = vmatpush1.msra.mxu0 0.0
    %3043 = vmatprep.subr.mxu0 0.0
    %3044 = vmatpush1.msra.mxu0 0.0
    %3045 = vmatprep.subr.mxu0 0.0
    %3046 = vmatpush1.msra.mxu0 0.0
    %3047 = vmatprep.subr.mxu0 0.0
    %3048 = vmatpush1.msra.mxu0 0.0
    %3049 = vmatprep.subr.mxu0 0.0
    %3050 = vmatpush1.msra.mxu0 0.0
    %3051 = vmatprep.subr.mxu0 0.0
    %3052 = vmatpush1.msra.mxu0 0.0
    %3053 = vmatprep.subr.mxu0 0.0
    %3054 = vmatpush1.msra.mxu0 0.0
    %3055 = vmatprep.subr.mxu0 0.0
    %3056 = vmatpush1.msra.mxu0 0.0
    %3057 = vmatprep.subr.mxu0 0.0
    %3058 = vmatpush1.msra.mxu0 0.0
    %3059 = vmatprep.subr.mxu0 0.0
    %3060 = vmatpush1.msra.mxu0 0.0
    %3061 = vmatprep.subr.mxu0 0.0
    %3062 = vmatpush1.msra.mxu0 0.0
    %3063 = vmatprep.subr.mxu0 0.0
    %3064 = vmatpush1.msra.mxu0 0.0
    %3065 = vmatprep.subr.mxu0 0.0
    %3066 = vmatpush1.msra.mxu0 0.0
    %3067 = vmatprep.subr.mxu0 0.0
    %3068 = vmatpush1.msra.mxu0 0.0
    %3069 = vmatprep.subr.mxu0 0.0
    %3070 = vmatpush1.msra.mxu0 0.0
    %3071 = vmatprep.subr.mxu0 0.0
    %3072 = vmatpush1.msra.mxu0 0.0
    %3073 = vmatprep.subr.mxu0 0.0
    %3074 = vmatpush1.msra.mxu0 0.0
    %3075 = vmatprep.subr.mxu0 0.0
    %3076 = vmatpush1.msra.mxu0 0.0
    %3077 = vmatprep.subr.mxu0 0.0
    %3078 = vmatpush1.msra.mxu0 0.0
    %3079 = vmatprep.subr.mxu0 0.0
    %3080 = vmatpush1.msra.mxu0 0.0
    %3081 = vmatprep.subr.mxu0 0.0
    %3082 = vmatpush1.msra.mxu0 0.0
    %3083 = vmatprep.subr.mxu0 0.0
    %3084 = vmatpush1.msra.mxu0 0.0
    %3085 = vmatprep.subr.mxu0 0.0
    %3086 = vmatpush1.msra.mxu0 0.0
    %3087 = vmatprep.subr.mxu0 0.0
    %3088 = vmatpush1.msra.mxu0 0.0
    %3089 = vmatprep.mubr.f32.mxu0 0.0
    %3090 = vmatmul.mubr.f32.gmra.mrb[0].mxu0 %v3023
    %v3091 = vpop.f32.mrb[0].mxu0
    %v3092 = vadd.f32 0.0, %v3091
    %v3093 = vpop.f32.mrb[0].mxu0
    %3094 = vdwg.mxu0
    %v3095 = vmul.f32 %v3092, 0.5
    %v3096 = vmul.f32 %v3018, %v2920
    %v3098 = vsel %vm640, %v3096, 0
    %3100 = vmatprep.subr.mxu0 0.0
    %3101 = vmatpush1.msra.mxu0 %v58
    %3102 = vmatprep.subr.mxu0 0.0
    %3103 = vmatpush1.msra.mxu0 %v59
    %3104 = vmatprep.subr.mxu0 0.0
    %3105 = vmatpush1.msra.mxu0 %v60
    %3106 = vmatprep.subr.mxu0 0.0
    %3107 = vmatpush1.msra.mxu0 %v61
    %3108 = vmatprep.subr.mxu0 0.0
    %3109 = vmatpush1.msra.mxu0 %v62
    %3110 = vmatprep.subr.mxu0 0.0
    %3111 = vmatpush1.msra.mxu0 %v63
    %3112 = vmatprep.subr.mxu0 0.0
    %3113 = vmatpush1.msra.mxu0 %v64
    %3114 = vmatprep.subr.mxu0 0.0
    %3115 = vmatpush1.msra.mxu0 %v65
    %3116 = vmatprep.subr.mxu0 0.0
    %3117 = vmatpush1.msra.mxu0 0.0
    %3118 = vmatprep.subr.mxu0 0.0
    %3119 = vmatpush1.msra.mxu0 0.0
    %3120 = vmatprep.subr.mxu0 0.0
    %3121 = vmatpush1.msra.mxu0 0.0
    %3122 = vmatprep.subr.mxu0 0.0
    %3123 = vmatpush1.msra.mxu0 0.0
    %3124 = vmatprep.subr.mxu0 0.0
    %3125 = vmatpush1.msra.mxu0 0.0
    %3126 = vmatprep.subr.mxu0 0.0
    %3127 = vmatpush1.msra.mxu0 0.0
    %3128 = vmatprep.subr.mxu0 0.0
    %3129 = vmatpush1.msra.mxu0 0.0
    %3130 = vmatprep.subr.mxu0 0.0
    %3131 = vmatpush1.msra.mxu0 0.0
    %3132 = vmatprep.subr.mxu0 0.0
    %3133 = vmatpush1.msra.mxu0 0.0
    %3134 = vmatprep.subr.mxu0 0.0
    %3135 = vmatpush1.msra.mxu0 0.0
    %3136 = vmatprep.subr.mxu0 0.0
    %3137 = vmatpush1.msra.mxu0 0.0
    %3138 = vmatprep.subr.mxu0 0.0
    %3139 = vmatpush1.msra.mxu0 0.0
    %3140 = vmatprep.subr.mxu0 0.0
    %3141 = vmatpush1.msra.mxu0 0.0
    %3142 = vmatprep.subr.mxu0 0.0
    %3143 = vmatpush1.msra.mxu0 0.0
    %3144 = vmatprep.subr.mxu0 0.0
    %3145 = vmatpush1.msra.mxu0 0.0
    %3146 = vmatprep.subr.mxu0 0.0
    %3147 = vmatpush1.msra.mxu0 0.0
    %3148 = vmatprep.subr.mxu0 0.0
    %3149 = vmatpush1.msra.mxu0 0.0
    %3150 = vmatprep.subr.mxu0 0.0
    %3151 = vmatpush1.msra.mxu0 0.0
    %3152 = vmatprep.subr.mxu0 0.0
    %3153 = vmatpush1.msra.mxu0 0.0
    %3154 = vmatprep.subr.mxu0 0.0
    %3155 = vmatpush1.msra.mxu0 0.0
    %3156 = vmatprep.subr.mxu0 0.0
    %3157 = vmatpush1.msra.mxu0 0.0
    %3158 = vmatprep.subr.mxu0 0.0
    %3159 = vmatpush1.msra.mxu0 0.0
    %3160 = vmatprep.subr.mxu0 0.0
    %3161 = vmatpush1.msra.mxu0 0.0
    %3162 = vmatprep.subr.mxu0 0.0
    %3163 = vmatpush1.msra.mxu0 0.0
    %3164 = vmatprep.mubr.f32.mxu0 0.0
    %3165 = vmatmul.mubr.f32.gmra.mrb[0].mxu0 %v3098
    %v3166 = vpop.f32.mrb[0].mxu0
    %v3167 = vadd.f32 0.0, %v3166
    %v3168 = vpop.f32.mrb[0].mxu0
    %3169 = vdwg.mxu0
    %v3170 = vmul.f32 %v3167, 0.5
    %v3171 = vmul.f32 %v3018, %v2925
    %v3173 = vsel %vm640, %v3171, 0
    %3175 = vmatprep.subr.mxu0 0.0
    %3176 = vmatpush1.msra.mxu0 %v58
    %3177 = vmatprep.subr.mxu0 0.0
    %3178 = vmatpush1.msra.mxu0 %v59
    %3179 = vmatprep.subr.mxu0 0.0
    %3180 = vmatpush1.msra.mxu0 %v60
    %3181 = vmatprep.subr.mxu0 0.0
    %3182 = vmatpush1.msra.mxu0 %v61
    %3183 = vmatprep.subr.mxu0 0.0
    %3184 = vmatpush1.msra.mxu0 %v62
    %3185 = vmatprep.subr.mxu0 0.0
    %3186 = vmatpush1.msra.mxu0 %v63
    %3187 = vmatprep.subr.mxu0 0.0
    %3188 = vmatpush1.msra.mxu0 %v64
    %3189 = vmatprep.subr.mxu0 0.0
    %3190 = vmatpush1.msra.mxu0 %v65
    %3191 = vmatprep.subr.mxu0 0.0
    %3192 = vmatpush1.msra.mxu0 0.0
    %3193 = vmatprep.subr.mxu0 0.0
    %3194 = vmatpush1.msra.mxu0 0.0
    %3195 = vmatprep.subr.mxu0 0.0
    %3196 = vmatpush1.msra.mxu0 0.0
    %3197 = vmatprep.subr.mxu0 0.0
    %3198 = vmatpush1.msra.mxu0 0.0
    %3199 = vmatprep.subr.mxu0 0.0
    %3200 = vmatpush1.msra.mxu0 0.0
    %3201 = vmatprep.subr.mxu0 0.0
    %3202 = vmatpush1.msra.mxu0 0.0
    %3203 = vmatprep.subr.mxu0 0.0
    %3204 = vmatpush1.msra.mxu0 0.0
    %3205 = vmatprep.subr.mxu0 0.0
    %3206 = vmatpush1.msra.mxu0 0.0
    %3207 = vmatprep.subr.mxu0 0.0
    %3208 = vmatpush1.msra.mxu0 0.0
    %3209 = vmatprep.subr.mxu0 0.0
    %3210 = vmatpush1.msra.mxu0 0.0
    %3211 = vmatprep.subr.mxu0 0.0
    %3212 = vmatpush1.msra.mxu0 0.0
    %3213 = vmatprep.subr.mxu0 0.0
    %3214 = vmatpush1.msra.mxu0 0.0
    %3215 = vmatprep.subr.mxu0 0.0
    %3216 = vmatpush1.msra.mxu0 0.0
    %3217 = vmatprep.subr.mxu0 0.0
    %3218 = vmatpush1.msra.mxu0 0.0
    %3219 = vmatprep.subr.mxu0 0.0
    %3220 = vmatpush1.msra.mxu0 0.0
    %3221 = vmatprep.subr.mxu0 0.0
    %3222 = vmatpush1.msra.mxu0 0.0
    %3223 = vmatprep.subr.mxu0 0.0
    %3224 = vmatpush1.msra.mxu0 0.0
    %3225 = vmatprep.subr.mxu0 0.0
    %3226 = vmatpush1.msra.mxu0 0.0
    %3227 = vmatprep.subr.mxu0 0.0
    %3228 = vmatpush1.msra.mxu0 0.0
    %3229 = vmatprep.subr.mxu0 0.0
    %3230 = vmatpush1.msra.mxu0 0.0
    %3231 = vmatprep.subr.mxu0 0.0
    %3232 = vmatpush1.msra.mxu0 0.0
    %3233 = vmatprep.subr.mxu0 0.0
    %3234 = vmatpush1.msra.mxu0 0.0
    %3235 = vmatprep.subr.mxu0 0.0
    %3236 = vmatpush1.msra.mxu0 0.0
    %3237 = vmatprep.subr.mxu0 0.0
    %3238 = vmatpush1.msra.mxu0 0.0
    %3239 = vmatprep.mubr.f32.mxu0 0.0
    %3240 = vmatmul.mubr.f32.gmra.mrb[0].mxu0 %v3173
    %v3241 = vpop.f32.mrb[0].mxu0
    %v3242 = vadd.f32 0.0, %v3241
    %v3243 = vpop.f32.mrb[0].mxu0
    %3244 = vdwg.mxu0
    %v3245 = vmul.f32 %v3242, 0.5
    %v3246 = vmul.f32 %v3018, %v2930
    %v3248 = vsel %vm640, %v3246, 0
    %3250 = vmatprep.subr.mxu0 0.0
    %3251 = vmatpush1.msra.mxu0 %v58
    %3252 = vmatprep.subr.mxu0 0.0
    %3253 = vmatpush1.msra.mxu0 %v59
    %3254 = vmatprep.subr.mxu0 0.0
    %3255 = vmatpush1.msra.mxu0 %v60
    %3256 = vmatprep.subr.mxu0 0.0
    %3257 = vmatpush1.msra.mxu0 %v61
    %3258 = vmatprep.subr.mxu0 0.0
    %3259 = vmatpush1.msra.mxu0 %v62
    %3260 = vmatprep.subr.mxu0 0.0
    %3261 = vmatpush1.msra.mxu0 %v63
    %3262 = vmatprep.subr.mxu0 0.0
    %3263 = vmatpush1.msra.mxu0 %v64
    %3264 = vmatprep.subr.mxu0 0.0
    %3265 = vmatpush1.msra.mxu0 %v65
    %3266 = vmatprep.subr.mxu0 0.0
    %3267 = vmatpush1.msra.mxu0 0.0
    %3268 = vmatprep.subr.mxu0 0.0
    %3269 = vmatpush1.msra.mxu0 0.0
    %3270 = vmatprep.subr.mxu0 0.0
    %3271 = vmatpush1.msra.mxu0 0.0
    %3272 = vmatprep.subr.mxu0 0.0
    %3273 = vmatpush1.msra.mxu0 0.0
    %3274 = vmatprep.subr.mxu0 0.0
    %3275 = vmatpush1.msra.mxu0 0.0
    %3276 = vmatprep.subr.mxu0 0.0
    %3277 = vmatpush1.msra.mxu0 0.0
    %3278 = vmatprep.subr.mxu0 0.0
    %3279 = vmatpush1.msra.mxu0 0.0
    %3280 = vmatprep.subr.mxu0 0.0
    %3281 = vmatpush1.msra.mxu0 0.0
    %3282 = vmatprep.subr.mxu0 0.0
    %3283 = vmatpush1.msra.mxu0 0.0
    %3284 = vmatprep.subr.mxu0 0.0
    %3285 = vmatpush1.msra.mxu0 0.0
    %3286 = vmatprep.subr.mxu0 0.0
    %3287 = vmatpush1.msra.mxu0 0.0
    %3288 = vmatprep.subr.mxu0 0.0
    %3289 = vmatpush1.msra.mxu0 0.0
    %3290 = vmatprep.subr.mxu0 0.0
    %3291 = vmatpush1.msra.mxu0 0.0
    %3292 = vmatprep.subr.mxu0 0.0
    %3293 = vmatpush1.msra.mxu0 0.0
    %3294 = vmatprep.subr.mxu0 0.0
    %3295 = vmatpush1.msra.mxu0 0.0
    %3296 = vmatprep.subr.mxu0 0.0
    %3297 = vmatpush1.msra.mxu0 0.0
    %3298 = vmatprep.subr.mxu0 0.0
    %3299 = vmatpush1.msra.mxu0 0.0
    %3300 = vmatprep.subr.mxu0 0.0
    %3301 = vmatpush1.msra.mxu0 0.0
    %3302 = vmatprep.subr.mxu0 0.0
    %3303 = vmatpush1.msra.mxu0 0.0
    %3304 = vmatprep.subr.mxu0 0.0
    %3305 = vmatpush1.msra.mxu0 0.0
    %3306 = vmatprep.subr.mxu0 0.0
    %3307 = vmatpush1.msra.mxu0 0.0
    %3308 = vmatprep.subr.mxu0 0.0
    %3309 = vmatpush1.msra.mxu0 0.0
    %3310 = vmatprep.subr.mxu0 0.0
    %3311 = vmatpush1.msra.mxu0 0.0
    %3312 = vmatprep.subr.mxu0 0.0
    %3313 = vmatpush1.msra.mxu0 0.0
    %3314 = vmatprep.mubr.f32.mxu0 0.0
    %3315 = vmatmul.mubr.f32.gmra.mrb[0].mxu0 %v3248
    %v3316 = vpop.f32.mrb[0].mxu0
    %v3317 = vadd.f32 0.0, %v3316
    %v3318 = vpop.f32.mrb[0].mxu0
    %3319 = vdwg.mxu0
    %v3320 = vmul.f32 %v3317, 0.5
    %v3321 = vmul.f32 %v3018, %v2935
    %v3323 = vsel %vm640, %v3321, 0
    %3325 = vmatprep.subr.mxu0 0.0
    %3326 = vmatpush1.msra.mxu0 %v58
    %3327 = vmatprep.subr.mxu0 0.0
    %3328 = vmatpush1.msra.mxu0 %v59
    %3329 = vmatprep.subr.mxu0 0.0
    %3330 = vmatpush1.msra.mxu0 %v60
    %3331 = vmatprep.subr.mxu0 0.0
    %3332 = vmatpush1.msra.mxu0 %v61
    %3333 = vmatprep.subr.mxu0 0.0
    %3334 = vmatpush1.msra.mxu0 %v62
    %3335 = vmatprep.subr.mxu0 0.0
    %3336 = vmatpush1.msra.mxu0 %v63
    %3337 = vmatprep.subr.mxu0 0.0
    %3338 = vmatpush1.msra.mxu0 %v64
    %3339 = vmatprep.subr.mxu0 0.0
    %3340 = vmatpush1.msra.mxu0 %v65
    %3341 = vmatprep.subr.mxu0 0.0
    %3342 = vmatpush1.msra.mxu0 0.0
    %3343 = vmatprep.subr.mxu0 0.0
    %3344 = vmatpush1.msra.mxu0 0.0
    %3345 = vmatprep.subr.mxu0 0.0
    %3346 = vmatpush1.msra.mxu0 0.0
    %3347 = vmatprep.subr.mxu0 0.0
    %3348 = vmatpush1.msra.mxu0 0.0
    %3349 = vmatprep.subr.mxu0 0.0
    %3350 = vmatpush1.msra.mxu0 0.0
    %3351 = vmatprep.subr.mxu0 0.0
    %3352 = vmatpush1.msra.mxu0 0.0
    %3353 = vmatprep.subr.mxu0 0.0
    %3354 = vmatpush1.msra.mxu0 0.0
    %3355 = vmatprep.subr.mxu0 0.0
    %3356 = vmatpush1.msra.mxu0 0.0
    %3357 = vmatprep.subr.mxu0 0.0
    %3358 = vmatpush1.msra.mxu0 0.0
    %3359 = vmatprep.subr.mxu0 0.0
    %3360 = vmatpush1.msra.mxu0 0.0
    %3361 = vmatprep.subr.mxu0 0.0
    %3362 = vmatpush1.msra.mxu0 0.0
    %3363 = vmatprep.subr.mxu0 0.0
    %3364 = vmatpush1.msra.mxu0 0.0
    %3365 = vmatprep.subr.mxu0 0.0
    %3366 = vmatpush1.msra.mxu0 0.0
    %3367 = vmatprep.subr.mxu0 0.0
    %3368 = vmatpush1.msra.mxu0 0.0
    %3369 = vmatprep.subr.mxu0 0.0
    %3370 = vmatpush1.msra.mxu0 0.0
    %3371 = vmatprep.subr.mxu0 0.0
    %3372 = vmatpush1.msra.mxu0 0.0
    %3373 = vmatprep.subr.mxu0 0.0
    %3374 = vmatpush1.msra.mxu0 0.0
    %3375 = vmatprep.subr.mxu0 0.0
    %3376 = vmatpush1.msra.mxu0 0.0
    %3377 = vmatprep.subr.mxu0 0.0
    %3378 = vmatpush1.msra.mxu0 0.0
    %3379 = vmatprep.subr.mxu0 0.0
    %3380 = vmatpush1.msra.mxu0 0.0
    %3381 = vmatprep.subr.mxu0 0.0
    %3382 = vmatpush1.msra.mxu0 0.0
    %3383 = vmatprep.subr.mxu0 0.0
    %3384 = vmatpush1.msra.mxu0 0.0
    %3385 = vmatprep.subr.mxu0 0.0
    %3386 = vmatpush1.msra.mxu0 0.0
    %3387 = vmatprep.subr.mxu0 0.0
    %3388 = vmatpush1.msra.mxu0 0.0
    %3389 = vmatprep.mubr.f32.mxu0 0.0
    %3390 = vmatmul.mubr.f32.gmra.mrb[0].mxu0 %v3323
    %v3391 = vpop.f32.mrb[0].mxu0
    %v3392 = vadd.f32 0.0, %v3391
    %v3393 = vpop.f32.mrb[0].mxu0
    %3394 = vdwg.mxu0
    %v3395 = vmul.f32 %v3392, 0.5
    %v3396 = vmul.f32 %v3018, %v2940
    %v3398 = vsel %vm640, %v3396, 0
    %3400 = vmatprep.subr.mxu0 0.0
    %3401 = vmatpush1.msra.mxu0 %v58
    %3402 = vmatprep.subr.mxu0 0.0
    %3403 = vmatpush1.msra.mxu0 %v59
    %3404 = vmatprep.subr.mxu0 0.0
    %3405 = vmatpush1.msra.mxu0 %v60
    %3406 = vmatprep.subr.mxu0 0.0
    %3407 = vmatpush1.msra.mxu0 %v61
    %3408 = vmatprep.subr.mxu0 0.0
    %3409 = vmatpush1.msra.mxu0 %v62
    %3410 = vmatprep.subr.mxu0 0.0
    %3411 = vmatpush1.msra.mxu0 %v63
    %3412 = vmatprep.subr.mxu0 0.0
    %3413 = vmatpush1.msra.mxu0 %v64
    %3414 = vmatprep.subr.mxu0 0.0
    %3415 = vmatpush1.msra.mxu0 %v65
    %3416 = vmatprep.subr.mxu0 0.0
    %3417 = vmatpush1.msra.mxu0 0.0
    %3418 = vmatprep.subr.mxu0 0.0
    %3419 = vmatpush1.msra.mxu0 0.0
    %3420 = vmatprep.subr.mxu0 0.0
    %3421 = vmatpush1.msra.mxu0 0.0
    %3422 = vmatprep.subr.mxu0 0.0
    %3423 = vmatpush1.msra.mxu0 0.0
    %3424 = vmatprep.subr.mxu0 0.0
    %3425 = vmatpush1.msra.mxu0 0.0
    %3426 = vmatprep.subr.mxu0 0.0
    %3427 = vmatpush1.msra.mxu0 0.0
    %3428 = vmatprep.subr.mxu0 0.0
    %3429 = vmatpush1.msra.mxu0 0.0
    %3430 = vmatprep.subr.mxu0 0.0
    %3431 = vmatpush1.msra.mxu0 0.0
    %3432 = vmatprep.subr.mxu0 0.0
    %3433 = vmatpush1.msra.mxu0 0.0
    %3434 = vmatprep.subr.mxu0 0.0
    %3435 = vmatpush1.msra.mxu0 0.0
    %3436 = vmatprep.subr.mxu0 0.0
    %3437 = vmatpush1.msra.mxu0 0.0
    %3438 = vmatprep.subr.mxu0 0.0
    %3439 = vmatpush1.msra.mxu0 0.0
    %3440 = vmatprep.subr.mxu0 0.0
    %3441 = vmatpush1.msra.mxu0 0.0
    %3442 = vmatprep.subr.mxu0 0.0
    %3443 = vmatpush1.msra.mxu0 0.0
    %3444 = vmatprep.subr.mxu0 0.0
    %3445 = vmatpush1.msra.mxu0 0.0
    %3446 = vmatprep.subr.mxu0 0.0
    %3447 = vmatpush1.msra.mxu0 0.0
    %3448 = vmatprep.subr.mxu0 0.0
    %3449 = vmatpush1.msra.mxu0 0.0
    %3450 = vmatprep.subr.mxu0 0.0
    %3451 = vmatpush1.msra.mxu0 0.0
    %3452 = vmatprep.subr.mxu0 0.0
    %3453 = vmatpush1.msra.mxu0 0.0
    %3454 = vmatprep.subr.mxu0 0.0
    %3455 = vmatpush1.msra.mxu0 0.0
    %3456 = vmatprep.subr.mxu0 0.0
    %3457 = vmatpush1.msra.mxu0 0.0
    %3458 = vmatprep.subr.mxu0 0.0
    %3459 = vmatpush1.msra.mxu0 0.0
    %3460 = vmatprep.subr.mxu0 0.0
    %3461 = vmatpush1.msra.mxu0 0.0
    %3462 = vmatprep.subr.mxu0 0.0
    %3463 = vmatpush1.msra.mxu0 0.0
    %3464 = vmatprep.mubr.f32.mxu0 0.0
    %3465 = vmatmul.mubr.f32.gmra.mrb[0].mxu0 %v3398
    %v3466 = vpop.f32.mrb[0].mxu0
    %v3467 = vadd.f32 0.0, %v3466
    %v3468 = vpop.f32.mrb[0].mxu0
    %3469 = vdwg.mxu0
    %v3470 = vmul.f32 %v3467, 0.5
    %v3471 = vmul.f32 %v3018, %v2945
    %v3473 = vsel %vm640, %v3471, 0
    %3475 = vmatprep.subr.mxu0 0.0
    %3476 = vmatpush1.msra.mxu0 %v58
    %3477 = vmatprep.subr.mxu0 0.0
    %3478 = vmatpush1.msra.mxu0 %v59
    %3479 = vmatprep.subr.mxu0 0.0
    %3480 = vmatpush1.msra.mxu0 %v60
    %3481 = vmatprep.subr.mxu0 0.0
    %3482 = vmatpush1.msra.mxu0 %v61
    %3483 = vmatprep.subr.mxu0 0.0
    %3484 = vmatpush1.msra.mxu0 %v62
    %3485 = vmatprep.subr.mxu0 0.0
    %3486 = vmatpush1.msra.mxu0 %v63
    %3487 = vmatprep.subr.mxu0 0.0
    %3488 = vmatpush1.msra.mxu0 %v64
    %3489 = vmatprep.subr.mxu0 0.0
    %3490 = vmatpush1.msra.mxu0 %v65
    %3491 = vmatprep.subr.mxu0 0.0
    %3492 = vmatpush1.msra.mxu0 0.0
    %3493 = vmatprep.subr.mxu0 0.0
    %3494 = vmatpush1.msra.mxu0 0.0
    %3495 = vmatprep.subr.mxu0 0.0
    %3496 = vmatpush1.msra.mxu0 0.0
    %3497 = vmatprep.subr.mxu0 0.0
    %3498 = vmatpush1.msra.mxu0 0.0
    %3499 = vmatprep.subr.mxu0 0.0
    %3500 = vmatpush1.msra.mxu0 0.0
    %3501 = vmatprep.subr.mxu0 0.0
    %3502 = vmatpush1.msra.mxu0 0.0
    %3503 = vmatprep.subr.mxu0 0.0
    %3504 = vmatpush1.msra.mxu0 0.0
    %3505 = vmatprep.subr.mxu0 0.0
    %3506 = vmatpush1.msra.mxu0 0.0
    %3507 = vmatprep.subr.mxu0 0.0
    %3508 = vmatpush1.msra.mxu0 0.0
    %3509 = vmatprep.subr.mxu0 0.0
    %3510 = vmatpush1.msra.mxu0 0.0
    %3511 = vmatprep.subr.mxu0 0.0
    %3512 = vmatpush1.msra.mxu0 0.0
    %3513 = vmatprep.subr.mxu0 0.0
    %3514 = vmatpush1.msra.mxu0 0.0
    %3515 = vmatprep.subr.mxu0 0.0
    %3516 = vmatpush1.msra.mxu0 0.0
    %3517 = vmatprep.subr.mxu0 0.0
    %3518 = vmatpush1.msra.mxu0 0.0
    %3519 = vmatprep.subr.mxu0 0.0
    %3520 = vmatpush1.msra.mxu0 0.0
    %3521 = vmatprep.subr.mxu0 0.0
    %3522 = vmatpush1.msra.mxu0 0.0
    %3523 = vmatprep.subr.mxu0 0.0
    %3524 = vmatpush1.msra.mxu0 0.0
    %3525 = vmatprep.subr.mxu0 0.0
    %3526 = vmatpush1.msra.mxu0 0.0
    %3527 = vmatprep.subr.mxu0 0.0
    %3528 = vmatpush1.msra.mxu0 0.0
    %3529 = vmatprep.subr.mxu0 0.0
    %3530 = vmatpush1.msra.mxu0 0.0
    %3531 = vmatprep.subr.mxu0 0.0
    %3532 = vmatpush1.msra.mxu0 0.0
    %3533 = vmatprep.subr.mxu0 0.0
    %3534 = vmatpush1.msra.mxu0 0.0
    %3535 = vmatprep.subr.mxu0 0.0
    %3536 = vmatpush1.msra.mxu0 0.0
    %3537 = vmatprep.subr.mxu0 0.0
    %3538 = vmatpush1.msra.mxu0 0.0
    %3539 = vmatprep.mubr.f32.mxu0 0.0
    %3540 = vmatmul.mubr.f32.gmra.mrb[0].mxu0 %v3473
    %v3541 = vpop.f32.mrb[0].mxu0
    %v3542 = vadd.f32 0.0, %v3541
    %v3543 = vpop.f32.mrb[0].mxu0
    %3544 = vdwg.mxu0
    %v3545 = vmul.f32 %v3542, 0.5
    %v3546 = vmax.f32 %v3095, %v3170
    %v3547 = vmax.f32 %v3546, %v3245
    %v3548 = vmax.f32 %v3547, %v3320
    %v3549 = vmax.f32 %v3548, %v3395
    %v3550 = vmax.f32 %v3549, %v3470
    %v3551 = vmax.f32 %v3550, %v3545
    %v3552 = vsub.f32 %v3095, %v3551
    %v3553 = vmul.f32 %v3552, 1.442695
    %v3554 = vpow.pop %v3553
    %v3555 = vsub.f32 %v3170, %v3551
    %v3556 = vmul.f32 %v3555, 1.442695
    %v3557 = vpow.pop %v3556
    %v3558 = vsub.f32 %v3245, %v3551
    %v3559 = vmul.f32 %v3558, 1.442695
    %v3560 = vpow.pop %v3559
    %v3561 = vsub.f32 %v3320, %v3551
    %v3562 = vmul.f32 %v3561, 1.442695
    %v3563 = vpow.pop %v3562
    %v3564 = vsub.f32 %v3395, %v3551
    %v3565 = vmul.f32 %v3564, 1.442695
    %v3566 = vpow.pop %v3565
    %v3567 = vsub.f32 %v3470, %v3551
    %v3568 = vmul.f32 %v3567, 1.442695
    %v3569 = vpow.pop %v3568
    %v3570 = vsub.f32 %v3545, %v3551
    %v3571 = vmul.f32 %v3570, 1.442695
    %v3572 = vpow.pop %v3571
    %v3573 = vmul.f32 %v3554, %v2915
    %v3574 = vadd.f32 %v3554, %v3557
    %v3575 = vmul.f32 %v3557, %v2920
    %v3576 = vadd.f32 %v3573, %v3575
    %v3577 = vadd.f32 %v3574, %v3560
    %v3578 = vmul.f32 %v3560, %v2925
    %v3579 = vadd.f32 %v3576, %v3578
    %v3580 = vadd.f32 %v3577, %v3563
    %v3581 = vmul.f32 %v3563, %v2930
    %v3582 = vadd.f32 %v3579, %v3581
    %v3583 = vadd.f32 %v3580, %v3566
    %v3584 = vmul.f32 %v3566, %v2935
    %v3585 = vadd.f32 %v3582, %v3584
    %v3586 = vadd.f32 %v3583, %v3569
    %v3587 = vmul.f32 %v3569, %v2940
    %v3588 = vadd.f32 %v3585, %v3587
    %v3589 = vadd.f32 %v3586, %v3572
    %v3590 = vmul.f32 %v3572, %v2945
    %v3591 = vadd.f32 %v3588, %v3590
    %v3592 = vrcp.pop %v3589
    %v3593 = vmul.f32 %v3591, %v3592
    %v3595 = vsel %vm640, %v3593, 0
    %3597 = vmatprep.subr.mxu0 0.0
    %3598 = vmatpush1.msra.mxu0 %v90
    %3599 = vmatprep.subr.mxu0 0.0
    %3600 = vmatpush1.msra.mxu0 %v91
    %3601 = vmatprep.subr.mxu0 0.0
    %3602 = vmatpush1.msra.mxu0 %v92
    %3603 = vmatprep.subr.mxu0 0.0
    %3604 = vmatpush1.msra.mxu0 %v93
    %3605 = vmatprep.subr.mxu0 0.0
    %3606 = vmatpush1.msra.mxu0 %v94
    %3607 = vmatprep.subr.mxu0 0.0
    %3608 = vmatpush1.msra.mxu0 %v95
    %3609 = vmatprep.subr.mxu0 0.0
    %3610 = vmatpush1.msra.mxu0 %v96
    %3611 = vmatprep.subr.mxu0 0.0
    %3612 = vmatpush1.msra.mxu0 %v97
    %3613 = vmatprep.subr.mxu0 0.0
    %3614 = vmatpush1.msra.mxu0 0.0
    %3615 = vmatprep.subr.mxu0 0.0
    %3616 = vmatpush1.msra.mxu0 0.0
    %3617 = vmatprep.subr.mxu0 0.0
    %3618 = vmatpush1.msra.mxu0 0.0
    %3619 = vmatprep.subr.mxu0 0.0
    %3620 = vmatpush1.msra.mxu0 0.0
    %3621 = vmatprep.subr.mxu0 0.0
    %3622 = vmatpush1.msra.mxu0 0.0
    %3623 = vmatprep.subr.mxu0 0.0
    %3624 = vmatpush1.msra.mxu0 0.0
    %3625 = vmatprep.subr.mxu0 0.0
    %3626 = vmatpush1.msra.mxu0 0.0
    %3627 = vmatprep.subr.mxu0 0.0
    %3628 = vmatpush1.msra.mxu0 0.0
    %3629 = vmatprep.subr.mxu0 0.0
    %3630 = vmatpush1.msra.mxu0 0.0
    %3631 = vmatprep.subr.mxu0 0.0
    %3632 = vmatpush1.msra.mxu0 0.0
    %3633 = vmatprep.subr.mxu0 0.0
    %3634 = vmatpush1.msra.mxu0 0.0
    %3635 = vmatprep.subr.mxu0 0.0
    %3636 = vmatpush1.msra.mxu0 0.0
    %3637 = vmatprep.subr.mxu0 0.0
    %3638 = vmatpush1.msra.mxu0 0.0
    %3639 = vmatprep.subr.mxu0 0.0
    %3640 = vmatpush1.msra.mxu0 0.0
    %3641 = vmatprep.subr.mxu0 0.0
    %3642 = vmatpush1.msra.mxu0 0.0
    %3643 = vmatprep.subr.mxu0 0.0
    %3644 = vmatpush1.msra.mxu0 0.0
    %3645 = vmatprep.subr.mxu0 0.0
    %3646 = vmatpush1.msra.mxu0 0.0
    %3647 = vmatprep.subr.mxu0 0.0
    %3648 = vmatpush1.msra.mxu0 0.0
    %3649 = vmatprep.subr.mxu0 0.0
    %3650 = vmatpush1.msra.mxu0 0.0
    %3651 = vmatprep.subr.mxu0 0.0
    %3652 = vmatpush1.msra.mxu0 0.0
    %3653 = vmatprep.subr.mxu0 0.0
    %3654 = vmatpush1.msra.mxu0 0.0
    %3655 = vmatprep.subr.mxu0 0.0
    %3656 = vmatpush1.msra.mxu0 0.0
    %3657 = vmatprep.subr.mxu0 0.0
    %3658 = vmatpush1.msra.mxu0 0.0
    %3659 = vmatprep.subr.mxu0 0.0
    %3660 = vmatpush1.msra.mxu0 0.0
    %3661 = vmatprep.mubr.f32.mxu0 0.0
    %3662 = vmatmul.mubr.f32.gmra.mrb[0].mxu0 %v3595
    %v3663 = vpop.f32.mrb[0].mxu0
    %v3664 = vadd.f32 0.0, %v3663
    %v3665 = vpop.f32.mrb[0].mxu0
    %3666 = vdwg.mxu0
    %v3667 = vadd.f32 %v3664, %v127
    %v3668 = vmax.f32 %v3667, 0.0
    %v3669 = vsel %vm140, %v3668, 0.0
    %3670 = vadd.xlane.f32.xlu0 %v3669
    %v3671 = vpop.xlane.xlu0 %3670
    %v3672 = vmul.f32 %v3671, %v1047
    %v3673 = vsub.f32 %v3668, %v3672
    %v3674 = vmul.f32 %v3673, %v3673
    %v3675 = vsel %vm140, %v3674, 0.0
    %3676 = vadd.xlane.f32.xlu0 %v3675
    %v3677 = vpop.xlane.xlu0 %3676
    %v3678 = vmul.f32 %v3677, 0.032258064
    %v3679 = vrsqrt.pop %v3678
    %v3680 = vmul.f32 %v3678, %v3679
    %vm3681 = vcmp.eq.f32.partialorder %v3678, inf
    %v3682 = vsel %vm3681, %v3678, %v3680
    %vm3683 = vcmp.eq.f32.partialorder %v3678, 0.0
    %v3684 = vand.u32 %v3678, 2147483648
    %v3685 = vsel %vm3683, %v3684, %v3682
    %v3686 = vadd.f32 %v3685, 1e-06
    %v3687 = vrcp.pop %v3686
    %v3688 = vmul.f32 %v131, %v3673
    %v3689 = vmul.f32 %v3688, %v3687
    %v3690 = vadd.f32 %v3689, %v135
    %3691 = vst.msk [vmem:[#allocation3] sm:$0xff] %vm140, %v3690
  $region54: #{forward.1} parent=0 // loop_footer
    %s314 = sadd.s32 1, %s310
  $region55: #{forward.1} parent=0 // loop_footer_branch
    %309 = sbr.rel target = $region51
  $region56: #{forward.1} parent=0 // loop_exit
    _
  %v3692 = vld [vmem:[#allocation2] sm:$0xff]
  %v3693 = vld [vmem:[#allocation2 + $0x8] sm:$0xff]
  %v3694 = vld [vmem:[#allocation2 + $0x10] sm:$0xff]
  %v3695 = vld [vmem:[%s10] sm:$0xff]
  %v3696 = vld [vmem:[%s10 + $0x8] sm:$0xff]
  %v3697 = vld [vmem:[%s10 + $0x10] sm:$0xff]
  %v3698 = vld [vmem:[%s10 + $0x18] sm:$0xff]
  %v3699 = vld [vmem:[%s11] sm:$0x1]
  %v3701 = vlaneseq
  %v3702 = vshrl.u32 %v3701, 7
  %v3703 = vsub.s32 0, %v3702
  %v3704 = vrot.slane %v3699, %v3703
  %v3707 = vsel %vm140, %v3692, 0
  %v3710 = vsel %vm140, %v3693, 0
  %v3713 = vsel %vm140, %v3694, 0
  %3715 = vmatprep.subr.mxu0 0.0
  %3716 = vmatpush1.msra.mxu0 %v3695
  %3717 = vmatprep.subr.mxu0 0.0
  %3718 = vmatpush1.msra.mxu0 %v3696
  %3719 = vmatprep.subr.mxu0 0.0
  %3720 = vmatpush1.msra.mxu0 %v3697
  %3721 = vmatprep.subr.mxu0 0.0
  %3722 = vmatpush1.msra.mxu0 %v3698
  %3723 = vmatprep.subr.mxu0 0.0
  %3724 = vmatpush1.msra.mxu0 0.0
  %3725 = vmatprep.subr.mxu0 0.0
  %3726 = vmatpush1.msra.mxu0 0.0
  %3727 = vmatprep.subr.mxu0 0.0
  %3728 = vmatpush1.msra.mxu0 0.0
  %3729 = vmatprep.subr.mxu0 0.0
  %3730 = vmatpush1.msra.mxu0 0.0
  %3731 = vmatprep.subr.mxu0 0.0
  %3732 = vmatpush1.msra.mxu0 0.0
  %3733 = vmatprep.subr.mxu0 0.0
  %3734 = vmatpush1.msra.mxu0 0.0
  %3735 = vmatprep.subr.mxu0 0.0
  %3736 = vmatpush1.msra.mxu0 0.0
  %3737 = vmatprep.subr.mxu0 0.0
  %3738 = vmatpush1.msra.mxu0 0.0
  %3739 = vmatprep.subr.mxu0 0.0
  %3740 = vmatpush1.msra.mxu0 0.0
  %3741 = vmatprep.subr.mxu0 0.0
  %3742 = vmatpush1.msra.mxu0 0.0
  %3743 = vmatprep.subr.mxu0 0.0
  %3744 = vmatpush1.msra.mxu0 0.0
  %3745 = vmatprep.subr.mxu0 0.0
  %3746 = vmatpush1.msra.mxu0 0.0
  %3747 = vmatprep.subr.mxu0 0.0
  %3748 = vmatpush1.msra.mxu0 0.0
  %3749 = vmatprep.subr.mxu0 0.0
  %3750 = vmatpush1.msra.mxu0 0.0
  %3751 = vmatprep.subr.mxu0 0.0
  %3752 = vmatpush1.msra.mxu0 0.0
  %3753 = vmatprep.subr.mxu0 0.0
  %3754 = vmatpush1.msra.mxu0 0.0
  %3755 = vmatprep.subr.mxu0 0.0
  %3756 = vmatpush1.msra.mxu0 0.0
  %3757 = vmatprep.subr.mxu0 0.0
  %3758 = vmatpush1.msra.mxu0 0.0
  %3759 = vmatprep.subr.mxu0 0.0
  %3760 = vmatpush1.msra.mxu0 0.0
  %3761 = vmatprep.subr.mxu0 0.0
  %3762 = vmatpush1.msra.mxu0 0.0
  %3763 = vmatprep.subr.mxu0 0.0
  %3764 = vmatpush1.msra.mxu0 0.0
  %3765 = vmatprep.subr.mxu0 0.0
  %3766 = vmatpush1.msra.mxu0 0.0
  %3767 = vmatprep.subr.mxu0 0.0
  %3768 = vmatpush1.msra.mxu0 0.0
  %3769 = vmatprep.subr.mxu0 0.0
  %3770 = vmatpush1.msra.mxu0 0.0
  %3771 = vmatprep.subr.mxu0 0.0
  %3772 = vmatpush1.msra.mxu0 0.0
  %3773 = vmatprep.subr.mxu0 0.0
  %3774 = vmatpush1.msra.mxu0 0.0
  %3775 = vmatprep.subr.mxu0 0.0
  %3776 = vmatpush1.msra.mxu0 0.0
  %3777 = vmatprep.subr.mxu0 0.0
  %3778 = vmatpush1.msra.mxu0 0.0
  %3779 = vmatprep.mubr.f32.mxu0 0.0
  %3780 = vmatmul.mubr.f32.gmra.mrb[0].mxu0 %v3707
  %v3781 = vpop.f32.mrb[0].mxu0
  %v3782 = vadd.f32 %v3704, %v3781
  %v3783 = vpop.f32.mrb[0].mxu0
  %3784 = vmatprep.mubr.f32.mxu0 0.0
  %3785 = vmatmul.mubr.f32.gmra.mrb[0].mxu0 %v3710
  %v3786 = vpop.f32.mrb[0].mxu0
  %v3787 = vadd.f32 %v3704, %v3786
  %v3788 = vpop.f32.mrb[0].mxu0
  %3789 = vmatprep.mubr.f32.mxu0 0.0
  %3790 = vmatmul.mubr.f32.gmra.mrb[0].mxu0 %v3713
  %v3791 = vpop.f32.mrb[0].mxu0
  %v3792 = vadd.f32 %v3704, %v3791
  %v3793 = vpop.f32.mrb[0].mxu0
  %3794 = vdwg.mxu0
  %3795 = vst [vmem:[%s12] sm:$0xff] %v3782
  %3796 = vst [vmem:[%s12 + $0x8] sm:$0xff] %v3787
  %3797 = vst [vmem:[%s12 + $0x10] sm:$0xff] %v3792
  // Predicated region
  $region57: #{forward.1} parent=0 // pred_check
    _
  $region58: #{forward.1} parent=0 // pred_check_branch
    %3799 = sbr.rel (0) target = $region60
  $region59: #{forward.1} parent=0 // pred_region
    _
  $region60: #{forward.1} parent=0 // pred_fallthru
    _
  // Predicated region
  $region61: #{forward.1} parent=0 // pred_check
    _
  $region62: #{forward.1} parent=0 // pred_check_branch
    %3801 = sbr.rel (0) target = $region64
  $region63: #{forward.1} parent=0 // pred_region
    _
  $region64: #{forward.1} parent=0 // pred_fallthru
    _

</llo_original>
